<compile_context>
chip_gen: v5e
topology: v5e:2x2
jax: 0.10.0
libtpu: 0.0.40
codegen_flags: <defaults>
</compile_context>

<pallas_src>
import jax
import jax.numpy as jnp
from jax.experimental import pallas as pl
from jax.experimental.pallas import tpu as pltpu


def decoder_loop_kernel(tf_ref,      # SMEM [T] int32 teacher-force flags
                        tgt_ref,     # VMEM [T, B, I]   targets (fully resident)
                        hid0_ref,    # VMEM [B, H]      initial decoder hidden
                        enc_ref,     # VMEM [B, S, 2E]  encoder outputs, batch-major
                        eproj_ref,   # VMEM [B, S, H]   precomputed enc @ Wa_e + b_a
                        v_ref,       # VMEM [1, H]
                        wh_ref,      # VMEM [H, H+3H]   fused [Wa_h | W_hh]
                        wih_ref,     # VMEM [I+2E, 3H]  fused GRU input-side weights
                        bih_ref,     # VMEM [1, 3H]
                        bhh_ref,     # VMEM [1, 3H]
                        wfc_ref,     # VMEM [I+2E+H, O] fused fc_out weights ([x|w|h] order)
                        bfc_ref,     # VMEM [1, O]
                        out_ref,     # VMEM [T, B, O]   per-step predictions (resident)
                        hout_ref,    # VMEM [B, H]      final hidden
                        h_ref,       # scratch VMEM [B, H]       hidden carry
                        prev_ref,    # scratch VMEM [B, O]       previous prediction carry
                        cat_ref):    # scratch VMEM [B, I+2E+H]  [x | weighted | h_new]
    T, _, I = tgt_ref.shape
    B, H = hid0_ref.shape
    E2 = enc_ref.shape[-1]

    # init carries (matches `decoder_output = torch.zeros(...)` before step 0)
    h_ref[...] = hid0_ref[...].astype(h_ref.dtype)
    prev_ref[...] = jnp.zeros_like(prev_ref)

    # resident operands loaded once, reused by every unrolled step
    enc = enc_ref[...]
    eproj = eproj_ref[...]
    v = v_ref[...]
    wh = wh_ref[...]
    wih = wih_ref[...]
    bih = bih_ref[...]
    bhh = bhh_ref[...]
    wfc = wfc_ref[...]
    bfc = bfc_ref[...]

    def step(t, carry):
        h = h_ref[...]                                              # [B, H]

        # teacher-forcing select (robust 0/1 select, not a blend)
        use_tgt = tf_ref[t] > 0
        x = jnp.where(use_tgt, tgt_ref[t], prev_ref[...])           # [B, I]

        # fused h-dependent matmul: [B, H] @ [H, H+3H] -> lane-dense [B, 128]
        hy = jnp.dot(h, wh, preferred_element_type=jnp.float32)
        h_proj = hy[:, :H]                                          # attention projection
        gh = hy[:, H:] + bhh                                        # GRU hidden-side gates

        # ---- attention: softmax_S( v^T tanh(W_a[h ; enc] + b_a) ) (exact) ----
        energy = jnp.tanh(h_proj[:, None, :] + eproj)               # [B, S, H]
        scores = jnp.sum(energy * v[None, :, :], axis=-1)           # [B, S]
        scores = scores - jnp.max(scores, axis=-1, keepdims=True)
        p = jnp.exp(scores)
        a = p / jnp.sum(p, axis=-1, keepdims=True)                  # [B, S]

        # ---- weighted context: VPU multiply + sublane reduction over S ----
        weighted = jnp.sum(a[:, :, None] * enc, axis=1)             # [B, 2E]

        # ---- persistent concat buffer [x | weighted | h_new] at fixed lane offsets ----
        cat_ref[:, :I] = x
        cat_ref[:, I:I + E2] = weighted
        rnn_in = cat_ref[:, :I + E2]                                # [B, I+2E]

        # ---- single-step GRU cell (PyTorch gate order r, z, n), fused input dot ----
        gi = jnp.dot(rnn_in, wih, preferred_element_type=jnp.float32) + bih
        r = jax.nn.sigmoid(gi[:, :H] + gh[:, :H])
        z = jax.nn.sigmoid(gi[:, H:2 * H] + gh[:, H:2 * H])
        n = jnp.tanh(gi[:, 2 * H:] + r * gh[:, 2 * H:])
        h_new = (1.0 - z) * n + z * h                               # [B, H]

        # ---- fc_out(cat(output, weighted, input)) as one fused dot ----
        cat_ref[:, I + E2:] = h_new
        pred = jnp.dot(cat_ref[...], wfc, preferred_element_type=jnp.float32) + bfc

        out_ref[t] = pred.astype(out_ref.dtype)
        h_ref[...] = h_new
        prev_ref[...] = pred
        return carry

    jax.lax.fori_loop(0, T, step, 0, unroll=True)
    hout_ref[...] = h_ref[...].astype(hout_ref.dtype)


def decoder_loop_forward(target, hidden0, encoder_outputs, params, tf_mask):
    """Runs the full Model.forward decode loop in one (grid-less) Pallas kernel.

    target:          [T, B, I]   teacher-forcing targets
    hidden0:         [B, H]      encoder final hidden
    encoder_outputs: [S, B, 2E]
    tf_mask:         [T] int32   1 -> use target[t], 0 -> feed back previous prediction
    returns (outputs [T, B, O], final hidden [B, H])
    """
    T, B, I = target.shape
    H = hidden0.shape[-1]
    S, _, E2 = encoder_outputs.shape
    O = params["b_fc"].shape[-1]
    assert I == O, "feeding predictions back as inputs requires input_size == output_size"

    # ---- step-invariant work hoisted out of the kernel (done ONCE per decode) ----
    enc = jnp.transpose(encoder_outputs, (1, 0, 2)).astype(jnp.float32)          # [B, S, 2E]
    e_proj = (jnp.einsum("bse,eh->bsh", enc, params["wa_e"])
              + params["b_a"][None]).astype(jnp.float32)                          # [B, S, H]
    wh = jnp.concatenate([params["wa_h"], params["whh"]], axis=1)                 # [H, H+3H]
    wih = jnp.concatenate([params["wih_x"], params["wih_w"]], axis=0)             # [I+2E, 3H]
    wfc = jnp.concatenate([params["wfc_x"], params["wfc_w"], params["wfc_h"]],
                          axis=0)                                                 # [I+2E+H, O]

    vmem = pl.BlockSpec(memory_space=pltpu.MemorySpace.VMEM)
    smem = pl.BlockSpec(memory_space=pltpu.MemorySpace.SMEM)

    outputs, h_final = pl.pallas_call(
        decoder_loop_kernel,
        out_shape=(jax.ShapeDtypeStruct((T, B, O), jnp.float32),
                   jax.ShapeDtypeStruct((B, H), jnp.float32)),
        in_specs=[smem,            # tf_mask
                  vmem,            # target (resident)
                  vmem,            # hidden0
                  vmem,            # enc (resident)
                  vmem,            # e_proj (resident)
                  vmem,            # v
                  vmem,            # wh fused
                  vmem,            # wih fused
                  vmem,            # b_ih
                  vmem,            # b_hh
                  vmem,            # wfc fused
                  vmem],           # b_fc
        out_specs=(vmem, vmem),
        scratch_shapes=[pltpu.VMEM((B, H), jnp.float32),            # hidden carry
                        pltpu.VMEM((B, O), jnp.float32),            # previous prediction
                        pltpu.VMEM((B, I + E2 + H), jnp.float32)],  # [x|weighted|h] buffer
    )(tf_mask.astype(jnp.int32), target.astype(jnp.float32), hidden0.astype(jnp.float32),
      enc, e_proj, params["v"], wh, wih, params["b_ih"], params["b_hh"], wfc, params["b_fc"])

    return outputs, h_final


def reference_forward(target, hidden0, encoder_outputs, params, tf_mask):
    """Pure-JAX reference replicating the same math (for validation)."""
    T, B, I = target.shape
    H = hidden0.shape[-1]
    O = params["b_fc"].shape[-1]
    enc = jnp.transpose(encoder_outputs, (1, 0, 2)).astype(jnp.float32)
    e_proj = jnp.einsum("bse,eh->bsh", enc, params["wa_e"]) + params["b_a"][None]

    h = hidden0.astype(jnp.float32)
    prev = jnp.zeros((B, O), jnp.float32)
    outs = []
    for t in range(T):
        x = jnp.where(tf_mask[t] > 0, target[t].astype(jnp.float32), prev)
        energy = jnp.tanh((h @ params["wa_h"])[:, None, :] + e_proj)
        scores = jnp.sum(energy * params["v"][None], axis=-1)
        a = jax.nn.softmax(scores, axis=-1)
        weighted = jnp.einsum("bs,bse->be", a, enc)
        gi = x @ params["wih_x"] + weighted @ params["wih_w"] + params["b_ih"]
        gh = h @ params["whh"] + params["b_hh"]
        r = jax.nn.sigmoid(gi[:, :H] + gh[:, :H])
        z = jax.nn.sigmoid(gi[:, H:2 * H] + gh[:, H:2 * H])
        n = jnp.tanh(gi[:, 2 * H:] + r * gh[:, 2 * H:])
        h = (1.0 - z) * n + z * h
        pred = (h @ params["wfc_h"] + weighted @ params["wfc_w"]
                + x @ params["wfc_x"] + params["b_fc"])
        outs.append(pred)
        prev = pred
    return jnp.stack(outs, axis=0), h


def init_params(key, input_size, hidden_size, output_size, e_hidden_size):
    """Weights stored transposed ([in, out]) and split by the PyTorch concat order."""
    E2 = 2 * e_hidden_size
    H, I, O = hidden_size, input_size, output_size
    ks = jax.random.split(key, 12)
    s = 0.1
    return {
        # attention: Linear(2E + H -> H) split into (hidden, enc) blocks; v: Linear(H -> 1)
        "wa_h": s * jax.random.normal(ks[0], (H, H), jnp.float32),
        "wa_e": s * jax.random.normal(ks[1], (E2, H), jnp.float32),
        "b_a":  s * jax.random.normal(ks[2], (1, H), jnp.float32),
        "v":    s * jax.random.normal(ks[3], (1, H), jnp.float32),
        # GRU weight_ih split by cat(input, weighted); gate order (r, z, n)
        "wih_x": s * jax.random.normal(ks[4], (I, 3 * H), jnp.float32),
        "wih_w": s * jax.random.normal(ks[5], (E2, 3 * H), jnp.float32),
        "b_ih":  s * jax.random.normal(ks[6], (1, 3 * H), jnp.float32),
        "whh":   s * jax.random.normal(ks[7], (H, 3 * H), jnp.float32),
        "b_hh":  s * jax.random.normal(ks[8], (1, 3 * H), jnp.float32),
        # fc_out: Linear(H + 2E + I -> O) split by cat(output, weighted, input)
        "wfc_h": s * jax.random.normal(ks[9], (H, O), jnp.float32),
        "wfc_w": s * jax.random.normal(ks[10], (E2, O), jnp.float32),
        "wfc_x": s * jax.random.normal(ks[11], (I, O), jnp.float32),
        "b_fc":  jnp.zeros((1, O), jnp.float32),
    }


if __name__ == "__main__":
    # config (input_size == output_size so predictions can feed back, as the
    # PyTorch loop requires whenever a step is not teacher-forced)
    B, S, T = 2, 8, 8
    input_size = output_size = 32
    hidden_size = 32
    e_hidden_size = 16            # bidirectional encoder -> 2E = 32
    teacher_forcing_ratio = 0.5
    # num_layers = 1 (required by the `assert output == hidden` in the PyTorch forward)

    key = jax.random.PRNGKey(0)
    k_tgt, k_h, k_enc, k_p, k_tf = jax.random.split(key, 5)

    target = jax.random.normal(k_tgt, (T, B, input_size), jnp.float32)          # [T, B, I]
    hidden0 = jax.random.normal(k_h, (B, hidden_size), jnp.float32)             # [B, H]
    encoder_outputs = jax.random.normal(k_enc, (S, B, 2 * e_hidden_size),
                                        jnp.float32)                            # [S, B, 2E]
    params = init_params(k_p, input_size, hidden_size, output_size, e_hidden_size)
    # precomputed replacement for the per-step `random.random() < ratio` draw
    tf_mask = jax.random.bernoulli(k_tf, teacher_forcing_ratio, (T,)).astype(jnp.int32)

    outputs, h_final = decoder_loop_forward(target, hidden0, encoder_outputs, params, tf_mask)
    jax.block_until_ready((outputs, h_final))

    out_ref, h_ref = reference_forward(target, hidden0, encoder_outputs, params, tf_mask)
    assert outputs.shape == (T, B, output_size) and h_final.shape == (B, hidden_size)
    assert jnp.allclose(outputs, out_ref, atol=1e-3, rtol=1e-3), \
        float(jnp.max(jnp.abs(outputs - out_ref)))
    assert jnp.allclose(h_final, h_ref, atol=1e-3, rtol=1e-3), \
        float(jnp.max(jnp.abs(h_final - h_ref)))

    print("KERNEL_OK")
</pallas_src>

<mosaic_0001>
module attributes {stable_mosaic.version = 11 : i64} {
  func.func @decoder_loop_kernel(%arg0: memref<8xi32, #tpu.memory_space<smem>>, %arg1: memref<8x2x32xf32, #tpu.memory_space<vmem>>, %arg2: memref<2x32xf32, #tpu.memory_space<vmem>>, %arg3: memref<2x8x32xf32, #tpu.memory_space<vmem>>, %arg4: memref<2x8x32xf32, #tpu.memory_space<vmem>>, %arg5: memref<1x32xf32, #tpu.memory_space<vmem>>, %arg6: memref<32x128xf32, #tpu.memory_space<vmem>>, %arg7: memref<64x96xf32, #tpu.memory_space<vmem>>, %arg8: memref<1x96xf32, #tpu.memory_space<vmem>>, %arg9: memref<1x96xf32, #tpu.memory_space<vmem>>, %arg10: memref<96x32xf32, #tpu.memory_space<vmem>>, %arg11: memref<1x32xf32, #tpu.memory_space<vmem>>, %arg12: memref<8x2x32xf32, #tpu.memory_space<vmem>>, %arg13: memref<2x32xf32, #tpu.memory_space<vmem>>, %arg14: memref<2x32xf32, #tpu.memory_space<vmem>>, %arg15: memref<2x32xf32, #tpu.memory_space<vmem>>, %arg16: memref<2x96xf32, #tpu.memory_space<vmem>>) attributes {dimension_semantics = [], scalar_prefetch = 0 : i64, scratch_operands = 3 : i64, tpu.core_type = #tpu.core_type<tc>} {
    %c0 = arith.constant 0 : index
    %c0_0 = arith.constant 0 : index
    %0 = vector.load %arg2[%c0, %c0_0] : memref<2x32xf32, #tpu.memory_space<vmem>>, vector<2x32xf32>
    %c0_1 = arith.constant 0 : index
    %c0_2 = arith.constant 0 : index
    %1 = vector.load %arg14[%c0_1, %c0_2] : memref<2x32xf32, #tpu.memory_space<vmem>>, vector<2x32xf32>
    tpu.vector_store %arg14[%c0_1, %c0_2], %0 {strides = array<i32>} : memref<2x32xf32, #tpu.memory_space<vmem>>, vector<2x32xf32>,
    %cst = arith.constant 0.000000e+00 : f32
    %2 = vector.broadcast %cst : f32 to vector<2x32xf32>
    %c0_3 = arith.constant 0 : index
    %c0_4 = arith.constant 0 : index
    %3 = vector.load %arg15[%c0_3, %c0_4] : memref<2x32xf32, #tpu.memory_space<vmem>>, vector<2x32xf32>
    tpu.vector_store %arg15[%c0_3, %c0_4], %2 {strides = array<i32>} : memref<2x32xf32, #tpu.memory_space<vmem>>, vector<2x32xf32>,
    %c0_5 = arith.constant 0 : index
    %c0_6 = arith.constant 0 : index
    %c0_7 = arith.constant 0 : index
    %4 = vector.load %arg3[%c0_5, %c0_6, %c0_7] : memref<2x8x32xf32, #tpu.memory_space<vmem>>, vector<2x8x32xf32>
    %c0_8 = arith.constant 0 : index
    %c0_9 = arith.constant 0 : index
    %c0_10 = arith.constant 0 : index
    %5 = vector.load %arg4[%c0_8, %c0_9, %c0_10] : memref<2x8x32xf32, #tpu.memory_space<vmem>>, vector<2x8x32xf32>
    %c0_11 = arith.constant 0 : index
    %c0_12 = arith.constant 0 : index
    %6 = vector.load %arg5[%c0_11, %c0_12] : memref<1x32xf32, #tpu.memory_space<vmem>>, vector<1x32xf32>
    %c0_13 = arith.constant 0 : index
    %c0_14 = arith.constant 0 : index
    %7 = vector.load %arg6[%c0_13, %c0_14] : memref<32x128xf32, #tpu.memory_space<vmem>>, vector<32x128xf32>
    %c0_15 = arith.constant 0 : index
    %c0_16 = arith.constant 0 : index
    %8 = vector.load %arg7[%c0_15, %c0_16] : memref<64x96xf32, #tpu.memory_space<vmem>>, vector<64x96xf32>
    %c0_17 = arith.constant 0 : index
    %c0_18 = arith.constant 0 : index
    %9 = vector.load %arg8[%c0_17, %c0_18] : memref<1x96xf32, #tpu.memory_space<vmem>>, vector<1x96xf32>
    %c0_19 = arith.constant 0 : index
    %c0_20 = arith.constant 0 : index
    %10 = vector.load %arg9[%c0_19, %c0_20] : memref<1x96xf32, #tpu.memory_space<vmem>>, vector<1x96xf32>
    %c0_21 = arith.constant 0 : index
    %c0_22 = arith.constant 0 : index
    %11 = vector.load %arg10[%c0_21, %c0_22] : memref<96x32xf32, #tpu.memory_space<vmem>>, vector<96x32xf32>
    %c0_23 = arith.constant 0 : index
    %c0_24 = arith.constant 0 : index
    %12 = vector.load %arg11[%c0_23, %c0_24] : memref<1x32xf32, #tpu.memory_space<vmem>>, vector<1x32xf32>
    %c0_i32 = arith.constant 0 : i32
    %c0_25 = arith.constant 0 : index
    %c0_26 = arith.constant 0 : index
    %13 = vector.load %arg14[%c0_25, %c0_26] : memref<2x32xf32, #tpu.memory_space<vmem>>, vector<2x32xf32>
    %14 = arith.index_cast %c0_i32 : i32 to index
    %15 = memref.load %arg0[%14] : memref<8xi32, #tpu.memory_space<smem>>
    %c0_i32_27 = arith.constant 0 : i32
    %16 = arith.cmpi sgt, %15, %c0_i32_27 : i32
    %17 = arith.index_cast %c0_i32 : i32 to index
    %c0_28 = arith.constant 0 : index
    %c0_29 = arith.constant 0 : index
    %18 = vector.load %arg1[%17, %c0_28, %c0_29] : memref<8x2x32xf32, #tpu.memory_space<vmem>>, vector<1x2x32xf32>
    %19 = vector.shape_cast %18 : vector<1x2x32xf32> to vector<2x32xf32>
    %c0_30 = arith.constant 0 : index
    %c0_31 = arith.constant 0 : index
    %20 = vector.load %arg15[%c0_30, %c0_31] : memref<2x32xf32, #tpu.memory_space<vmem>>, vector<2x32xf32>
    %21 = arith.select %16, %19, %20 : vector<2x32xf32>
    %cst_32 = arith.constant dense<0.000000e+00> : vector<2x128xf32>
    %22 = tpu.matmul %13, %7, %cst_32 {dimension_numbers = #tpu.dot_dimension_numbers<[1], [0], [0], [1], [0, 0, 1, 1], [], []>} : vector<2x32xf32>, vector<32x128xf32>, vector<2x128xf32> -> vector<2x128xf32>
    %23 = vector.extract_strided_slice %22 {offsets = [0, 0], sizes = [2, 32], strides = [1, 1]} : vector<2x128xf32> to vector<2x32xf32>
    %24 = vector.extract_strided_slice %22 {offsets = [0, 32], sizes = [2, 96], strides = [1, 1]} : vector<2x128xf32> to vector<2x96xf32>
    %25 = vector.broadcast %10 : vector<1x96xf32> to vector<2x96xf32>
    %26 = arith.addf %24, %25 : vector<2x96xf32>
    %27 = vector.shape_cast %23 : vector<2x32xf32> to vector<2x1x32xf32>
    %28 = vector.broadcast %27 : vector<2x1x32xf32> to vector<2x8x32xf32>
    %29 = arith.addf %28, %5 : vector<2x8x32xf32>
    %30 = math.tanh %29 : vector<2x8x32xf32>
    %31 = vector.shape_cast %6 : vector<1x32xf32> to vector<1x1x32xf32>
    %32 = vector.broadcast %31 : vector<1x1x32xf32> to vector<2x8x32xf32>
    %33 = arith.mulf %30, %32 : vector<2x8x32xf32>
    %cst_33 = arith.constant dense<0.000000e+00> : vector<2x8xf32>
    %34 = vector.multi_reduction <add>, %33, %cst_33 [2] : vector<2x8x32xf32> to vector<2x8xf32>
    %cst_34 = arith.constant dense<0xFF800000> : vector<2xf32>
    %35 = vector.multi_reduction <maximumf>, %34, %cst_34 [1] : vector<2x8xf32> to vector<2xf32>
    %36 = vector.shape_cast %35 : vector<2xf32> to vector<2x1xf32>
    %37 = vector.broadcast %36 : vector<2x1xf32> to vector<2x8xf32>
    %38 = arith.subf %34, %37 : vector<2x8xf32>
    %39 = math.exp %38 : vector<2x8xf32>
    %cst_35 = arith.constant dense<0.000000e+00> : vector<2xf32>
    %40 = vector.multi_reduction <add>, %39, %cst_35 [1] : vector<2x8xf32> to vector<2xf32>
    %41 = vector.shape_cast %40 : vector<2xf32> to vector<2x1xf32>
    %42 = vector.broadcast %41 : vector<2x1xf32> to vector<2x8xf32>
    %43 = arith.divf %39, %42 : vector<2x8xf32>
    %44 = vector.shape_cast %43 : vector<2x8xf32> to vector<2x8x1xf32>
    %45 = vector.broadcast %44 : vector<2x8x1xf32> to vector<2x8x32xf32>
    %46 = arith.mulf %45, %4 : vector<2x8x32xf32>
    %cst_36 = arith.constant dense<0.000000e+00> : vector<2x32xf32>
    %47 = vector.multi_reduction <add>, %46, %cst_36 [1] : vector<2x8x32xf32> to vector<2x32xf32>
    %c0_37 = arith.constant 0 : index
    %c0_38 = arith.constant 0 : index
    %48 = vector.load %arg16[%c0_37, %c0_38] : memref<2x96xf32, #tpu.memory_space<vmem>>, vector<2x32xf32>
    tpu.vector_store %arg16[%c0_37, %c0_38], %21 {strides = array<i32>} : memref<2x96xf32, #tpu.memory_space<vmem>>, vector<2x32xf32>,
    %c0_39 = arith.constant 0 : index
    %c32 = arith.constant 32 : index
    %49 = vector.load %arg16[%c0_39, %c32] : memref<2x96xf32, #tpu.memory_space<vmem>>, vector<2x32xf32>
    tpu.vector_store %arg16[%c0_39, %c32], %47 {strides = array<i32>} : memref<2x96xf32, #tpu.memory_space<vmem>>, vector<2x32xf32>,
    %c0_40 = arith.constant 0 : index
    %c0_41 = arith.constant 0 : index
    %50 = vector.load %arg16[%c0_40, %c0_41] : memref<2x96xf32, #tpu.memory_space<vmem>>, vector<2x64xf32>
    %cst_42 = arith.constant dense<0.000000e+00> : vector<2x96xf32>
    %51 = tpu.matmul %50, %8, %cst_42 {dimension_numbers = #tpu.dot_dimension_numbers<[1], [0], [0], [1], [0, 0, 1, 1], [], []>} : vector<2x64xf32>, vector<64x96xf32>, vector<2x96xf32> -> vector<2x96xf32>
    %52 = vector.broadcast %9 : vector<1x96xf32> to vector<2x96xf32>
    %53 = arith.addf %51, %52 : vector<2x96xf32>
    %54 = vector.extract_strided_slice %53 {offsets = [0, 0], sizes = [2, 32], strides = [1, 1]} : vector<2x96xf32> to vector<2x32xf32>
    %55 = vector.extract_strided_slice %26 {offsets = [0, 0], sizes = [2, 32], strides = [1, 1]} : vector<2x96xf32> to vector<2x32xf32>
    %56 = arith.addf %54, %55 : vector<2x32xf32>
    %57 = arith.negf %56 : vector<2x32xf32>
    %58 = math.exp %57 : vector<2x32xf32>
    %cst_43 = arith.constant 1.000000e+00 : f32
    %59 = vector.broadcast %cst_43 : f32 to vector<2x32xf32>
    %60 = arith.addf %59, %58 : vector<2x32xf32>
    %61 = arith.divf %59, %60 : vector<2x32xf32>
    %62 = vector.extract_strided_slice %53 {offsets = [0, 32], sizes = [2, 32], strides = [1, 1]} : vector<2x96xf32> to vector<2x32xf32>
    %63 = vector.extract_strided_slice %26 {offsets = [0, 32], sizes = [2, 32], strides = [1, 1]} : vector<2x96xf32> to vector<2x32xf32>
    %64 = arith.addf %62, %63 : vector<2x32xf32>
    %65 = arith.negf %64 : vector<2x32xf32>
    %66 = math.exp %65 : vector<2x32xf32>
    %cst_44 = arith.constant 1.000000e+00 : f32
    %67 = vector.broadcast %cst_44 : f32 to vector<2x32xf32>
    %68 = arith.addf %67, %66 : vector<2x32xf32>
    %69 = arith.divf %67, %68 : vector<2x32xf32>
    %70 = vector.extract_strided_slice %53 {offsets = [0, 64], sizes = [2, 32], strides = [1, 1]} : vector<2x96xf32> to vector<2x32xf32>
    %71 = vector.extract_strided_slice %26 {offsets = [0, 64], sizes = [2, 32], strides = [1, 1]} : vector<2x96xf32> to vector<2x32xf32>
    %72 = arith.mulf %61, %71 : vector<2x32xf32>
    %73 = arith.addf %70, %72 : vector<2x32xf32>
    %74 = math.tanh %73 : vector<2x32xf32>
    %cst_45 = arith.constant 1.000000e+00 : f32
    %75 = vector.broadcast %cst_45 : f32 to vector<2x32xf32>
    %76 = arith.subf %75, %69 : vector<2x32xf32>
    %77 = arith.mulf %76, %74 : vector<2x32xf32>
    %78 = arith.mulf %69, %13 : vector<2x32xf32>
    %79 = arith.addf %77, %78 : vector<2x32xf32>
    %c0_46 = arith.constant 0 : index
    %c64 = arith.constant 64 : index
    %80 = vector.load %arg16[%c0_46, %c64] : memref<2x96xf32, #tpu.memory_space<vmem>>, vector<2x32xf32>
    tpu.vector_store %arg16[%c0_46, %c64], %79 {strides = array<i32>} : memref<2x96xf32, #tpu.memory_space<vmem>>, vector<2x32xf32>,
    %c0_47 = arith.constant 0 : index
    %c0_48 = arith.constant 0 : index
    %81 = vector.load %arg16[%c0_47, %c0_48] : memref<2x96xf32, #tpu.memory_space<vmem>>, vector<2x96xf32>
    %cst_49 = arith.constant dense<0.000000e+00> : vector<2x32xf32>
    %82 = tpu.matmul %81, %11, %cst_49 {dimension_numbers = #tpu.dot_dimension_numbers<[1], [0], [0], [1], [0, 0, 1, 1], [], []>} : vector<2x96xf32>, vector<96x32xf32>, vector<2x32xf32> -> vector<2x32xf32>
    %83 = vector.broadcast %12 : vector<1x32xf32> to vector<2x32xf32>
    %84 = arith.addf %82, %83 : vector<2x32xf32>
    %85 = arith.index_cast %c0_i32 : i32 to index
    %c0_50 = arith.constant 0 : index
    %c0_51 = arith.constant 0 : index
    %86 = vector.load %arg12[%85, %c0_50, %c0_51] : memref<8x2x32xf32, #tpu.memory_space<vmem>>, vector<1x2x32xf32>
    %87 = vector.shape_cast %86 : vector<1x2x32xf32> to vector<2x32xf32>
    %88 = vector.shape_cast %84 : vector<2x32xf32> to vector<1x2x32xf32>
    tpu.vector_store %arg12[%85, %c0_50, %c0_51], %88 {strides = array<i32>} : memref<8x2x32xf32, #tpu.memory_space<vmem>>, vector<1x2x32xf32>,
    %c0_52 = arith.constant 0 : index
    %c0_53 = arith.constant 0 : index
    %89 = vector.load %arg14[%c0_52, %c0_53] : memref<2x32xf32, #tpu.memory_space<vmem>>, vector<2x32xf32>
    tpu.vector_store %arg14[%c0_52, %c0_53], %79 {strides = array<i32>} : memref<2x32xf32, #tpu.memory_space<vmem>>, vector<2x32xf32>,
    %c0_54 = arith.constant 0 : index
    %c0_55 = arith.constant 0 : index
    %90 = vector.load %arg15[%c0_54, %c0_55] : memref<2x32xf32, #tpu.memory_space<vmem>>, vector<2x32xf32>
    tpu.vector_store %arg15[%c0_54, %c0_55], %84 {strides = array<i32>} : memref<2x32xf32, #tpu.memory_space<vmem>>, vector<2x32xf32>,
    %c1_i32 = arith.constant 1 : i32
    %c0_56 = arith.constant 0 : index
    %c0_57 = arith.constant 0 : index
    %91 = vector.load %arg14[%c0_56, %c0_57] : memref<2x32xf32, #tpu.memory_space<vmem>>, vector<2x32xf32>
    %92 = arith.index_cast %c1_i32 : i32 to index
    %93 = memref.load %arg0[%92] : memref<8xi32, #tpu.memory_space<smem>>
    %c0_i32_58 = arith.constant 0 : i32
    %94 = arith.cmpi sgt, %93, %c0_i32_58 : i32
    %95 = arith.index_cast %c1_i32 : i32 to index
    %c0_59 = arith.constant 0 : index
    %c0_60 = arith.constant 0 : index
    %96 = vector.load %arg1[%95, %c0_59, %c0_60] : memref<8x2x32xf32, #tpu.memory_space<vmem>>, vector<1x2x32xf32>
    %97 = vector.shape_cast %96 : vector<1x2x32xf32> to vector<2x32xf32>
    %c0_61 = arith.constant 0 : index
    %c0_62 = arith.constant 0 : index
    %98 = vector.load %arg15[%c0_61, %c0_62] : memref<2x32xf32, #tpu.memory_space<vmem>>, vector<2x32xf32>
    %99 = arith.select %94, %97, %98 : vector<2x32xf32>
    %cst_63 = arith.constant dense<0.000000e+00> : vector<2x128xf32>
    %100 = tpu.matmul %91, %7, %cst_63 {dimension_numbers = #tpu.dot_dimension_numbers<[1], [0], [0], [1], [0, 0, 1, 1], [], []>} : vector<2x32xf32>, vector<32x128xf32>, vector<2x128xf32> -> vector<2x128xf32>
    %101 = vector.extract_strided_slice %100 {offsets = [0, 0], sizes = [2, 32], strides = [1, 1]} : vector<2x128xf32> to vector<2x32xf32>
    %102 = vector.extract_strided_slice %100 {offsets = [0, 32], sizes = [2, 96], strides = [1, 1]} : vector<2x128xf32> to vector<2x96xf32>
    %103 = vector.broadcast %10 : vector<1x96xf32> to vector<2x96xf32>
    %104 = arith.addf %102, %103 : vector<2x96xf32>
    %105 = vector.shape_cast %101 : vector<2x32xf32> to vector<2x1x32xf32>
    %106 = vector.broadcast %105 : vector<2x1x32xf32> to vector<2x8x32xf32>
    %107 = arith.addf %106, %5 : vector<2x8x32xf32>
    %108 = math.tanh %107 : vector<2x8x32xf32>
    %109 = vector.shape_cast %6 : vector<1x32xf32> to vector<1x1x32xf32>
    %110 = vector.broadcast %109 : vector<1x1x32xf32> to vector<2x8x32xf32>
    %111 = arith.mulf %108, %110 : vector<2x8x32xf32>
    %cst_64 = arith.constant dense<0.000000e+00> : vector<2x8xf32>
    %112 = vector.multi_reduction <add>, %111, %cst_64 [2] : vector<2x8x32xf32> to vector<2x8xf32>
    %cst_65 = arith.constant dense<0xFF800000> : vector<2xf32>
    %113 = vector.multi_reduction <maximumf>, %112, %cst_65 [1] : vector<2x8xf32> to vector<2xf32>
    %114 = vector.shape_cast %113 : vector<2xf32> to vector<2x1xf32>
    %115 = vector.broadcast %114 : vector<2x1xf32> to vector<2x8xf32>
    %116 = arith.subf %112, %115 : vector<2x8xf32>
    %117 = math.exp %116 : vector<2x8xf32>
    %cst_66 = arith.constant dense<0.000000e+00> : vector<2xf32>
    %118 = vector.multi_reduction <add>, %117, %cst_66 [1] : vector<2x8xf32> to vector<2xf32>
    %119 = vector.shape_cast %118 : vector<2xf32> to vector<2x1xf32>
    %120 = vector.broadcast %119 : vector<2x1xf32> to vector<2x8xf32>
    %121 = arith.divf %117, %120 : vector<2x8xf32>
    %122 = vector.shape_cast %121 : vector<2x8xf32> to vector<2x8x1xf32>
    %123 = vector.broadcast %122 : vector<2x8x1xf32> to vector<2x8x32xf32>
    %124 = arith.mulf %123, %4 : vector<2x8x32xf32>
    %cst_67 = arith.constant dense<0.000000e+00> : vector<2x32xf32>
    %125 = vector.multi_reduction <add>, %124, %cst_67 [1] : vector<2x8x32xf32> to vector<2x32xf32>
    %c0_68 = arith.constant 0 : index
    %c0_69 = arith.constant 0 : index
    %126 = vector.load %arg16[%c0_68, %c0_69] : memref<2x96xf32, #tpu.memory_space<vmem>>, vector<2x32xf32>
    tpu.vector_store %arg16[%c0_68, %c0_69], %99 {strides = array<i32>} : memref<2x96xf32, #tpu.memory_space<vmem>>, vector<2x32xf32>,
    %c0_70 = arith.constant 0 : index
    %c32_71 = arith.constant 32 : index
    %127 = vector.load %arg16[%c0_70, %c32_71] : memref<2x96xf32, #tpu.memory_space<vmem>>, vector<2x32xf32>
    tpu.vector_store %arg16[%c0_70, %c32_71], %125 {strides = array<i32>} : memref<2x96xf32, #tpu.memory_space<vmem>>, vector<2x32xf32>,
    %c0_72 = arith.constant 0 : index
    %c0_73 = arith.constant 0 : index
    %128 = vector.load %arg16[%c0_72, %c0_73] : memref<2x96xf32, #tpu.memory_space<vmem>>, vector<2x64xf32>
    %cst_74 = arith.constant dense<0.000000e+00> : vector<2x96xf32>
    %129 = tpu.matmul %128, %8, %cst_74 {dimension_numbers = #tpu.dot_dimension_numbers<[1], [0], [0], [1], [0, 0, 1, 1], [], []>} : vector<2x64xf32>, vector<64x96xf32>, vector<2x96xf32> -> vector<2x96xf32>
    %130 = vector.broadcast %9 : vector<1x96xf32> to vector<2x96xf32>
    %131 = arith.addf %129, %130 : vector<2x96xf32>
    %132 = vector.extract_strided_slice %131 {offsets = [0, 0], sizes = [2, 32], strides = [1, 1]} : vector<2x96xf32> to vector<2x32xf32>
    %133 = vector.extract_strided_slice %104 {offsets = [0, 0], sizes = [2, 32], strides = [1, 1]} : vector<2x96xf32> to vector<2x32xf32>
    %134 = arith.addf %132, %133 : vector<2x32xf32>
    %135 = arith.negf %134 : vector<2x32xf32>
    %136 = math.exp %135 : vector<2x32xf32>
    %cst_75 = arith.constant 1.000000e+00 : f32
    %137 = vector.broadcast %cst_75 : f32 to vector<2x32xf32>
    %138 = arith.addf %137, %136 : vector<2x32xf32>
    %139 = arith.divf %137, %138 : vector<2x32xf32>
    %140 = vector.extract_strided_slice %131 {offsets = [0, 32], sizes = [2, 32], strides = [1, 1]} : vector<2x96xf32> to vector<2x32xf32>
    %141 = vector.extract_strided_slice %104 {offsets = [0, 32], sizes = [2, 32], strides = [1, 1]} : vector<2x96xf32> to vector<2x32xf32>
    %142 = arith.addf %140, %141 : vector<2x32xf32>
    %143 = arith.negf %142 : vector<2x32xf32>
    %144 = math.exp %143 : vector<2x32xf32>
    %cst_76 = arith.constant 1.000000e+00 : f32
    %145 = vector.broadcast %cst_76 : f32 to vector<2x32xf32>
    %146 = arith.addf %145, %144 : vector<2x32xf32>
    %147 = arith.divf %145, %146 : vector<2x32xf32>
    %148 = vector.extract_strided_slice %131 {offsets = [0, 64], sizes = [2, 32], strides = [1, 1]} : vector<2x96xf32> to vector<2x32xf32>
    %149 = vector.extract_strided_slice %104 {offsets = [0, 64], sizes = [2, 32], strides = [1, 1]} : vector<2x96xf32> to vector<2x32xf32>
    %150 = arith.mulf %139, %149 : vector<2x32xf32>
    %151 = arith.addf %148, %150 : vector<2x32xf32>
    %152 = math.tanh %151 : vector<2x32xf32>
    %cst_77 = arith.constant 1.000000e+00 : f32
    %153 = vector.broadcast %cst_77 : f32 to vector<2x32xf32>
    %154 = arith.subf %153, %147 : vector<2x32xf32>
    %155 = arith.mulf %154, %152 : vector<2x32xf32>
    %156 = arith.mulf %147, %91 : vector<2x32xf32>
    %157 = arith.addf %155, %156 : vector<2x32xf32>
    %c0_78 = arith.constant 0 : index
    %c64_79 = arith.constant 64 : index
    %158 = vector.load %arg16[%c0_78, %c64_79] : memref<2x96xf32, #tpu.memory_space<vmem>>, vector<2x32xf32>
    tpu.vector_store %arg16[%c0_78, %c64_79], %157 {strides = array<i32>} : memref<2x96xf32, #tpu.memory_space<vmem>>, vector<2x32xf32>,
    %c0_80 = arith.constant 0 : index
    %c0_81 = arith.constant 0 : index
    %159 = vector.load %arg16[%c0_80, %c0_81] : memref<2x96xf32, #tpu.memory_space<vmem>>, vector<2x96xf32>
    %cst_82 = arith.constant dense<0.000000e+00> : vector<2x32xf32>
    %160 = tpu.matmul %159, %11, %cst_82 {dimension_numbers = #tpu.dot_dimension_numbers<[1], [0], [0], [1], [0, 0, 1, 1], [], []>} : vector<2x96xf32>, vector<96x32xf32>, vector<2x32xf32> -> vector<2x32xf32>
    %161 = vector.broadcast %12 : vector<1x32xf32> to vector<2x32xf32>
    %162 = arith.addf %160, %161 : vector<2x32xf32>
    %163 = arith.index_cast %c1_i32 : i32 to index
    %c0_83 = arith.constant 0 : index
    %c0_84 = arith.constant 0 : index
    %164 = vector.load %arg12[%163, %c0_83, %c0_84] : memref<8x2x32xf32, #tpu.memory_space<vmem>>, vector<1x2x32xf32>
    %165 = vector.shape_cast %164 : vector<1x2x32xf32> to vector<2x32xf32>
    %166 = vector.shape_cast %162 : vector<2x32xf32> to vector<1x2x32xf32>
    tpu.vector_store %arg12[%163, %c0_83, %c0_84], %166 {strides = array<i32>} : memref<8x2x32xf32, #tpu.memory_space<vmem>>, vector<1x2x32xf32>,
    %c0_85 = arith.constant 0 : index
    %c0_86 = arith.constant 0 : index
    %167 = vector.load %arg14[%c0_85, %c0_86] : memref<2x32xf32, #tpu.memory_space<vmem>>, vector<2x32xf32>
    tpu.vector_store %arg14[%c0_85, %c0_86], %157 {strides = array<i32>} : memref<2x32xf32, #tpu.memory_space<vmem>>, vector<2x32xf32>,
    %c0_87 = arith.constant 0 : index
    %c0_88 = arith.constant 0 : index
    %168 = vector.load %arg15[%c0_87, %c0_88] : memref<2x32xf32, #tpu.memory_space<vmem>>, vector<2x32xf32>
    tpu.vector_store %arg15[%c0_87, %c0_88], %162 {strides = array<i32>} : memref<2x32xf32, #tpu.memory_space<vmem>>, vector<2x32xf32>,
    %c2_i32 = arith.constant 2 : i32
    %c0_89 = arith.constant 0 : index
    %c0_90 = arith.constant 0 : index
    %169 = vector.load %arg14[%c0_89, %c0_90] : memref<2x32xf32, #tpu.memory_space<vmem>>, vector<2x32xf32>
    %170 = arith.index_cast %c2_i32 : i32 to index
    %171 = memref.load %arg0[%170] : memref<8xi32, #tpu.memory_space<smem>>
    %c0_i32_91 = arith.constant 0 : i32
    %172 = arith.cmpi sgt, %171, %c0_i32_91 : i32
    %173 = arith.index_cast %c2_i32 : i32 to index
    %c0_92 = arith.constant 0 : index
    %c0_93 = arith.constant 0 : index
    %174 = vector.load %arg1[%173, %c0_92, %c0_93] : memref<8x2x32xf32, #tpu.memory_space<vmem>>, vector<1x2x32xf32>
    %175 = vector.shape_cast %174 : vector<1x2x32xf32> to vector<2x32xf32>
    %c0_94 = arith.constant 0 : index
    %c0_95 = arith.constant 0 : index
    %176 = vector.load %arg15[%c0_94, %c0_95] : memref<2x32xf32, #tpu.memory_space<vmem>>, vector<2x32xf32>
    %177 = arith.select %172, %175, %176 : vector<2x32xf32>
    %cst_96 = arith.constant dense<0.000000e+00> : vector<2x128xf32>
    %178 = tpu.matmul %169, %7, %cst_96 {dimension_numbers = #tpu.dot_dimension_numbers<[1], [0], [0], [1], [0, 0, 1, 1], [], []>} : vector<2x32xf32>, vector<32x128xf32>, vector<2x128xf32> -> vector<2x128xf32>
    %179 = vector.extract_strided_slice %178 {offsets = [0, 0], sizes = [2, 32], strides = [1, 1]} : vector<2x128xf32> to vector<2x32xf32>
    %180 = vector.extract_strided_slice %178 {offsets = [0, 32], sizes = [2, 96], strides = [1, 1]} : vector<2x128xf32> to vector<2x96xf32>
    %181 = vector.broadcast %10 : vector<1x96xf32> to vector<2x96xf32>
    %182 = arith.addf %180, %181 : vector<2x96xf32>
    %183 = vector.shape_cast %179 : vector<2x32xf32> to vector<2x1x32xf32>
    %184 = vector.broadcast %183 : vector<2x1x32xf32> to vector<2x8x32xf32>
    %185 = arith.addf %184, %5 : vector<2x8x32xf32>
    %186 = math.tanh %185 : vector<2x8x32xf32>
    %187 = vector.shape_cast %6 : vector<1x32xf32> to vector<1x1x32xf32>
    %188 = vector.broadcast %187 : vector<1x1x32xf32> to vector<2x8x32xf32>
    %189 = arith.mulf %186, %188 : vector<2x8x32xf32>
    %cst_97 = arith.constant dense<0.000000e+00> : vector<2x8xf32>
    %190 = vector.multi_reduction <add>, %189, %cst_97 [2] : vector<2x8x32xf32> to vector<2x8xf32>
    %cst_98 = arith.constant dense<0xFF800000> : vector<2xf32>
    %191 = vector.multi_reduction <maximumf>, %190, %cst_98 [1] : vector<2x8xf32> to vector<2xf32>
    %192 = vector.shape_cast %191 : vector<2xf32> to vector<2x1xf32>
    %193 = vector.broadcast %192 : vector<2x1xf32> to vector<2x8xf32>
    %194 = arith.subf %190, %193 : vector<2x8xf32>
    %195 = math.exp %194 : vector<2x8xf32>
    %cst_99 = arith.constant dense<0.000000e+00> : vector<2xf32>
    %196 = vector.multi_reduction <add>, %195, %cst_99 [1] : vector<2x8xf32> to vector<2xf32>
    %197 = vector.shape_cast %196 : vector<2xf32> to vector<2x1xf32>
    %198 = vector.broadcast %197 : vector<2x1xf32> to vector<2x8xf32>
    %199 = arith.divf %195, %198 : vector<2x8xf32>
    %200 = vector.shape_cast %199 : vector<2x8xf32> to vector<2x8x1xf32>
    %201 = vector.broadcast %200 : vector<2x8x1xf32> to vector<2x8x32xf32>
    %202 = arith.mulf %201, %4 : vector<2x8x32xf32>
    %cst_100 = arith.constant dense<0.000000e+00> : vector<2x32xf32>
    %203 = vector.multi_reduction <add>, %202, %cst_100 [1] : vector<2x8x32xf32> to vector<2x32xf32>
    %c0_101 = arith.constant 0 : index
    %c0_102 = arith.constant 0 : index
    %204 = vector.load %arg16[%c0_101, %c0_102] : memref<2x96xf32, #tpu.memory_space<vmem>>, vector<2x32xf32>
    tpu.vector_store %arg16[%c0_101, %c0_102], %177 {strides = array<i32>} : memref<2x96xf32, #tpu.memory_space<vmem>>, vector<2x32xf32>,
    %c0_103 = arith.constant 0 : index
    %c32_104 = arith.constant 32 : index
    %205 = vector.load %arg16[%c0_103, %c32_104] : memref<2x96xf32, #tpu.memory_space<vmem>>, vector<2x32xf32>
    tpu.vector_store %arg16[%c0_103, %c32_104], %203 {strides = array<i32>} : memref<2x96xf32, #tpu.memory_space<vmem>>, vector<2x32xf32>,
    %c0_105 = arith.constant 0 : index
    %c0_106 = arith.constant 0 : index
    %206 = vector.load %arg16[%c0_105, %c0_106] : memref<2x96xf32, #tpu.memory_space<vmem>>, vector<2x64xf32>
    %cst_107 = arith.constant dense<0.000000e+00> : vector<2x96xf32>
    %207 = tpu.matmul %206, %8, %cst_107 {dimension_numbers = #tpu.dot_dimension_numbers<[1], [0], [0], [1], [0, 0, 1, 1], [], []>} : vector<2x64xf32>, vector<64x96xf32>, vector<2x96xf32> -> vector<2x96xf32>
    %208 = vector.broadcast %9 : vector<1x96xf32> to vector<2x96xf32>
    %209 = arith.addf %207, %208 : vector<2x96xf32>
    %210 = vector.extract_strided_slice %209 {offsets = [0, 0], sizes = [2, 32], strides = [1, 1]} : vector<2x96xf32> to vector<2x32xf32>
    %211 = vector.extract_strided_slice %182 {offsets = [0, 0], sizes = [2, 32], strides = [1, 1]} : vector<2x96xf32> to vector<2x32xf32>
    %212 = arith.addf %210, %211 : vector<2x32xf32>
    %213 = arith.negf %212 : vector<2x32xf32>
    %214 = math.exp %213 : vector<2x32xf32>
    %cst_108 = arith.constant 1.000000e+00 : f32
    %215 = vector.broadcast %cst_108 : f32 to vector<2x32xf32>
    %216 = arith.addf %215, %214 : vector<2x32xf32>
    %217 = arith.divf %215, %216 : vector<2x32xf32>
    %218 = vector.extract_strided_slice %209 {offsets = [0, 32], sizes = [2, 32], strides = [1, 1]} : vector<2x96xf32> to vector<2x32xf32>
    %219 = vector.extract_strided_slice %182 {offsets = [0, 32], sizes = [2, 32], strides = [1, 1]} : vector<2x96xf32> to vector<2x32xf32>
    %220 = arith.addf %218, %219 : vector<2x32xf32>
    %221 = arith.negf %220 : vector<2x32xf32>
    %222 = math.exp %221 : vector<2x32xf32>
    %cst_109 = arith.constant 1.000000e+00 : f32
    %223 = vector.broadcast %cst_109 : f32 to vector<2x32xf32>
    %224 = arith.addf %223, %222 : vector<2x32xf32>
    %225 = arith.divf %223, %224 : vector<2x32xf32>
    %226 = vector.extract_strided_slice %209 {offsets = [0, 64], sizes = [2, 32], strides = [1, 1]} : vector<2x96xf32> to vector<2x32xf32>
    %227 = vector.extract_strided_slice %182 {offsets = [0, 64], sizes = [2, 32], strides = [1, 1]} : vector<2x96xf32> to vector<2x32xf32>
    %228 = arith.mulf %217, %227 : vector<2x32xf32>
    %229 = arith.addf %226, %228 : vector<2x32xf32>
    %230 = math.tanh %229 : vector<2x32xf32>
    %cst_110 = arith.constant 1.000000e+00 : f32
    %231 = vector.broadcast %cst_110 : f32 to vector<2x32xf32>
    %232 = arith.subf %231, %225 : vector<2x32xf32>
    %233 = arith.mulf %232, %230 : vector<2x32xf32>
    %234 = arith.mulf %225, %169 : vector<2x32xf32>
    %235 = arith.addf %233, %234 : vector<2x32xf32>
    %c0_111 = arith.constant 0 : index
    %c64_112 = arith.constant 64 : index
    %236 = vector.load %arg16[%c0_111, %c64_112] : memref<2x96xf32, #tpu.memory_space<vmem>>, vector<2x32xf32>
    tpu.vector_store %arg16[%c0_111, %c64_112], %235 {strides = array<i32>} : memref<2x96xf32, #tpu.memory_space<vmem>>, vector<2x32xf32>,
    %c0_113 = arith.constant 0 : index
    %c0_114 = arith.constant 0 : index
    %237 = vector.load %arg16[%c0_113, %c0_114] : memref<2x96xf32, #tpu.memory_space<vmem>>, vector<2x96xf32>
    %cst_115 = arith.constant dense<0.000000e+00> : vector<2x32xf32>
    %238 = tpu.matmul %237, %11, %cst_115 {dimension_numbers = #tpu.dot_dimension_numbers<[1], [0], [0], [1], [0, 0, 1, 1], [], []>} : vector<2x96xf32>, vector<96x32xf32>, vector<2x32xf32> -> vector<2x32xf32>
    %239 = vector.broadcast %12 : vector<1x32xf32> to vector<2x32xf32>
    %240 = arith.addf %238, %239 : vector<2x32xf32>
    %241 = arith.index_cast %c2_i32 : i32 to index
    %c0_116 = arith.constant 0 : index
    %c0_117 = arith.constant 0 : index
    %242 = vector.load %arg12[%241, %c0_116, %c0_117] : memref<8x2x32xf32, #tpu.memory_space<vmem>>, vector<1x2x32xf32>
    %243 = vector.shape_cast %242 : vector<1x2x32xf32> to vector<2x32xf32>
    %244 = vector.shape_cast %240 : vector<2x32xf32> to vector<1x2x32xf32>
    tpu.vector_store %arg12[%241, %c0_116, %c0_117], %244 {strides = array<i32>} : memref<8x2x32xf32, #tpu.memory_space<vmem>>, vector<1x2x32xf32>,
    %c0_118 = arith.constant 0 : index
    %c0_119 = arith.constant 0 : index
    %245 = vector.load %arg14[%c0_118, %c0_119] : memref<2x32xf32, #tpu.memory_space<vmem>>, vector<2x32xf32>
    tpu.vector_store %arg14[%c0_118, %c0_119], %235 {strides = array<i32>} : memref<2x32xf32, #tpu.memory_space<vmem>>, vector<2x32xf32>,
    %c0_120 = arith.constant 0 : index
    %c0_121 = arith.constant 0 : index
    %246 = vector.load %arg15[%c0_120, %c0_121] : memref<2x32xf32, #tpu.memory_space<vmem>>, vector<2x32xf32>
    tpu.vector_store %arg15[%c0_120, %c0_121], %240 {strides = array<i32>} : memref<2x32xf32, #tpu.memory_space<vmem>>, vector<2x32xf32>,
    %c3_i32 = arith.constant 3 : i32
    %c0_122 = arith.constant 0 : index
    %c0_123 = arith.constant 0 : index
    %247 = vector.load %arg14[%c0_122, %c0_123] : memref<2x32xf32, #tpu.memory_space<vmem>>, vector<2x32xf32>
    %248 = arith.index_cast %c3_i32 : i32 to index
    %249 = memref.load %arg0[%248] : memref<8xi32, #tpu.memory_space<smem>>
    %c0_i32_124 = arith.constant 0 : i32
    %250 = arith.cmpi sgt, %249, %c0_i32_124 : i32
    %251 = arith.index_cast %c3_i32 : i32 to index
    %c0_125 = arith.constant 0 : index
    %c0_126 = arith.constant 0 : index
    %252 = vector.load %arg1[%251, %c0_125, %c0_126] : memref<8x2x32xf32, #tpu.memory_space<vmem>>, vector<1x2x32xf32>
    %253 = vector.shape_cast %252 : vector<1x2x32xf32> to vector<2x32xf32>
    %c0_127 = arith.constant 0 : index
    %c0_128 = arith.constant 0 : index
    %254 = vector.load %arg15[%c0_127, %c0_128] : memref<2x32xf32, #tpu.memory_space<vmem>>, vector<2x32xf32>
    %255 = arith.select %250, %253, %254 : vector<2x32xf32>
    %cst_129 = arith.constant dense<0.000000e+00> : vector<2x128xf32>
    %256 = tpu.matmul %247, %7, %cst_129 {dimension_numbers = #tpu.dot_dimension_numbers<[1], [0], [0], [1], [0, 0, 1, 1], [], []>} : vector<2x32xf32>, vector<32x128xf32>, vector<2x128xf32> -> vector<2x128xf32>
    %257 = vector.extract_strided_slice %256 {offsets = [0, 0], sizes = [2, 32], strides = [1, 1]} : vector<2x128xf32> to vector<2x32xf32>
    %258 = vector.extract_strided_slice %256 {offsets = [0, 32], sizes = [2, 96], strides = [1, 1]} : vector<2x128xf32> to vector<2x96xf32>
    %259 = vector.broadcast %10 : vector<1x96xf32> to vector<2x96xf32>
    %260 = arith.addf %258, %259 : vector<2x96xf32>
    %261 = vector.shape_cast %257 : vector<2x32xf32> to vector<2x1x32xf32>
    %262 = vector.broadcast %261 : vector<2x1x32xf32> to vector<2x8x32xf32>
    %263 = arith.addf %262, %5 : vector<2x8x32xf32>
    %264 = math.tanh %263 : vector<2x8x32xf32>
    %265 = vector.shape_cast %6 : vector<1x32xf32> to vector<1x1x32xf32>
    %266 = vector.broadcast %265 : vector<1x1x32xf32> to vector<2x8x32xf32>
    %267 = arith.mulf %264, %266 : vector<2x8x32xf32>
    %cst_130 = arith.constant dense<0.000000e+00> : vector<2x8xf32>
    %268 = vector.multi_reduction <add>, %267, %cst_130 [2] : vector<2x8x32xf32> to vector<2x8xf32>
    %cst_131 = arith.constant dense<0xFF800000> : vector<2xf32>
    %269 = vector.multi_reduction <maximumf>, %268, %cst_131 [1] : vector<2x8xf32> to vector<2xf32>
    %270 = vector.shape_cast %269 : vector<2xf32> to vector<2x1xf32>
    %271 = vector.broadcast %270 : vector<2x1xf32> to vector<2x8xf32>
    %272 = arith.subf %268, %271 : vector<2x8xf32>
    %273 = math.exp %272 : vector<2x8xf32>
    %cst_132 = arith.constant dense<0.000000e+00> : vector<2xf32>
    %274 = vector.multi_reduction <add>, %273, %cst_132 [1] : vector<2x8xf32> to vector<2xf32>
    %275 = vector.shape_cast %274 : vector<2xf32> to vector<2x1xf32>
    %276 = vector.broadcast %275 : vector<2x1xf32> to vector<2x8xf32>
    %277 = arith.divf %273, %276 : vector<2x8xf32>
    %278 = vector.shape_cast %277 : vector<2x8xf32> to vector<2x8x1xf32>
    %279 = vector.broadcast %278 : vector<2x8x1xf32> to vector<2x8x32xf32>
    %280 = arith.mulf %279, %4 : vector<2x8x32xf32>
    %cst_133 = arith.constant dense<0.000000e+00> : vector<2x32xf32>
    %281 = vector.multi_reduction <add>, %280, %cst_133 [1] : vector<2x8x32xf32> to vector<2x32xf32>
    %c0_134 = arith.constant 0 : index
    %c0_135 = arith.constant 0 : index
    %282 = vector.load %arg16[%c0_134, %c0_135] : memref<2x96xf32, #tpu.memory_space<vmem>>, vector<2x32xf32>
    tpu.vector_store %arg16[%c0_134, %c0_135], %255 {strides = array<i32>} : memref<2x96xf32, #tpu.memory_space<vmem>>, vector<2x32xf32>,
    %c0_136 = arith.constant 0 : index
    %c32_137 = arith.constant 32 : index
    %283 = vector.load %arg16[%c0_136, %c32_137] : memref<2x96xf32, #tpu.memory_space<vmem>>, vector<2x32xf32>
    tpu.vector_store %arg16[%c0_136, %c32_137], %281 {strides = array<i32>} : memref<2x96xf32, #tpu.memory_space<vmem>>, vector<2x32xf32>,
    %c0_138 = arith.constant 0 : index
    %c0_139 = arith.constant 0 : index
    %284 = vector.load %arg16[%c0_138, %c0_139] : memref<2x96xf32, #tpu.memory_space<vmem>>, vector<2x64xf32>
    %cst_140 = arith.constant dense<0.000000e+00> : vector<2x96xf32>
    %285 = tpu.matmul %284, %8, %cst_140 {dimension_numbers = #tpu.dot_dimension_numbers<[1], [0], [0], [1], [0, 0, 1, 1], [], []>} : vector<2x64xf32>, vector<64x96xf32>, vector<2x96xf32> -> vector<2x96xf32>
    %286 = vector.broadcast %9 : vector<1x96xf32> to vector<2x96xf32>
    %287 = arith.addf %285, %286 : vector<2x96xf32>
    %288 = vector.extract_strided_slice %287 {offsets = [0, 0], sizes = [2, 32], strides = [1, 1]} : vector<2x96xf32> to vector<2x32xf32>
    %289 = vector.extract_strided_slice %260 {offsets = [0, 0], sizes = [2, 32], strides = [1, 1]} : vector<2x96xf32> to vector<2x32xf32>
    %290 = arith.addf %288, %289 : vector<2x32xf32>
    %291 = arith.negf %290 : vector<2x32xf32>
    %292 = math.exp %291 : vector<2x32xf32>
    %cst_141 = arith.constant 1.000000e+00 : f32
    %293 = vector.broadcast %cst_141 : f32 to vector<2x32xf32>
    %294 = arith.addf %293, %292 : vector<2x32xf32>
    %295 = arith.divf %293, %294 : vector<2x32xf32>
    %296 = vector.extract_strided_slice %287 {offsets = [0, 32], sizes = [2, 32], strides = [1, 1]} : vector<2x96xf32> to vector<2x32xf32>
    %297 = vector.extract_strided_slice %260 {offsets = [0, 32], sizes = [2, 32], strides = [1, 1]} : vector<2x96xf32> to vector<2x32xf32>
    %298 = arith.addf %296, %297 : vector<2x32xf32>
    %299 = arith.negf %298 : vector<2x32xf32>
    %300 = math.exp %299 : vector<2x32xf32>
    %cst_142 = arith.constant 1.000000e+00 : f32
    %301 = vector.broadcast %cst_142 : f32 to vector<2x32xf32>
    %302 = arith.addf %301, %300 : vector<2x32xf32>
    %303 = arith.divf %301, %302 : vector<2x32xf32>
    %304 = vector.extract_strided_slice %287 {offsets = [0, 64], sizes = [2, 32], strides = [1, 1]} : vector<2x96xf32> to vector<2x32xf32>
    %305 = vector.extract_strided_slice %260 {offsets = [0, 64], sizes = [2, 32], strides = [1, 1]} : vector<2x96xf32> to vector<2x32xf32>
    %306 = arith.mulf %295, %305 : vector<2x32xf32>
    %307 = arith.addf %304, %306 : vector<2x32xf32>
    %308 = math.tanh %307 : vector<2x32xf32>
    %cst_143 = arith.constant 1.000000e+00 : f32
    %309 = vector.broadcast %cst_143 : f32 to vector<2x32xf32>
    %310 = arith.subf %309, %303 : vector<2x32xf32>
    %311 = arith.mulf %310, %308 : vector<2x32xf32>
    %312 = arith.mulf %303, %247 : vector<2x32xf32>
    %313 = arith.addf %311, %312 : vector<2x32xf32>
    %c0_144 = arith.constant 0 : index
    %c64_145 = arith.constant 64 : index
    %314 = vector.load %arg16[%c0_144, %c64_145] : memref<2x96xf32, #tpu.memory_space<vmem>>, vector<2x32xf32>
    tpu.vector_store %arg16[%c0_144, %c64_145], %313 {strides = array<i32>} : memref<2x96xf32, #tpu.memory_space<vmem>>, vector<2x32xf32>,
    %c0_146 = arith.constant 0 : index
    %c0_147 = arith.constant 0 : index
    %315 = vector.load %arg16[%c0_146, %c0_147] : memref<2x96xf32, #tpu.memory_space<vmem>>, vector<2x96xf32>
    %cst_148 = arith.constant dense<0.000000e+00> : vector<2x32xf32>
    %316 = tpu.matmul %315, %11, %cst_148 {dimension_numbers = #tpu.dot_dimension_numbers<[1], [0], [0], [1], [0, 0, 1, 1], [], []>} : vector<2x96xf32>, vector<96x32xf32>, vector<2x32xf32> -> vector<2x32xf32>
    %317 = vector.broadcast %12 : vector<1x32xf32> to vector<2x32xf32>
    %318 = arith.addf %316, %317 : vector<2x32xf32>
    %319 = arith.index_cast %c3_i32 : i32 to index
    %c0_149 = arith.constant 0 : index
    %c0_150 = arith.constant 0 : index
    %320 = vector.load %arg12[%319, %c0_149, %c0_150] : memref<8x2x32xf32, #tpu.memory_space<vmem>>, vector<1x2x32xf32>
    %321 = vector.shape_cast %320 : vector<1x2x32xf32> to vector<2x32xf32>
    %322 = vector.shape_cast %318 : vector<2x32xf32> to vector<1x2x32xf32>
    tpu.vector_store %arg12[%319, %c0_149, %c0_150], %322 {strides = array<i32>} : memref<8x2x32xf32, #tpu.memory_space<vmem>>, vector<1x2x32xf32>,
    %c0_151 = arith.constant 0 : index
    %c0_152 = arith.constant 0 : index
    %323 = vector.load %arg14[%c0_151, %c0_152] : memref<2x32xf32, #tpu.memory_space<vmem>>, vector<2x32xf32>
    tpu.vector_store %arg14[%c0_151, %c0_152], %313 {strides = array<i32>} : memref<2x32xf32, #tpu.memory_space<vmem>>, vector<2x32xf32>,
    %c0_153 = arith.constant 0 : index
    %c0_154 = arith.constant 0 : index
    %324 = vector.load %arg15[%c0_153, %c0_154] : memref<2x32xf32, #tpu.memory_space<vmem>>, vector<2x32xf32>
    tpu.vector_store %arg15[%c0_153, %c0_154], %318 {strides = array<i32>} : memref<2x32xf32, #tpu.memory_space<vmem>>, vector<2x32xf32>,
    %c4_i32 = arith.constant 4 : i32
    %c0_155 = arith.constant 0 : index
    %c0_156 = arith.constant 0 : index
    %325 = vector.load %arg14[%c0_155, %c0_156] : memref<2x32xf32, #tpu.memory_space<vmem>>, vector<2x32xf32>
    %326 = arith.index_cast %c4_i32 : i32 to index
    %327 = memref.load %arg0[%326] : memref<8xi32, #tpu.memory_space<smem>>
    %c0_i32_157 = arith.constant 0 : i32
    %328 = arith.cmpi sgt, %327, %c0_i32_157 : i32
    %329 = arith.index_cast %c4_i32 : i32 to index
    %c0_158 = arith.constant 0 : index
    %c0_159 = arith.constant 0 : index
    %330 = vector.load %arg1[%329, %c0_158, %c0_159] : memref<8x2x32xf32, #tpu.memory_space<vmem>>, vector<1x2x32xf32>
    %331 = vector.shape_cast %330 : vector<1x2x32xf32> to vector<2x32xf32>
    %c0_160 = arith.constant 0 : index
    %c0_161 = arith.constant 0 : index
    %332 = vector.load %arg15[%c0_160, %c0_161] : memref<2x32xf32, #tpu.memory_space<vmem>>, vector<2x32xf32>
    %333 = arith.select %328, %331, %332 : vector<2x32xf32>
    %cst_162 = arith.constant dense<0.000000e+00> : vector<2x128xf32>
    %334 = tpu.matmul %325, %7, %cst_162 {dimension_numbers = #tpu.dot_dimension_numbers<[1], [0], [0], [1], [0, 0, 1, 1], [], []>} : vector<2x32xf32>, vector<32x128xf32>, vector<2x128xf32> -> vector<2x128xf32>
    %335 = vector.extract_strided_slice %334 {offsets = [0, 0], sizes = [2, 32], strides = [1, 1]} : vector<2x128xf32> to vector<2x32xf32>
    %336 = vector.extract_strided_slice %334 {offsets = [0, 32], sizes = [2, 96], strides = [1, 1]} : vector<2x128xf32> to vector<2x96xf32>
    %337 = vector.broadcast %10 : vector<1x96xf32> to vector<2x96xf32>
    %338 = arith.addf %336, %337 : vector<2x96xf32>
    %339 = vector.shape_cast %335 : vector<2x32xf32> to vector<2x1x32xf32>
    %340 = vector.broadcast %339 : vector<2x1x32xf32> to vector<2x8x32xf32>
    %341 = arith.addf %340, %5 : vector<2x8x32xf32>
    %342 = math.tanh %341 : vector<2x8x32xf32>
    %343 = vector.shape_cast %6 : vector<1x32xf32> to vector<1x1x32xf32>
    %344 = vector.broadcast %343 : vector<1x1x32xf32> to vector<2x8x32xf32>
    %345 = arith.mulf %342, %344 : vector<2x8x32xf32>
    %cst_163 = arith.constant dense<0.000000e+00> : vector<2x8xf32>
    %346 = vector.multi_reduction <add>, %345, %cst_163 [2] : vector<2x8x32xf32> to vector<2x8xf32>
    %cst_164 = arith.constant dense<0xFF800000> : vector<2xf32>
    %347 = vector.multi_reduction <maximumf>, %346, %cst_164 [1] : vector<2x8xf32> to vector<2xf32>
    %348 = vector.shape_cast %347 : vector<2xf32> to vector<2x1xf32>
    %349 = vector.broadcast %348 : vector<2x1xf32> to vector<2x8xf32>
    %350 = arith.subf %346, %349 : vector<2x8xf32>
    %351 = math.exp %350 : vector<2x8xf32>
    %cst_165 = arith.constant dense<0.000000e+00> : vector<2xf32>
    %352 = vector.multi_reduction <add>, %351, %cst_165 [1] : vector<2x8xf32> to vector<2xf32>
    %353 = vector.shape_cast %352 : vector<2xf32> to vector<2x1xf32>
    %354 = vector.broadcast %353 : vector<2x1xf32> to vector<2x8xf32>
    %355 = arith.divf %351, %354 : vector<2x8xf32>
    %356 = vector.shape_cast %355 : vector<2x8xf32> to vector<2x8x1xf32>
    %357 = vector.broadcast %356 : vector<2x8x1xf32> to vector<2x8x32xf32>
    %358 = arith.mulf %357, %4 : vector<2x8x32xf32>
    %cst_166 = arith.constant dense<0.000000e+00> : vector<2x32xf32>
    %359 = vector.multi_reduction <add>, %358, %cst_166 [1] : vector<2x8x32xf32> to vector<2x32xf32>
    %c0_167 = arith.constant 0 : index
    %c0_168 = arith.constant 0 : index
    %360 = vector.load %arg16[%c0_167, %c0_168] : memref<2x96xf32, #tpu.memory_space<vmem>>, vector<2x32xf32>
    tpu.vector_store %arg16[%c0_167, %c0_168], %333 {strides = array<i32>} : memref<2x96xf32, #tpu.memory_space<vmem>>, vector<2x32xf32>,
    %c0_169 = arith.constant 0 : index
    %c32_170 = arith.constant 32 : index
    %361 = vector.load %arg16[%c0_169, %c32_170] : memref<2x96xf32, #tpu.memory_space<vmem>>, vector<2x32xf32>
    tpu.vector_store %arg16[%c0_169, %c32_170], %359 {strides = array<i32>} : memref<2x96xf32, #tpu.memory_space<vmem>>, vector<2x32xf32>,
    %c0_171 = arith.constant 0 : index
    %c0_172 = arith.constant 0 : index
    %362 = vector.load %arg16[%c0_171, %c0_172] : memref<2x96xf32, #tpu.memory_space<vmem>>, vector<2x64xf32>
    %cst_173 = arith.constant dense<0.000000e+00> : vector<2x96xf32>
    %363 = tpu.matmul %362, %8, %cst_173 {dimension_numbers = #tpu.dot_dimension_numbers<[1], [0], [0], [1], [0, 0, 1, 1], [], []>} : vector<2x64xf32>, vector<64x96xf32>, vector<2x96xf32> -> vector<2x96xf32>
    %364 = vector.broadcast %9 : vector<1x96xf32> to vector<2x96xf32>
    %365 = arith.addf %363, %364 : vector<2x96xf32>
    %366 = vector.extract_strided_slice %365 {offsets = [0, 0], sizes = [2, 32], strides = [1, 1]} : vector<2x96xf32> to vector<2x32xf32>
    %367 = vector.extract_strided_slice %338 {offsets = [0, 0], sizes = [2, 32], strides = [1, 1]} : vector<2x96xf32> to vector<2x32xf32>
    %368 = arith.addf %366, %367 : vector<2x32xf32>
    %369 = arith.negf %368 : vector<2x32xf32>
    %370 = math.exp %369 : vector<2x32xf32>
    %cst_174 = arith.constant 1.000000e+00 : f32
    %371 = vector.broadcast %cst_174 : f32 to vector<2x32xf32>
    %372 = arith.addf %371, %370 : vector<2x32xf32>
    %373 = arith.divf %371, %372 : vector<2x32xf32>
    %374 = vector.extract_strided_slice %365 {offsets = [0, 32], sizes = [2, 32], strides = [1, 1]} : vector<2x96xf32> to vector<2x32xf32>
    %375 = vector.extract_strided_slice %338 {offsets = [0, 32], sizes = [2, 32], strides = [1, 1]} : vector<2x96xf32> to vector<2x32xf32>
    %376 = arith.addf %374, %375 : vector<2x32xf32>
    %377 = arith.negf %376 : vector<2x32xf32>
    %378 = math.exp %377 : vector<2x32xf32>
    %cst_175 = arith.constant 1.000000e+00 : f32
    %379 = vector.broadcast %cst_175 : f32 to vector<2x32xf32>
    %380 = arith.addf %379, %378 : vector<2x32xf32>
    %381 = arith.divf %379, %380 : vector<2x32xf32>
    %382 = vector.extract_strided_slice %365 {offsets = [0, 64], sizes = [2, 32], strides = [1, 1]} : vector<2x96xf32> to vector<2x32xf32>
    %383 = vector.extract_strided_slice %338 {offsets = [0, 64], sizes = [2, 32], strides = [1, 1]} : vector<2x96xf32> to vector<2x32xf32>
    %384 = arith.mulf %373, %383 : vector<2x32xf32>
    %385 = arith.addf %382, %384 : vector<2x32xf32>
    %386 = math.tanh %385 : vector<2x32xf32>
    %cst_176 = arith.constant 1.000000e+00 : f32
    %387 = vector.broadcast %cst_176 : f32 to vector<2x32xf32>
    %388 = arith.subf %387, %381 : vector<2x32xf32>
    %389 = arith.mulf %388, %386 : vector<2x32xf32>
    %390 = arith.mulf %381, %325 : vector<2x32xf32>
    %391 = arith.addf %389, %390 : vector<2x32xf32>
    %c0_177 = arith.constant 0 : index
    %c64_178 = arith.constant 64 : index
    %392 = vector.load %arg16[%c0_177, %c64_178] : memref<2x96xf32, #tpu.memory_space<vmem>>, vector<2x32xf32>
    tpu.vector_store %arg16[%c0_177, %c64_178], %391 {strides = array<i32>} : memref<2x96xf32, #tpu.memory_space<vmem>>, vector<2x32xf32>,
    %c0_179 = arith.constant 0 : index
    %c0_180 = arith.constant 0 : index
    %393 = vector.load %arg16[%c0_179, %c0_180] : memref<2x96xf32, #tpu.memory_space<vmem>>, vector<2x96xf32>
    %cst_181 = arith.constant dense<0.000000e+00> : vector<2x32xf32>
    %394 = tpu.matmul %393, %11, %cst_181 {dimension_numbers = #tpu.dot_dimension_numbers<[1], [0], [0], [1], [0, 0, 1, 1], [], []>} : vector<2x96xf32>, vector<96x32xf32>, vector<2x32xf32> -> vector<2x32xf32>
    %395 = vector.broadcast %12 : vector<1x32xf32> to vector<2x32xf32>
    %396 = arith.addf %394, %395 : vector<2x32xf32>
    %397 = arith.index_cast %c4_i32 : i32 to index
    %c0_182 = arith.constant 0 : index
    %c0_183 = arith.constant 0 : index
    %398 = vector.load %arg12[%397, %c0_182, %c0_183] : memref<8x2x32xf32, #tpu.memory_space<vmem>>, vector<1x2x32xf32>
    %399 = vector.shape_cast %398 : vector<1x2x32xf32> to vector<2x32xf32>
    %400 = vector.shape_cast %396 : vector<2x32xf32> to vector<1x2x32xf32>
    tpu.vector_store %arg12[%397, %c0_182, %c0_183], %400 {strides = array<i32>} : memref<8x2x32xf32, #tpu.memory_space<vmem>>, vector<1x2x32xf32>,
    %c0_184 = arith.constant 0 : index
    %c0_185 = arith.constant 0 : index
    %401 = vector.load %arg14[%c0_184, %c0_185] : memref<2x32xf32, #tpu.memory_space<vmem>>, vector<2x32xf32>
    tpu.vector_store %arg14[%c0_184, %c0_185], %391 {strides = array<i32>} : memref<2x32xf32, #tpu.memory_space<vmem>>, vector<2x32xf32>,
    %c0_186 = arith.constant 0 : index
    %c0_187 = arith.constant 0 : index
    %402 = vector.load %arg15[%c0_186, %c0_187] : memref<2x32xf32, #tpu.memory_space<vmem>>, vector<2x32xf32>
    tpu.vector_store %arg15[%c0_186, %c0_187], %396 {strides = array<i32>} : memref<2x32xf32, #tpu.memory_space<vmem>>, vector<2x32xf32>,
    %c5_i32 = arith.constant 5 : i32
    %c0_188 = arith.constant 0 : index
    %c0_189 = arith.constant 0 : index
    %403 = vector.load %arg14[%c0_188, %c0_189] : memref<2x32xf32, #tpu.memory_space<vmem>>, vector<2x32xf32>
    %404 = arith.index_cast %c5_i32 : i32 to index
    %405 = memref.load %arg0[%404] : memref<8xi32, #tpu.memory_space<smem>>
    %c0_i32_190 = arith.constant 0 : i32
    %406 = arith.cmpi sgt, %405, %c0_i32_190 : i32
    %407 = arith.index_cast %c5_i32 : i32 to index
    %c0_191 = arith.constant 0 : index
    %c0_192 = arith.constant 0 : index
    %408 = vector.load %arg1[%407, %c0_191, %c0_192] : memref<8x2x32xf32, #tpu.memory_space<vmem>>, vector<1x2x32xf32>
    %409 = vector.shape_cast %408 : vector<1x2x32xf32> to vector<2x32xf32>
    %c0_193 = arith.constant 0 : index
    %c0_194 = arith.constant 0 : index
    %410 = vector.load %arg15[%c0_193, %c0_194] : memref<2x32xf32, #tpu.memory_space<vmem>>, vector<2x32xf32>
    %411 = arith.select %406, %409, %410 : vector<2x32xf32>
    %cst_195 = arith.constant dense<0.000000e+00> : vector<2x128xf32>
    %412 = tpu.matmul %403, %7, %cst_195 {dimension_numbers = #tpu.dot_dimension_numbers<[1], [0], [0], [1], [0, 0, 1, 1], [], []>} : vector<2x32xf32>, vector<32x128xf32>, vector<2x128xf32> -> vector<2x128xf32>
    %413 = vector.extract_strided_slice %412 {offsets = [0, 0], sizes = [2, 32], strides = [1, 1]} : vector<2x128xf32> to vector<2x32xf32>
    %414 = vector.extract_strided_slice %412 {offsets = [0, 32], sizes = [2, 96], strides = [1, 1]} : vector<2x128xf32> to vector<2x96xf32>
    %415 = vector.broadcast %10 : vector<1x96xf32> to vector<2x96xf32>
    %416 = arith.addf %414, %415 : vector<2x96xf32>
    %417 = vector.shape_cast %413 : vector<2x32xf32> to vector<2x1x32xf32>
    %418 = vector.broadcast %417 : vector<2x1x32xf32> to vector<2x8x32xf32>
    %419 = arith.addf %418, %5 : vector<2x8x32xf32>
    %420 = math.tanh %419 : vector<2x8x32xf32>
    %421 = vector.shape_cast %6 : vector<1x32xf32> to vector<1x1x32xf32>
    %422 = vector.broadcast %421 : vector<1x1x32xf32> to vector<2x8x32xf32>
    %423 = arith.mulf %420, %422 : vector<2x8x32xf32>
    %cst_196 = arith.constant dense<0.000000e+00> : vector<2x8xf32>
    %424 = vector.multi_reduction <add>, %423, %cst_196 [2] : vector<2x8x32xf32> to vector<2x8xf32>
    %cst_197 = arith.constant dense<0xFF800000> : vector<2xf32>
    %425 = vector.multi_reduction <maximumf>, %424, %cst_197 [1] : vector<2x8xf32> to vector<2xf32>
    %426 = vector.shape_cast %425 : vector<2xf32> to vector<2x1xf32>
    %427 = vector.broadcast %426 : vector<2x1xf32> to vector<2x8xf32>
    %428 = arith.subf %424, %427 : vector<2x8xf32>
    %429 = math.exp %428 : vector<2x8xf32>
    %cst_198 = arith.constant dense<0.000000e+00> : vector<2xf32>
    %430 = vector.multi_reduction <add>, %429, %cst_198 [1] : vector<2x8xf32> to vector<2xf32>
    %431 = vector.shape_cast %430 : vector<2xf32> to vector<2x1xf32>
    %432 = vector.broadcast %431 : vector<2x1xf32> to vector<2x8xf32>
    %433 = arith.divf %429, %432 : vector<2x8xf32>
    %434 = vector.shape_cast %433 : vector<2x8xf32> to vector<2x8x1xf32>
    %435 = vector.broadcast %434 : vector<2x8x1xf32> to vector<2x8x32xf32>
    %436 = arith.mulf %435, %4 : vector<2x8x32xf32>
    %cst_199 = arith.constant dense<0.000000e+00> : vector<2x32xf32>
    %437 = vector.multi_reduction <add>, %436, %cst_199 [1] : vector<2x8x32xf32> to vector<2x32xf32>
    %c0_200 = arith.constant 0 : index
    %c0_201 = arith.constant 0 : index
    %438 = vector.load %arg16[%c0_200, %c0_201] : memref<2x96xf32, #tpu.memory_space<vmem>>, vector<2x32xf32>
    tpu.vector_store %arg16[%c0_200, %c0_201], %411 {strides = array<i32>} : memref<2x96xf32, #tpu.memory_space<vmem>>, vector<2x32xf32>,
    %c0_202 = arith.constant 0 : index
    %c32_203 = arith.constant 32 : index
    %439 = vector.load %arg16[%c0_202, %c32_203] : memref<2x96xf32, #tpu.memory_space<vmem>>, vector<2x32xf32>
    tpu.vector_store %arg16[%c0_202, %c32_203], %437 {strides = array<i32>} : memref<2x96xf32, #tpu.memory_space<vmem>>, vector<2x32xf32>,
    %c0_204 = arith.constant 0 : index
    %c0_205 = arith.constant 0 : index
    %440 = vector.load %arg16[%c0_204, %c0_205] : memref<2x96xf32, #tpu.memory_space<vmem>>, vector<2x64xf32>
    %cst_206 = arith.constant dense<0.000000e+00> : vector<2x96xf32>
    %441 = tpu.matmul %440, %8, %cst_206 {dimension_numbers = #tpu.dot_dimension_numbers<[1], [0], [0], [1], [0, 0, 1, 1], [], []>} : vector<2x64xf32>, vector<64x96xf32>, vector<2x96xf32> -> vector<2x96xf32>
    %442 = vector.broadcast %9 : vector<1x96xf32> to vector<2x96xf32>
    %443 = arith.addf %441, %442 : vector<2x96xf32>
    %444 = vector.extract_strided_slice %443 {offsets = [0, 0], sizes = [2, 32], strides = [1, 1]} : vector<2x96xf32> to vector<2x32xf32>
    %445 = vector.extract_strided_slice %416 {offsets = [0, 0], sizes = [2, 32], strides = [1, 1]} : vector<2x96xf32> to vector<2x32xf32>
    %446 = arith.addf %444, %445 : vector<2x32xf32>
    %447 = arith.negf %446 : vector<2x32xf32>
    %448 = math.exp %447 : vector<2x32xf32>
    %cst_207 = arith.constant 1.000000e+00 : f32
    %449 = vector.broadcast %cst_207 : f32 to vector<2x32xf32>
    %450 = arith.addf %449, %448 : vector<2x32xf32>
    %451 = arith.divf %449, %450 : vector<2x32xf32>
    %452 = vector.extract_strided_slice %443 {offsets = [0, 32], sizes = [2, 32], strides = [1, 1]} : vector<2x96xf32> to vector<2x32xf32>
    %453 = vector.extract_strided_slice %416 {offsets = [0, 32], sizes = [2, 32], strides = [1, 1]} : vector<2x96xf32> to vector<2x32xf32>
    %454 = arith.addf %452, %453 : vector<2x32xf32>
    %455 = arith.negf %454 : vector<2x32xf32>
    %456 = math.exp %455 : vector<2x32xf32>
    %cst_208 = arith.constant 1.000000e+00 : f32
    %457 = vector.broadcast %cst_208 : f32 to vector<2x32xf32>
    %458 = arith.addf %457, %456 : vector<2x32xf32>
    %459 = arith.divf %457, %458 : vector<2x32xf32>
    %460 = vector.extract_strided_slice %443 {offsets = [0, 64], sizes = [2, 32], strides = [1, 1]} : vector<2x96xf32> to vector<2x32xf32>
    %461 = vector.extract_strided_slice %416 {offsets = [0, 64], sizes = [2, 32], strides = [1, 1]} : vector<2x96xf32> to vector<2x32xf32>
    %462 = arith.mulf %451, %461 : vector<2x32xf32>
    %463 = arith.addf %460, %462 : vector<2x32xf32>
    %464 = math.tanh %463 : vector<2x32xf32>
    %cst_209 = arith.constant 1.000000e+00 : f32
    %465 = vector.broadcast %cst_209 : f32 to vector<2x32xf32>
    %466 = arith.subf %465, %459 : vector<2x32xf32>
    %467 = arith.mulf %466, %464 : vector<2x32xf32>
    %468 = arith.mulf %459, %403 : vector<2x32xf32>
    %469 = arith.addf %467, %468 : vector<2x32xf32>
    %c0_210 = arith.constant 0 : index
    %c64_211 = arith.constant 64 : index
    %470 = vector.load %arg16[%c0_210, %c64_211] : memref<2x96xf32, #tpu.memory_space<vmem>>, vector<2x32xf32>
    tpu.vector_store %arg16[%c0_210, %c64_211], %469 {strides = array<i32>} : memref<2x96xf32, #tpu.memory_space<vmem>>, vector<2x32xf32>,
    %c0_212 = arith.constant 0 : index
    %c0_213 = arith.constant 0 : index
    %471 = vector.load %arg16[%c0_212, %c0_213] : memref<2x96xf32, #tpu.memory_space<vmem>>, vector<2x96xf32>
    %cst_214 = arith.constant dense<0.000000e+00> : vector<2x32xf32>
    %472 = tpu.matmul %471, %11, %cst_214 {dimension_numbers = #tpu.dot_dimension_numbers<[1], [0], [0], [1], [0, 0, 1, 1], [], []>} : vector<2x96xf32>, vector<96x32xf32>, vector<2x32xf32> -> vector<2x32xf32>
    %473 = vector.broadcast %12 : vector<1x32xf32> to vector<2x32xf32>
    %474 = arith.addf %472, %473 : vector<2x32xf32>
    %475 = arith.index_cast %c5_i32 : i32 to index
    %c0_215 = arith.constant 0 : index
    %c0_216 = arith.constant 0 : index
    %476 = vector.load %arg12[%475, %c0_215, %c0_216] : memref<8x2x32xf32, #tpu.memory_space<vmem>>, vector<1x2x32xf32>
    %477 = vector.shape_cast %476 : vector<1x2x32xf32> to vector<2x32xf32>
    %478 = vector.shape_cast %474 : vector<2x32xf32> to vector<1x2x32xf32>
    tpu.vector_store %arg12[%475, %c0_215, %c0_216], %478 {strides = array<i32>} : memref<8x2x32xf32, #tpu.memory_space<vmem>>, vector<1x2x32xf32>,
    %c0_217 = arith.constant 0 : index
    %c0_218 = arith.constant 0 : index
    %479 = vector.load %arg14[%c0_217, %c0_218] : memref<2x32xf32, #tpu.memory_space<vmem>>, vector<2x32xf32>
    tpu.vector_store %arg14[%c0_217, %c0_218], %469 {strides = array<i32>} : memref<2x32xf32, #tpu.memory_space<vmem>>, vector<2x32xf32>,
    %c0_219 = arith.constant 0 : index
    %c0_220 = arith.constant 0 : index
    %480 = vector.load %arg15[%c0_219, %c0_220] : memref<2x32xf32, #tpu.memory_space<vmem>>, vector<2x32xf32>
    tpu.vector_store %arg15[%c0_219, %c0_220], %474 {strides = array<i32>} : memref<2x32xf32, #tpu.memory_space<vmem>>, vector<2x32xf32>,
    %c6_i32 = arith.constant 6 : i32
    %c0_221 = arith.constant 0 : index
    %c0_222 = arith.constant 0 : index
    %481 = vector.load %arg14[%c0_221, %c0_222] : memref<2x32xf32, #tpu.memory_space<vmem>>, vector<2x32xf32>
    %482 = arith.index_cast %c6_i32 : i32 to index
    %483 = memref.load %arg0[%482] : memref<8xi32, #tpu.memory_space<smem>>
    %c0_i32_223 = arith.constant 0 : i32
    %484 = arith.cmpi sgt, %483, %c0_i32_223 : i32
    %485 = arith.index_cast %c6_i32 : i32 to index
    %c0_224 = arith.constant 0 : index
    %c0_225 = arith.constant 0 : index
    %486 = vector.load %arg1[%485, %c0_224, %c0_225] : memref<8x2x32xf32, #tpu.memory_space<vmem>>, vector<1x2x32xf32>
    %487 = vector.shape_cast %486 : vector<1x2x32xf32> to vector<2x32xf32>
    %c0_226 = arith.constant 0 : index
    %c0_227 = arith.constant 0 : index
    %488 = vector.load %arg15[%c0_226, %c0_227] : memref<2x32xf32, #tpu.memory_space<vmem>>, vector<2x32xf32>
    %489 = arith.select %484, %487, %488 : vector<2x32xf32>
    %cst_228 = arith.constant dense<0.000000e+00> : vector<2x128xf32>
    %490 = tpu.matmul %481, %7, %cst_228 {dimension_numbers = #tpu.dot_dimension_numbers<[1], [0], [0], [1], [0, 0, 1, 1], [], []>} : vector<2x32xf32>, vector<32x128xf32>, vector<2x128xf32> -> vector<2x128xf32>
    %491 = vector.extract_strided_slice %490 {offsets = [0, 0], sizes = [2, 32], strides = [1, 1]} : vector<2x128xf32> to vector<2x32xf32>
    %492 = vector.extract_strided_slice %490 {offsets = [0, 32], sizes = [2, 96], strides = [1, 1]} : vector<2x128xf32> to vector<2x96xf32>
    %493 = vector.broadcast %10 : vector<1x96xf32> to vector<2x96xf32>
    %494 = arith.addf %492, %493 : vector<2x96xf32>
    %495 = vector.shape_cast %491 : vector<2x32xf32> to vector<2x1x32xf32>
    %496 = vector.broadcast %495 : vector<2x1x32xf32> to vector<2x8x32xf32>
    %497 = arith.addf %496, %5 : vector<2x8x32xf32>
    %498 = math.tanh %497 : vector<2x8x32xf32>
    %499 = vector.shape_cast %6 : vector<1x32xf32> to vector<1x1x32xf32>
    %500 = vector.broadcast %499 : vector<1x1x32xf32> to vector<2x8x32xf32>
    %501 = arith.mulf %498, %500 : vector<2x8x32xf32>
    %cst_229 = arith.constant dense<0.000000e+00> : vector<2x8xf32>
    %502 = vector.multi_reduction <add>, %501, %cst_229 [2] : vector<2x8x32xf32> to vector<2x8xf32>
    %cst_230 = arith.constant dense<0xFF800000> : vector<2xf32>
    %503 = vector.multi_reduction <maximumf>, %502, %cst_230 [1] : vector<2x8xf32> to vector<2xf32>
    %504 = vector.shape_cast %503 : vector<2xf32> to vector<2x1xf32>
    %505 = vector.broadcast %504 : vector<2x1xf32> to vector<2x8xf32>
    %506 = arith.subf %502, %505 : vector<2x8xf32>
    %507 = math.exp %506 : vector<2x8xf32>
    %cst_231 = arith.constant dense<0.000000e+00> : vector<2xf32>
    %508 = vector.multi_reduction <add>, %507, %cst_231 [1] : vector<2x8xf32> to vector<2xf32>
    %509 = vector.shape_cast %508 : vector<2xf32> to vector<2x1xf32>
    %510 = vector.broadcast %509 : vector<2x1xf32> to vector<2x8xf32>
    %511 = arith.divf %507, %510 : vector<2x8xf32>
    %512 = vector.shape_cast %511 : vector<2x8xf32> to vector<2x8x1xf32>
    %513 = vector.broadcast %512 : vector<2x8x1xf32> to vector<2x8x32xf32>
    %514 = arith.mulf %513, %4 : vector<2x8x32xf32>
    %cst_232 = arith.constant dense<0.000000e+00> : vector<2x32xf32>
    %515 = vector.multi_reduction <add>, %514, %cst_232 [1] : vector<2x8x32xf32> to vector<2x32xf32>
    %c0_233 = arith.constant 0 : index
    %c0_234 = arith.constant 0 : index
    %516 = vector.load %arg16[%c0_233, %c0_234] : memref<2x96xf32, #tpu.memory_space<vmem>>, vector<2x32xf32>
    tpu.vector_store %arg16[%c0_233, %c0_234], %489 {strides = array<i32>} : memref<2x96xf32, #tpu.memory_space<vmem>>, vector<2x32xf32>,
    %c0_235 = arith.constant 0 : index
    %c32_236 = arith.constant 32 : index
    %517 = vector.load %arg16[%c0_235, %c32_236] : memref<2x96xf32, #tpu.memory_space<vmem>>, vector<2x32xf32>
    tpu.vector_store %arg16[%c0_235, %c32_236], %515 {strides = array<i32>} : memref<2x96xf32, #tpu.memory_space<vmem>>, vector<2x32xf32>,
    %c0_237 = arith.constant 0 : index
    %c0_238 = arith.constant 0 : index
    %518 = vector.load %arg16[%c0_237, %c0_238] : memref<2x96xf32, #tpu.memory_space<vmem>>, vector<2x64xf32>
    %cst_239 = arith.constant dense<0.000000e+00> : vector<2x96xf32>
    %519 = tpu.matmul %518, %8, %cst_239 {dimension_numbers = #tpu.dot_dimension_numbers<[1], [0], [0], [1], [0, 0, 1, 1], [], []>} : vector<2x64xf32>, vector<64x96xf32>, vector<2x96xf32> -> vector<2x96xf32>
    %520 = vector.broadcast %9 : vector<1x96xf32> to vector<2x96xf32>
    %521 = arith.addf %519, %520 : vector<2x96xf32>
    %522 = vector.extract_strided_slice %521 {offsets = [0, 0], sizes = [2, 32], strides = [1, 1]} : vector<2x96xf32> to vector<2x32xf32>
    %523 = vector.extract_strided_slice %494 {offsets = [0, 0], sizes = [2, 32], strides = [1, 1]} : vector<2x96xf32> to vector<2x32xf32>
    %524 = arith.addf %522, %523 : vector<2x32xf32>
    %525 = arith.negf %524 : vector<2x32xf32>
    %526 = math.exp %525 : vector<2x32xf32>
    %cst_240 = arith.constant 1.000000e+00 : f32
    %527 = vector.broadcast %cst_240 : f32 to vector<2x32xf32>
    %528 = arith.addf %527, %526 : vector<2x32xf32>
    %529 = arith.divf %527, %528 : vector<2x32xf32>
    %530 = vector.extract_strided_slice %521 {offsets = [0, 32], sizes = [2, 32], strides = [1, 1]} : vector<2x96xf32> to vector<2x32xf32>
    %531 = vector.extract_strided_slice %494 {offsets = [0, 32], sizes = [2, 32], strides = [1, 1]} : vector<2x96xf32> to vector<2x32xf32>
    %532 = arith.addf %530, %531 : vector<2x32xf32>
    %533 = arith.negf %532 : vector<2x32xf32>
    %534 = math.exp %533 : vector<2x32xf32>
    %cst_241 = arith.constant 1.000000e+00 : f32
    %535 = vector.broadcast %cst_241 : f32 to vector<2x32xf32>
    %536 = arith.addf %535, %534 : vector<2x32xf32>
    %537 = arith.divf %535, %536 : vector<2x32xf32>
    %538 = vector.extract_strided_slice %521 {offsets = [0, 64], sizes = [2, 32], strides = [1, 1]} : vector<2x96xf32> to vector<2x32xf32>
    %539 = vector.extract_strided_slice %494 {offsets = [0, 64], sizes = [2, 32], strides = [1, 1]} : vector<2x96xf32> to vector<2x32xf32>
    %540 = arith.mulf %529, %539 : vector<2x32xf32>
    %541 = arith.addf %538, %540 : vector<2x32xf32>
    %542 = math.tanh %541 : vector<2x32xf32>
    %cst_242 = arith.constant 1.000000e+00 : f32
    %543 = vector.broadcast %cst_242 : f32 to vector<2x32xf32>
    %544 = arith.subf %543, %537 : vector<2x32xf32>
    %545 = arith.mulf %544, %542 : vector<2x32xf32>
    %546 = arith.mulf %537, %481 : vector<2x32xf32>
    %547 = arith.addf %545, %546 : vector<2x32xf32>
    %c0_243 = arith.constant 0 : index
    %c64_244 = arith.constant 64 : index
    %548 = vector.load %arg16[%c0_243, %c64_244] : memref<2x96xf32, #tpu.memory_space<vmem>>, vector<2x32xf32>
    tpu.vector_store %arg16[%c0_243, %c64_244], %547 {strides = array<i32>} : memref<2x96xf32, #tpu.memory_space<vmem>>, vector<2x32xf32>,
    %c0_245 = arith.constant 0 : index
    %c0_246 = arith.constant 0 : index
    %549 = vector.load %arg16[%c0_245, %c0_246] : memref<2x96xf32, #tpu.memory_space<vmem>>, vector<2x96xf32>
    %cst_247 = arith.constant dense<0.000000e+00> : vector<2x32xf32>
    %550 = tpu.matmul %549, %11, %cst_247 {dimension_numbers = #tpu.dot_dimension_numbers<[1], [0], [0], [1], [0, 0, 1, 1], [], []>} : vector<2x96xf32>, vector<96x32xf32>, vector<2x32xf32> -> vector<2x32xf32>
    %551 = vector.broadcast %12 : vector<1x32xf32> to vector<2x32xf32>
    %552 = arith.addf %550, %551 : vector<2x32xf32>
    %553 = arith.index_cast %c6_i32 : i32 to index
    %c0_248 = arith.constant 0 : index
    %c0_249 = arith.constant 0 : index
    %554 = vector.load %arg12[%553, %c0_248, %c0_249] : memref<8x2x32xf32, #tpu.memory_space<vmem>>, vector<1x2x32xf32>
    %555 = vector.shape_cast %554 : vector<1x2x32xf32> to vector<2x32xf32>
    %556 = vector.shape_cast %552 : vector<2x32xf32> to vector<1x2x32xf32>
    tpu.vector_store %arg12[%553, %c0_248, %c0_249], %556 {strides = array<i32>} : memref<8x2x32xf32, #tpu.memory_space<vmem>>, vector<1x2x32xf32>,
    %c0_250 = arith.constant 0 : index
    %c0_251 = arith.constant 0 : index
    %557 = vector.load %arg14[%c0_250, %c0_251] : memref<2x32xf32, #tpu.memory_space<vmem>>, vector<2x32xf32>
    tpu.vector_store %arg14[%c0_250, %c0_251], %547 {strides = array<i32>} : memref<2x32xf32, #tpu.memory_space<vmem>>, vector<2x32xf32>,
    %c0_252 = arith.constant 0 : index
    %c0_253 = arith.constant 0 : index
    %558 = vector.load %arg15[%c0_252, %c0_253] : memref<2x32xf32, #tpu.memory_space<vmem>>, vector<2x32xf32>
    tpu.vector_store %arg15[%c0_252, %c0_253], %552 {strides = array<i32>} : memref<2x32xf32, #tpu.memory_space<vmem>>, vector<2x32xf32>,
    %c7_i32 = arith.constant 7 : i32
    %c0_254 = arith.constant 0 : index
    %c0_255 = arith.constant 0 : index
    %559 = vector.load %arg14[%c0_254, %c0_255] : memref<2x32xf32, #tpu.memory_space<vmem>>, vector<2x32xf32>
    %560 = arith.index_cast %c7_i32 : i32 to index
    %561 = memref.load %arg0[%560] : memref<8xi32, #tpu.memory_space<smem>>
    %c0_i32_256 = arith.constant 0 : i32
    %562 = arith.cmpi sgt, %561, %c0_i32_256 : i32
    %563 = arith.index_cast %c7_i32 : i32 to index
    %c0_257 = arith.constant 0 : index
    %c0_258 = arith.constant 0 : index
    %564 = vector.load %arg1[%563, %c0_257, %c0_258] : memref<8x2x32xf32, #tpu.memory_space<vmem>>, vector<1x2x32xf32>
    %565 = vector.shape_cast %564 : vector<1x2x32xf32> to vector<2x32xf32>
    %c0_259 = arith.constant 0 : index
    %c0_260 = arith.constant 0 : index
    %566 = vector.load %arg15[%c0_259, %c0_260] : memref<2x32xf32, #tpu.memory_space<vmem>>, vector<2x32xf32>
    %567 = arith.select %562, %565, %566 : vector<2x32xf32>
    %cst_261 = arith.constant dense<0.000000e+00> : vector<2x128xf32>
    %568 = tpu.matmul %559, %7, %cst_261 {dimension_numbers = #tpu.dot_dimension_numbers<[1], [0], [0], [1], [0, 0, 1, 1], [], []>} : vector<2x32xf32>, vector<32x128xf32>, vector<2x128xf32> -> vector<2x128xf32>
    %569 = vector.extract_strided_slice %568 {offsets = [0, 0], sizes = [2, 32], strides = [1, 1]} : vector<2x128xf32> to vector<2x32xf32>
    %570 = vector.extract_strided_slice %568 {offsets = [0, 32], sizes = [2, 96], strides = [1, 1]} : vector<2x128xf32> to vector<2x96xf32>
    %571 = vector.broadcast %10 : vector<1x96xf32> to vector<2x96xf32>
    %572 = arith.addf %570, %571 : vector<2x96xf32>
    %573 = vector.shape_cast %569 : vector<2x32xf32> to vector<2x1x32xf32>
    %574 = vector.broadcast %573 : vector<2x1x32xf32> to vector<2x8x32xf32>
    %575 = arith.addf %574, %5 : vector<2x8x32xf32>
    %576 = math.tanh %575 : vector<2x8x32xf32>
    %577 = vector.shape_cast %6 : vector<1x32xf32> to vector<1x1x32xf32>
    %578 = vector.broadcast %577 : vector<1x1x32xf32> to vector<2x8x32xf32>
    %579 = arith.mulf %576, %578 : vector<2x8x32xf32>
    %cst_262 = arith.constant dense<0.000000e+00> : vector<2x8xf32>
    %580 = vector.multi_reduction <add>, %579, %cst_262 [2] : vector<2x8x32xf32> to vector<2x8xf32>
    %cst_263 = arith.constant dense<0xFF800000> : vector<2xf32>
    %581 = vector.multi_reduction <maximumf>, %580, %cst_263 [1] : vector<2x8xf32> to vector<2xf32>
    %582 = vector.shape_cast %581 : vector<2xf32> to vector<2x1xf32>
    %583 = vector.broadcast %582 : vector<2x1xf32> to vector<2x8xf32>
    %584 = arith.subf %580, %583 : vector<2x8xf32>
    %585 = math.exp %584 : vector<2x8xf32>
    %cst_264 = arith.constant dense<0.000000e+00> : vector<2xf32>
    %586 = vector.multi_reduction <add>, %585, %cst_264 [1] : vector<2x8xf32> to vector<2xf32>
    %587 = vector.shape_cast %586 : vector<2xf32> to vector<2x1xf32>
    %588 = vector.broadcast %587 : vector<2x1xf32> to vector<2x8xf32>
    %589 = arith.divf %585, %588 : vector<2x8xf32>
    %590 = vector.shape_cast %589 : vector<2x8xf32> to vector<2x8x1xf32>
    %591 = vector.broadcast %590 : vector<2x8x1xf32> to vector<2x8x32xf32>
    %592 = arith.mulf %591, %4 : vector<2x8x32xf32>
    %cst_265 = arith.constant dense<0.000000e+00> : vector<2x32xf32>
    %593 = vector.multi_reduction <add>, %592, %cst_265 [1] : vector<2x8x32xf32> to vector<2x32xf32>
    %c0_266 = arith.constant 0 : index
    %c0_267 = arith.constant 0 : index
    %594 = vector.load %arg16[%c0_266, %c0_267] : memref<2x96xf32, #tpu.memory_space<vmem>>, vector<2x32xf32>
    tpu.vector_store %arg16[%c0_266, %c0_267], %567 {strides = array<i32>} : memref<2x96xf32, #tpu.memory_space<vmem>>, vector<2x32xf32>,
    %c0_268 = arith.constant 0 : index
    %c32_269 = arith.constant 32 : index
    %595 = vector.load %arg16[%c0_268, %c32_269] : memref<2x96xf32, #tpu.memory_space<vmem>>, vector<2x32xf32>
    tpu.vector_store %arg16[%c0_268, %c32_269], %593 {strides = array<i32>} : memref<2x96xf32, #tpu.memory_space<vmem>>, vector<2x32xf32>,
    %c0_270 = arith.constant 0 : index
    %c0_271 = arith.constant 0 : index
    %596 = vector.load %arg16[%c0_270, %c0_271] : memref<2x96xf32, #tpu.memory_space<vmem>>, vector<2x64xf32>
    %cst_272 = arith.constant dense<0.000000e+00> : vector<2x96xf32>
    %597 = tpu.matmul %596, %8, %cst_272 {dimension_numbers = #tpu.dot_dimension_numbers<[1], [0], [0], [1], [0, 0, 1, 1], [], []>} : vector<2x64xf32>, vector<64x96xf32>, vector<2x96xf32> -> vector<2x96xf32>
    %598 = vector.broadcast %9 : vector<1x96xf32> to vector<2x96xf32>
    %599 = arith.addf %597, %598 : vector<2x96xf32>
    %600 = vector.extract_strided_slice %599 {offsets = [0, 0], sizes = [2, 32], strides = [1, 1]} : vector<2x96xf32> to vector<2x32xf32>
    %601 = vector.extract_strided_slice %572 {offsets = [0, 0], sizes = [2, 32], strides = [1, 1]} : vector<2x96xf32> to vector<2x32xf32>
    %602 = arith.addf %600, %601 : vector<2x32xf32>
    %603 = arith.negf %602 : vector<2x32xf32>
    %604 = math.exp %603 : vector<2x32xf32>
    %cst_273 = arith.constant 1.000000e+00 : f32
    %605 = vector.broadcast %cst_273 : f32 to vector<2x32xf32>
    %606 = arith.addf %605, %604 : vector<2x32xf32>
    %607 = arith.divf %605, %606 : vector<2x32xf32>
    %608 = vector.extract_strided_slice %599 {offsets = [0, 32], sizes = [2, 32], strides = [1, 1]} : vector<2x96xf32> to vector<2x32xf32>
    %609 = vector.extract_strided_slice %572 {offsets = [0, 32], sizes = [2, 32], strides = [1, 1]} : vector<2x96xf32> to vector<2x32xf32>
    %610 = arith.addf %608, %609 : vector<2x32xf32>
    %611 = arith.negf %610 : vector<2x32xf32>
    %612 = math.exp %611 : vector<2x32xf32>
    %cst_274 = arith.constant 1.000000e+00 : f32
    %613 = vector.broadcast %cst_274 : f32 to vector<2x32xf32>
    %614 = arith.addf %613, %612 : vector<2x32xf32>
    %615 = arith.divf %613, %614 : vector<2x32xf32>
    %616 = vector.extract_strided_slice %599 {offsets = [0, 64], sizes = [2, 32], strides = [1, 1]} : vector<2x96xf32> to vector<2x32xf32>
    %617 = vector.extract_strided_slice %572 {offsets = [0, 64], sizes = [2, 32], strides = [1, 1]} : vector<2x96xf32> to vector<2x32xf32>
    %618 = arith.mulf %607, %617 : vector<2x32xf32>
    %619 = arith.addf %616, %618 : vector<2x32xf32>
    %620 = math.tanh %619 : vector<2x32xf32>
    %cst_275 = arith.constant 1.000000e+00 : f32
    %621 = vector.broadcast %cst_275 : f32 to vector<2x32xf32>
    %622 = arith.subf %621, %615 : vector<2x32xf32>
    %623 = arith.mulf %622, %620 : vector<2x32xf32>
    %624 = arith.mulf %615, %559 : vector<2x32xf32>
    %625 = arith.addf %623, %624 : vector<2x32xf32>
    %c0_276 = arith.constant 0 : index
    %c64_277 = arith.constant 64 : index
    %626 = vector.load %arg16[%c0_276, %c64_277] : memref<2x96xf32, #tpu.memory_space<vmem>>, vector<2x32xf32>
    tpu.vector_store %arg16[%c0_276, %c64_277], %625 {strides = array<i32>} : memref<2x96xf32, #tpu.memory_space<vmem>>, vector<2x32xf32>,
    %c0_278 = arith.constant 0 : index
    %c0_279 = arith.constant 0 : index
    %627 = vector.load %arg16[%c0_278, %c0_279] : memref<2x96xf32, #tpu.memory_space<vmem>>, vector<2x96xf32>
    %cst_280 = arith.constant dense<0.000000e+00> : vector<2x32xf32>
    %628 = tpu.matmul %627, %11, %cst_280 {dimension_numbers = #tpu.dot_dimension_numbers<[1], [0], [0], [1], [0, 0, 1, 1], [], []>} : vector<2x96xf32>, vector<96x32xf32>, vector<2x32xf32> -> vector<2x32xf32>
    %629 = vector.broadcast %12 : vector<1x32xf32> to vector<2x32xf32>
    %630 = arith.addf %628, %629 : vector<2x32xf32>
    %631 = arith.index_cast %c7_i32 : i32 to index
    %c0_281 = arith.constant 0 : index
    %c0_282 = arith.constant 0 : index
    %632 = vector.load %arg12[%631, %c0_281, %c0_282] : memref<8x2x32xf32, #tpu.memory_space<vmem>>, vector<1x2x32xf32>
    %633 = vector.shape_cast %632 : vector<1x2x32xf32> to vector<2x32xf32>
    %634 = vector.shape_cast %630 : vector<2x32xf32> to vector<1x2x32xf32>
    tpu.vector_store %arg12[%631, %c0_281, %c0_282], %634 {strides = array<i32>} : memref<8x2x32xf32, #tpu.memory_space<vmem>>, vector<1x2x32xf32>,
    %c0_283 = arith.constant 0 : index
    %c0_284 = arith.constant 0 : index
    %635 = vector.load %arg14[%c0_283, %c0_284] : memref<2x32xf32, #tpu.memory_space<vmem>>, vector<2x32xf32>
    tpu.vector_store %arg14[%c0_283, %c0_284], %625 {strides = array<i32>} : memref<2x32xf32, #tpu.memory_space<vmem>>, vector<2x32xf32>,
    %c0_285 = arith.constant 0 : index
    %c0_286 = arith.constant 0 : index
    %636 = vector.load %arg15[%c0_285, %c0_286] : memref<2x32xf32, #tpu.memory_space<vmem>>, vector<2x32xf32>
    tpu.vector_store %arg15[%c0_285, %c0_286], %630 {strides = array<i32>} : memref<2x32xf32, #tpu.memory_space<vmem>>, vector<2x32xf32>,
    %c8_i32 = arith.constant 8 : i32
    %c0_287 = arith.constant 0 : index
    %c0_288 = arith.constant 0 : index
    %637 = vector.load %arg14[%c0_287, %c0_288] : memref<2x32xf32, #tpu.memory_space<vmem>>, vector<2x32xf32>
    %c0_289 = arith.constant 0 : index
    %c0_290 = arith.constant 0 : index
    %638 = vector.load %arg13[%c0_289, %c0_290] : memref<2x32xf32, #tpu.memory_space<vmem>>, vector<2x32xf32>
    tpu.vector_store %arg13[%c0_289, %c0_290], %637 {strides = array<i32>} : memref<2x32xf32, #tpu.memory_space<vmem>>, vector<2x32xf32>,
    return
  }
}

</mosaic_0001>

<llo_original>
// kernel: tpu_custom_call.1
$region0: #{tpu_custom_call.1}
  #allocation0 [shape = 'u32[]', space=smem, size = 0x4, offset = 0x4, fixed_abs, tag = 'smem constant byte address 0x4 - core index']
  #allocation1 [shape = 'u32[72,128]{1,0:T(1,128)}', space=vmem, size = 0x9000, scoped, tag = 'internal scratch']
  #allocation2 [shape = 'f32[2,32]{1,0:T(2,128)}', space=vmem, size = 0x400, scoped, tag = 'scratch operand']
  #allocation3 [shape = 'f32[2,32]{1,0:T(2,128)}', space=vmem, size = 0x400, scoped, tag = 'scratch operand']
  #allocation4 [shape = 'f32[2,96]{1,0:T(2,128)}', space=vmem, size = 0x400, scoped, tag = 'scratch operand']
  %s0 = inlined_call_operand.hbm [shape: s32[8], index: 0, kind: input, shape index: {}]
  %s1 = inlined_call_operand.vmem [shape: f32[8,2,32], index: 1, kind: input, shape index: {}]
  %s2 = inlined_call_operand.hbm [shape: f32[2,32], index: 2, kind: input, shape index: {}]
  %s3 = inlined_call_operand.vmem [shape: f32[2,8,32], index: 3, kind: input, shape index: {}]
  %s4 = inlined_call_operand.hbm [shape: f32[2,8,32], index: 4, kind: input, shape index: {}]
  %s5 = inlined_call_operand.vmem [shape: f32[1,32], index: 5, kind: input, shape index: {}]
  %s6 = inlined_call_operand.vmem [shape: f32[32,128], index: 6, kind: input, shape index: {}]
  %s7 = inlined_call_operand.vmem [shape: f32[64,96], index: 7, kind: input, shape index: {}]
  %s8 = inlined_call_operand.vmem [shape: f32[1,96], index: 8, kind: input, shape index: {}]
  %s9 = inlined_call_operand.vmem [shape: f32[1,96], index: 9, kind: input, shape index: {}]
  %s10 = inlined_call_operand.vmem [shape: f32[96,32], index: 10, kind: input, shape index: {}]
  %s11 = inlined_call_operand.vmem [shape: f32[1,32], index: 11, kind: input, shape index: {}]
  %s12 = inlined_call_operand.hbm [shape: f32[8,2,32], index: 12, kind: output, shape index: {0}]
  %s13 = inlined_call_operand.hbm [shape: f32[2,32], index: 13, kind: output, shape index: {1}]
  %14 = xla_tuple %s12, %s13
  %s15 = sld [smem:[#allocation0]]
  $region78: #{tpu_custom_call.1} parent=0
    _
  %s17 = ssub.s32 1, %s15
  %s18 = scalar_select 0, %s17, %s15
  $region1: #{tpu_custom_call.1} parent=0
    #allocation5 [shape = 'u8[512]{0}', space=smem, size = 0x200, scoped, tag = 'input window, operand 0, single buffered']
    #allocation6 [shape = 's32[1]{0}', space=sflag, size = 0x4, scoped, tag = 'scoped memory for tpu_custom_call.1']
    #allocation7 [shape = 's32[1]{0}', space=sflag, size = 0x4, scoped, tag = 'scoped memory for tpu_custom_call.1']
    #allocation8 [shape = 's32[1]{0}', space=sflag, size = 0x4, scoped, tag = 'scoped memory for tpu_custom_call.1']
    #allocation9 [shape = 'u8[1024]{0}', space=vmem, size = 0x400, scoped, tag = 'input window, operand 2, single buffered']
    #allocation10 [shape = 'u8[8192]{0}', space=vmem, size = 0x2000, scoped, tag = 'input window, operand 4, single buffered']
    #allocation11 [shape = 's32[1]{0}', space=sflag, size = 0x4, scoped, tag = 'scoped memory for tpu_custom_call.1']
    #allocation12 [shape = 'u8[8192]{0}', space=vmem, size = 0x2000, scoped, tag = 'output window, operand 0, single buffered']
    #allocation13 [shape = 'u8[1024]{0}', space=vmem, size = 0x400, scoped, tag = 'output window, operand 1, single buffered']
    #allocation14 [shape = 's32[1]{0}', space=sflag, size = 0x4, scoped, tag = 'scoped memory for tpu_custom_call.1']
    %19 = vsyncpa [#allocation8], 0
    %20 = vsyncpa [#allocation6], 0
    %21 = vsyncpa [#allocation11], 0
    %22 = vsyncpa [#allocation7], 0
    %23 = vsyncpa [#allocation14], 0
    // Predicated region
    $region2: #{tpu_custom_call.1} parent=1 // pred_check
      _
    $region3: #{tpu_custom_call.1} parent=1 // pred_check_branch
      %25 = sbr.rel (0) target = $region5
    $region4: #{tpu_custom_call.1} parent=1 // pred_region
      %27 = vsyncadd [#allocation8], 0
      %s29 = sshll.u32 %s0, 4
      %s30 = int_to_ptr.hbm [resolvable:$true] %s29
      %32 = dma.hbm_to_smem %s30, 16, [#allocation5], [#allocation8]
    $region5: #{tpu_custom_call.1} parent=1 // pred_fallthru
      _
    // Predicated region
    $region6: #{tpu_custom_call.1} parent=1 // pred_check
      _
    $region7: #{tpu_custom_call.1} parent=1 // pred_check_branch
      %34 = sbr.rel (0) target = $region9
    $region8: #{tpu_custom_call.1} parent=1 // pred_region
      _
    $region9: #{tpu_custom_call.1} parent=1 // pred_fallthru
      _
    // Predicated region
    $region10: #{tpu_custom_call.1} parent=1 // pred_check
      _
    $region11: #{tpu_custom_call.1} parent=1 // pred_check_branch
      %36 = sbr.rel (0) target = $region13
    $region12: #{tpu_custom_call.1} parent=1 // pred_region
      %38 = vsyncadd [#allocation6], 0
      %s40 = sshll.u32 %s2, 4
      %s41 = int_to_ptr.hbm [resolvable:$true] %s40
      %s42 = sshll.u32 [#allocation9], 4
      %s43 = int_to_ptr.vmem [resolvable:$true] %s42
      %45 = dma.hbm_to_vmem [thread:$0]  %s41, 32, %s43, [#allocation6]
    $region13: #{tpu_custom_call.1} parent=1 // pred_fallthru
      _
    // Predicated region
    $region14: #{tpu_custom_call.1} parent=1 // pred_check
      _
    $region15: #{tpu_custom_call.1} parent=1 // pred_check_branch
      %47 = sbr.rel (0) target = $region17
    $region16: #{tpu_custom_call.1} parent=1 // pred_region
      _
    $region17: #{tpu_custom_call.1} parent=1 // pred_fallthru
      _
    // Predicated region
    $region18: #{tpu_custom_call.1} parent=1 // pred_check
      _
    $region19: #{tpu_custom_call.1} parent=1 // pred_check_branch
      %49 = sbr.rel (0) target = $region21
    $region20: #{tpu_custom_call.1} parent=1 // pred_region
      %51 = vsyncadd [#allocation11], 0
      %s52 = sshll.u32 %s4, 4
      %s53 = int_to_ptr.hbm [resolvable:$true] %s52
      %s54 = sshll.u32 [#allocation10], 4
      %s55 = int_to_ptr.vmem [resolvable:$true] %s54
      %60 = dma.hbm_to_vmem [thread:$0]  %s53, 256, %s55, [#allocation11], 128, 128, 8
    $region21: #{tpu_custom_call.1} parent=1 // pred_fallthru
      _
    // Predicated region
    $region22: #{tpu_custom_call.1} parent=1 // pred_check
      _
    $region23: #{tpu_custom_call.1} parent=1 // pred_check_branch
      %62 = sbr.rel (0) target = $region25
    $region24: #{tpu_custom_call.1} parent=1 // pred_region
      _
    $region25: #{tpu_custom_call.1} parent=1 // pred_fallthru
      _
    // Predicated region
    $region26: #{tpu_custom_call.1} parent=1 // pred_check
      _
    $region27: #{tpu_custom_call.1} parent=1 // pred_check_branch
      %64 = sbr.rel (0) target = $region29
    $region28: #{tpu_custom_call.1} parent=1 // pred_region
      _
    $region29: #{tpu_custom_call.1} parent=1 // pred_fallthru
      _
    // Predicated region
    $region30: #{tpu_custom_call.1} parent=1 // pred_check
      _
    $region31: #{tpu_custom_call.1} parent=1 // pred_check_branch
      %66 = sbr.rel (0) target = $region33
    $region32: #{tpu_custom_call.1} parent=1 // pred_region
      _
    $region33: #{tpu_custom_call.1} parent=1 // pred_fallthru
      _
    // Predicated region
    $region34: #{tpu_custom_call.1} parent=1 // pred_check
      _
    $region35: #{tpu_custom_call.1} parent=1 // pred_check_branch
      %68 = sbr.rel (0) target = $region37
    $region36: #{tpu_custom_call.1} parent=1 // pred_region
      _
    $region37: #{tpu_custom_call.1} parent=1 // pred_fallthru
      _
    // Predicated region
    $region38: #{tpu_custom_call.1} parent=1 // pred_check
      _
    $region39: #{tpu_custom_call.1} parent=1 // pred_check_branch
      %70 = sbr.rel (0) target = $region41
    $region40: #{tpu_custom_call.1} parent=1 // pred_region
      _
    $region41: #{tpu_custom_call.1} parent=1 // pred_fallthru
      _
    // Predicated region
    $region42: #{tpu_custom_call.1} parent=1 // pred_check
      _
    $region43: #{tpu_custom_call.1} parent=1 // pred_check_branch
      %72 = sbr.rel (0) target = $region45
    $region44: #{tpu_custom_call.1} parent=1 // pred_region
      _
    $region45: #{tpu_custom_call.1} parent=1 // pred_fallthru
      _
    // Predicated region
    $region46: #{tpu_custom_call.1} parent=1 // pred_check
      _
    $region47: #{tpu_custom_call.1} parent=1 // pred_check_branch
      %74 = sbr.rel (0) target = $region49
    $region48: #{tpu_custom_call.1} parent=1 // pred_region
      _
    $region49: #{tpu_custom_call.1} parent=1 // pred_fallthru
      _
    // Predicated region
    $region50: #{tpu_custom_call.1} parent=1 // pred_check
      _
    $region51: #{tpu_custom_call.1} parent=1 // pred_check_branch
      %76 = sbr.rel (0) target = $region53
    $region52: #{tpu_custom_call.1} parent=1 // pred_region
      %78 = dma.done [#allocation8], 16
    $region53: #{tpu_custom_call.1} parent=1 // pred_fallthru
      _
    // Predicated region
    $region54: #{tpu_custom_call.1} parent=1 // pred_check
      _
    $region55: #{tpu_custom_call.1} parent=1 // pred_check_branch
      %80 = sbr.rel (0) target = $region57
    $region56: #{tpu_custom_call.1} parent=1 // pred_region
      %82 = dma.done [#allocation6], 32
    $region57: #{tpu_custom_call.1} parent=1 // pred_fallthru
      _
    // Predicated region
    $region58: #{tpu_custom_call.1} parent=1 // pred_check
      _
    $region59: #{tpu_custom_call.1} parent=1 // pred_check_branch
      %84 = sbr.rel (0) target = $region61
    $region60: #{tpu_custom_call.1} parent=1 // pred_region
      %86 = dma.done [#allocation11], 256
    $region61: #{tpu_custom_call.1} parent=1 // pred_fallthru
      _
    %87 = sfence
    %v88 = vld [vmem:[#allocation9] sm:$0x3]
    %vm89 = vcmask 254976
    %90 = vst.msk [vmem:[#allocation2] sm:$0x3] %vm89, %v88
    %91 = vst.msk [vmem:[#allocation3] sm:$0x3] %vm89, 0.0
    %v92 = vld [vmem:[%s3] sm:$0xff]
    %v93 = vld [vmem:[%s3 + $0x8] sm:$0xff]
    %v94 = vld [vmem:[#allocation10] sm:$0xff]
    %v95 = vld [vmem:[#allocation10 + $0x8] sm:$0xff]
    %v96 = vld [vmem:[%s5] sm:$0x1]
    %v97 = vld [vmem:[%s6] sm:$0xff]
    %v98 = vld [vmem:[%s6 + $0x8] sm:$0xff]
    %v99 = vld [vmem:[%s6 + $0x10] sm:$0xff]
    %v100 = vld [vmem:[%s6 + $0x18] sm:$0xff]
    %v101 = vld [vmem:[%s7] sm:$0xff]
    %v102 = vld [vmem:[%s7 + $0x8] sm:$0xff]
    %v103 = vld [vmem:[%s7 + $0x10] sm:$0xff]
    %v104 = vld [vmem:[%s7 + $0x18] sm:$0xff]
    %v105 = vld [vmem:[%s7 + $0x20] sm:$0xff]
    %v106 = vld [vmem:[%s7 + $0x28] sm:$0xff]
    %v107 = vld [vmem:[%s7 + $0x30] sm:$0xff]
    %v108 = vld [vmem:[%s7 + $0x38] sm:$0xff]
    %v109 = vld [vmem:[%s8] sm:$0x1]
    %v110 = vld [vmem:[%s9] sm:$0x1]
    %v111 = vld [vmem:[%s10] sm:$0xff]
    %v112 = vld [vmem:[%s10 + $0x8] sm:$0xff]
    %v113 = vld [vmem:[%s10 + $0x10] sm:$0xff]
    %v114 = vld [vmem:[%s10 + $0x18] sm:$0xff]
    %v115 = vld [vmem:[%s10 + $0x20] sm:$0xff]
    %v116 = vld [vmem:[%s10 + $0x28] sm:$0xff]
    %v117 = vld [vmem:[%s10 + $0x30] sm:$0xff]
    %v118 = vld [vmem:[%s10 + $0x38] sm:$0xff]
    %v119 = vld [vmem:[%s10 + $0x40] sm:$0xff]
    %v120 = vld [vmem:[%s10 + $0x48] sm:$0xff]
    %v121 = vld [vmem:[%s10 + $0x50] sm:$0xff]
    %v122 = vld [vmem:[%s10 + $0x58] sm:$0xff]
    %v123 = vld [vmem:[%s11] sm:$0x1]
    %v124 = vld [vmem:[#allocation2] sm:$0x3]
    %s125 = sld [smem:[#allocation5]]
    %p126 = scmp.gt.s32.totalorder %s125, 0
    %v127 = vld [vmem:[%s1] sm:$0x3]
    %v128 = vld [vmem:[#allocation3] sm:$0x3]
    %s129 = scalar_select %p126, 1, 0
    %v130 = vstv %s129
    %vm131 = vcmp.eq.s32.totalorder %v130, 1
    %v132 = vsel %vm131, %v127, %v128
    %vm133 = vcmask 261120
    %v135 = vsel %vm133, %v124, 0
    %137 = vmatpush.msra.mxu0 0.0
    %138 = vmatpush.msra.mxu0 0.0
    %139 = vmatpush.msra.mxu0 0.0
    %140 = vmatpush.msra.mxu0 0.0
    %141 = vmatpush.msra.mxu0 0.0
    %142 = vmatpush.msra.mxu0 0.0
    %143 = vmatpush.msra.mxu0 0.0
    %144 = vmatpush.msra.mxu0 0.0
    %145 = vmatpush.msra.mxu0 0.0
    %146 = vmatpush.msra.mxu0 0.0
    %147 = vmatpush.msra.mxu0 0.0
    %148 = vmatpush.msra.mxu0 0.0
    %149 = vmatpush.msra.mxu0 %v100
    %150 = vmatpush.msra.mxu0 %v99
    %151 = vmatpush.msra.mxu0 %v98
    %152 = vmatpush.msra.mxu0 %v97
    %153 = vmatmul.f32.gmra.mxu0 %v135
    %v154 = vpop.f32.mrf.mxu0
    %v155 = vadd.f32 0.0, %v154
    %156 = vdwg.mxu0
    %v158 = vperm.slane %v110, 0
    %159 = vrot.lane.b32.xlu0 %v158, 32
    %v160 = vpop.permute.xlu0 %159
    %v162 = vadd.f32 %v155, %v160
    %v164 = vrot.slane %v155, 1
    %v165 = vperm.slane %v155, 0
    %v166 = vperm.slane %v164, 0
    %v169 = vadd.f32 %v165, %v94
    %v170 = vadd.f32 %v166, %v95
    %v171 = vtanh.pop %v169
    %v172 = vtanh.pop %v170
    %v174 = vperm.slane %v96, 0
    %v176 = vmul.f32 %v171, %v174
    %v177 = vmul.f32 %v172, %v174
    %v178 = vsel %vm133, %v176, 0.0
    %179 = vadd.xlane.f32.xlu0 %v178
    %v180 = vpop.xlane.xlu0 %179
    %v181 = vsel %vm133, %v177, 0.0
    %182 = vadd.xlane.f32.xlu0 %v181
    %v183 = vpop.xlane.xlu0 %182
    %v186 = vlaneseq
    %v187 = vand.u32 %v186, 127
    %v188 = vperm.slane %v180, %v187
    %v189 = vperm.slane %v183, %v187
    %vm190 = vcmask 1041409
    %v191 = vsel %vm190, %v189, %v188
    %vm193 = vcmask 58368
    %v194 = vsel %vm193, %v191, -inf
    %195 = vmax.xlane.f32.xlu0 %v194
    %v196 = vpop.xlane.xlu0 %195
    %v198 = vperm.slane %v196, 0
    %v199 = vperm.slane %v196, 1
    %v202 = vsub.f32 %v180, %v198
    %v203 = vsub.f32 %v183, %v199
    %v204 = vmul.f32 %v202, 1.442695
    %v205 = vpow.pop %v204
    %v206 = vmul.f32 %v203, 1.442695
    %v207 = vpow.pop %v206
    %210 = vset.pattern.permute.xlu0 0
    %211 = vperm.xlu0 %210, %v205
    %v212 = vpop.permute.xlu0 %211
    %213 = vset.pattern.permute.xlu0 0
    %214 = vperm.xlu0 %213, %v207
    %v215 = vpop.permute.xlu0 %214
    %v216 = vperm.slane %v212, %v187
    %v217 = vperm.slane %v215, %v187
    %v218 = vsel %vm190, %v217, %v216
    %v220 = vsel %vm193, %v218, 0.0
    %221 = vadd.xlane.f32.xlu0 %v220
    %v222 = vpop.xlane.xlu0 %221
    %v224 = vperm.slane %v222, 0
    %v225 = vperm.slane %v222, 1
    %v228 = vrcp.pop %v224
    %v229 = vmul.f32 %v224, %v228
    %v230 = vsub.f32 1.0, %v229
    %v231 = vmul.f32 %v228, %v230
    %v232 = vadd.f32 %v228, %v231
    %vm233 = vweird.f32 %v224
    %vm234 = vweird.f32 %v228
    %vm235 = vmor %vm233, %vm234
    %v236 = vsel %vm235, %v228, %v232
    %v237 = vand.u32 2147483647, %v224
    %vm238 = vcmp.eq.f32.partialorder %v237, 8.507059e+37
    %v239 = vand.u32 %v224, 2147483648
    %v240 = vor.u32 1.1754944e-38, %v239
    %v241 = vsel %vm238, %v240, %v236
    %v242 = vmul.f32 %v205, %v241
    %v243 = vrcp.pop %v225
    %v244 = vmul.f32 %v225, %v243
    %v245 = vsub.f32 1.0, %v244
    %v246 = vmul.f32 %v243, %v245
    %v247 = vadd.f32 %v243, %v246
    %vm248 = vweird.f32 %v225
    %vm249 = vweird.f32 %v243
    %vm250 = vmor %vm248, %vm249
    %v251 = vsel %vm250, %v243, %v247
    %v252 = vand.u32 2147483647, %v225
    %vm253 = vcmp.eq.f32.partialorder %v252, 8.507059e+37
    %v254 = vand.u32 %v225, 2147483648
    %v255 = vor.u32 1.1754944e-38, %v254
    %v256 = vsel %vm253, %v255, %v251
    %v257 = vmul.f32 %v207, %v256
    %259 = vset.pattern.permute.xlu0 0
    %260 = vperm.xlu0 %259, %v242
    %v261 = vpop.permute.xlu0 %260
    %264 = vset.pattern.permute.xlu0 0
    %265 = vperm.xlu0 %264, %v257
    %v266 = vpop.permute.xlu0 %265
    %v268 = vmul.f32 %v261, %v92
    %v269 = vmul.f32 %v266, %v93
    %v270 = vsel %vm133, %v268, 0.0
    %v271 = vrot.slane %v270, 4
    %v272 = vadd.f32 %v270, %v271
    %v273 = vrot.slane %v272, 2
    %v274 = vadd.f32 %v272, %v273
    %v275 = vrot.slane %v274, 1
    %v276 = vadd.f32 %v274, %v275
    %v277 = vsel %vm133, %v269, 0.0
    %v278 = vrot.slane %v277, 4
    %v279 = vadd.f32 %v277, %v278
    %v280 = vrot.slane %v279, 2
    %v281 = vadd.f32 %v279, %v280
    %v282 = vrot.slane %v281, 1
    %v283 = vadd.f32 %v281, %v282
    %284 = vst.msk [vmem:[#allocation4] sm:$0x3] %vm89, %v132
    %v287 = vsel %vm190, %v283, %v276
    %288 = vrot.lane.b32.xlu0 %v287, 32
    %v289 = vpop.permute.xlu0 %288
    %vm291 = vcmask 517376
    %292 = vst.msk [vmem:[#allocation4] sm:$0x3] %vm291, %v289
    %v293 = vld [vmem:[#allocation4] sm:$0x3]
    %v295 = vperm.slane %v109, 0
    %vm297 = vcmask 523264
    %v299 = vsel %vm297, %v293, 0
    %301 = vmatpush.msra.mxu0 0.0
    %302 = vmatpush.msra.mxu0 0.0
    %303 = vmatpush.msra.mxu0 0.0
    %304 = vmatpush.msra.mxu0 0.0
    %305 = vmatpush.msra.mxu0 0.0
    %306 = vmatpush.msra.mxu0 0.0
    %307 = vmatpush.msra.mxu0 0.0
    %308 = vmatpush.msra.mxu0 0.0
    %309 = vmatpush.msra.mxu0 %v108
    %310 = vmatpush.msra.mxu0 %v107
    %311 = vmatpush.msra.mxu0 %v106
    %312 = vmatpush.msra.mxu0 %v105
    %313 = vmatpush.msra.mxu0 %v104
    %314 = vmatpush.msra.mxu0 %v103
    %315 = vmatpush.msra.mxu0 %v102
    %316 = vmatpush.msra.mxu0 %v101
    %317 = vmatmul.f32.gmra.mxu0 %v299
    %v318 = vpop.f32.mrf.mxu0
    %v319 = vadd.f32 %v295, %v318
    %320 = vdwg.mxu0
    %322 = vrot.lane.b32.xlu0 %v162, 96
    %v323 = vpop.permute.xlu0 %322
    %v325 = vadd.f32 %v319, %v323
    %v326 = vxor.u32 %v325, 2147483648
    %v327 = vmul.f32 %v326, 1.442695
    %v328 = vpow.pop %v327
    %v329 = vadd.f32 %v328, 1.0
    %v330 = vrcp.pop %v329
    %v331 = vmul.f32 %v329, %v330
    %v332 = vsub.f32 1.0, %v331
    %v333 = vmul.f32 %v330, %v332
    %v334 = vadd.f32 %v330, %v333
    %vm335 = vweird.f32 %v329
    %vm336 = vweird.f32 %v330
    %vm337 = vmor %vm335, %vm336
    %v338 = vsel %vm337, %v330, %v334
    %v339 = vand.u32 2147483647, %v329
    %vm340 = vcmp.eq.f32.partialorder %v339, 8.507059e+37
    %v341 = vand.u32 %v329, 2147483648
    %v342 = vor.u32 1.1754944e-38, %v341
    %v343 = vsel %vm340, %v342, %v338
    %v344 = vmul.f32 1.0, %v343
    %345 = vrot.lane.b32.xlu0 %v162, 32
    %v346 = vpop.permute.xlu0 %345
    %v348 = vmul.f32 %v344, %v346
    %350 = vrot.lane.b32.xlu0 %v348, 64
    %v351 = vpop.permute.xlu0 %350
    %v353 = vadd.f32 %v319, %v351
    %v354 = vtanh.pop %v353
    %v355 = vsub.f32 1.0, %v344
    %357 = vrot.lane.b32.xlu0 %v354, 96
    %v358 = vpop.permute.xlu0 %357
    %v360 = vmul.f32 %v355, %v358
    %361 = vrot.lane.b32.xlu0 %v124, 32
    %v362 = vpop.permute.xlu0 %361
    %v364 = vmul.f32 %v344, %v362
    %v365 = vadd.f32 %v360, %v364
    %367 = vrot.lane.b32.xlu0 %v365, 32
    %v368 = vpop.permute.xlu0 %367
    %vm370 = vcmask 779776
    %371 = vst.msk [vmem:[#allocation4] sm:$0x3] %vm370, %v368
    %v372 = vld [vmem:[#allocation4] sm:$0x3]
    %v374 = vperm.slane %v123, 0
    %vm376 = vcmask 785408
    %v378 = vsel %vm376, %v372, 0
    %380 = vmatpush.msra.mxu0 0.0
    %381 = vmatpush.msra.mxu0 0.0
    %382 = vmatpush.msra.mxu0 0.0
    %383 = vmatpush.msra.mxu0 0.0
    %384 = vmatpush.msra.mxu0 %v122
    %385 = vmatpush.msra.mxu0 %v121
    %386 = vmatpush.msra.mxu0 %v120
    %387 = vmatpush.msra.mxu0 %v119
    %388 = vmatpush.msra.mxu0 %v118
    %389 = vmatpush.msra.mxu0 %v117
    %390 = vmatpush.msra.mxu0 %v116
    %391 = vmatpush.msra.mxu0 %v115
    %392 = vmatpush.msra.mxu0 %v114
    %393 = vmatpush.msra.mxu0 %v113
    %394 = vmatpush.msra.mxu0 %v112
    %395 = vmatpush.msra.mxu0 %v111
    %396 = vmatmul.f32.gmra.mxu0 %v378
    %v397 = vpop.f32.mrf.mxu0
    %v398 = vadd.f32 %v374, %v397
    %399 = vdwg.mxu0
    %400 = vst.msk [vmem:[#allocation12] sm:$0x3] %vm89, %v398
    %401 = vrot.lane.b32.xlu0 %v365, 96
    %v402 = vpop.permute.xlu0 %401
    %404 = vst.msk [vmem:[#allocation2] sm:$0x3] %vm89, %v402
    %405 = vst.msk [vmem:[#allocation3] sm:$0x3] %vm89, %v398
    %v406 = vld [vmem:[#allocation2] sm:$0x3]
    %s407 = sld [smem:[#allocation5 + $0x1]]
    %p408 = scmp.gt.s32.totalorder %s407, 0
    %s409 = scalar_lea.vmem %s1, 2
    %v410 = vld [vmem:[%s409] sm:$0x3]
    %v411 = vld [vmem:[#allocation3] sm:$0x3]
    %s412 = scalar_select %p408, 1, 0
    %v413 = vstv %s412
    %vm414 = vcmp.eq.s32.totalorder %v413, 1
    %v415 = vsel %vm414, %v410, %v411
    %v417 = vsel %vm133, %v406, 0
    %419 = vmatpush.msra.mxu0 0.0
    %420 = vmatpush.msra.mxu0 0.0
    %421 = vmatpush.msra.mxu0 0.0
    %422 = vmatpush.msra.mxu0 0.0
    %423 = vmatpush.msra.mxu0 0.0
    %424 = vmatpush.msra.mxu0 0.0
    %425 = vmatpush.msra.mxu0 0.0
    %426 = vmatpush.msra.mxu0 0.0
    %427 = vmatpush.msra.mxu0 0.0
    %428 = vmatpush.msra.mxu0 0.0
    %429 = vmatpush.msra.mxu0 0.0
    %430 = vmatpush.msra.mxu0 0.0
    %431 = vmatpush.msra.mxu0 %v100
    %432 = vmatpush.msra.mxu0 %v99
    %433 = vmatpush.msra.mxu0 %v98
    %434 = vmatpush.msra.mxu0 %v97
    %435 = vmatmul.f32.gmra.mxu0 %v417
    %v436 = vpop.f32.mrf.mxu0
    %v437 = vadd.f32 0.0, %v436
    %438 = vdwg.mxu0
    %v439 = vadd.f32 %v437, %v160
    %v441 = vrot.slane %v437, 1
    %v442 = vperm.slane %v437, 0
    %v443 = vperm.slane %v441, 0
    %v446 = vadd.f32 %v442, %v94
    %v447 = vadd.f32 %v443, %v95
    %v448 = vtanh.pop %v446
    %v449 = vtanh.pop %v447
    %v450 = vmul.f32 %v448, %v174
    %v451 = vmul.f32 %v449, %v174
    %v452 = vsel %vm133, %v450, 0.0
    %453 = vadd.xlane.f32.xlu0 %v452
    %v454 = vpop.xlane.xlu0 %453
    %v455 = vsel %vm133, %v451, 0.0
    %456 = vadd.xlane.f32.xlu0 %v455
    %v457 = vpop.xlane.xlu0 %456
    %v460 = vperm.slane %v454, %v187
    %v461 = vperm.slane %v457, %v187
    %v462 = vsel %vm190, %v461, %v460
    %v464 = vsel %vm193, %v462, -inf
    %465 = vmax.xlane.f32.xlu0 %v464
    %v466 = vpop.xlane.xlu0 %465
    %v468 = vperm.slane %v466, 0
    %v469 = vperm.slane %v466, 1
    %v472 = vsub.f32 %v454, %v468
    %v473 = vsub.f32 %v457, %v469
    %v474 = vmul.f32 %v472, 1.442695
    %v475 = vpow.pop %v474
    %v476 = vmul.f32 %v473, 1.442695
    %v477 = vpow.pop %v476
    %480 = vset.pattern.permute.xlu0 0
    %481 = vperm.xlu0 %480, %v475
    %v482 = vpop.permute.xlu0 %481
    %483 = vset.pattern.permute.xlu0 0
    %484 = vperm.xlu0 %483, %v477
    %v485 = vpop.permute.xlu0 %484
    %v486 = vperm.slane %v482, %v187
    %v487 = vperm.slane %v485, %v187
    %v488 = vsel %vm190, %v487, %v486
    %v490 = vsel %vm193, %v488, 0.0
    %491 = vadd.xlane.f32.xlu0 %v490
    %v492 = vpop.xlane.xlu0 %491
    %v494 = vperm.slane %v492, 0
    %v495 = vperm.slane %v492, 1
    %v498 = vrcp.pop %v494
    %v499 = vmul.f32 %v494, %v498
    %v500 = vsub.f32 1.0, %v499
    %v501 = vmul.f32 %v498, %v500
    %v502 = vadd.f32 %v498, %v501
    %vm503 = vweird.f32 %v494
    %vm504 = vweird.f32 %v498
    %vm505 = vmor %vm503, %vm504
    %v506 = vsel %vm505, %v498, %v502
    %v507 = vand.u32 2147483647, %v494
    %vm508 = vcmp.eq.f32.partialorder %v507, 8.507059e+37
    %v509 = vand.u32 %v494, 2147483648
    %v510 = vor.u32 1.1754944e-38, %v509
    %v511 = vsel %vm508, %v510, %v506
    %v512 = vmul.f32 %v475, %v511
    %v513 = vrcp.pop %v495
    %v514 = vmul.f32 %v495, %v513
    %v515 = vsub.f32 1.0, %v514
    %v516 = vmul.f32 %v513, %v515
    %v517 = vadd.f32 %v513, %v516
    %vm518 = vweird.f32 %v495
    %vm519 = vweird.f32 %v513
    %vm520 = vmor %vm518, %vm519
    %v521 = vsel %vm520, %v513, %v517
    %v522 = vand.u32 2147483647, %v495
    %vm523 = vcmp.eq.f32.partialorder %v522, 8.507059e+37
    %v524 = vand.u32 %v495, 2147483648
    %v525 = vor.u32 1.1754944e-38, %v524
    %v526 = vsel %vm523, %v525, %v521
    %v527 = vmul.f32 %v477, %v526
    %529 = vset.pattern.permute.xlu0 0
    %530 = vperm.xlu0 %529, %v512
    %v531 = vpop.permute.xlu0 %530
    %534 = vset.pattern.permute.xlu0 0
    %535 = vperm.xlu0 %534, %v527
    %v536 = vpop.permute.xlu0 %535
    %v538 = vmul.f32 %v531, %v92
    %v539 = vmul.f32 %v536, %v93
    %v540 = vsel %vm133, %v538, 0.0
    %v541 = vrot.slane %v540, 4
    %v542 = vadd.f32 %v540, %v541
    %v543 = vrot.slane %v542, 2
    %v544 = vadd.f32 %v542, %v543
    %v545 = vrot.slane %v544, 1
    %v546 = vadd.f32 %v544, %v545
    %v547 = vsel %vm133, %v539, 0.0
    %v548 = vrot.slane %v547, 4
    %v549 = vadd.f32 %v547, %v548
    %v550 = vrot.slane %v549, 2
    %v551 = vadd.f32 %v549, %v550
    %v552 = vrot.slane %v551, 1
    %v553 = vadd.f32 %v551, %v552
    %554 = vst.msk [vmem:[#allocation4] sm:$0x3] %vm89, %v415
    %v557 = vsel %vm190, %v553, %v546
    %558 = vrot.lane.b32.xlu0 %v557, 32
    %v559 = vpop.permute.xlu0 %558
    %561 = vst.msk [vmem:[#allocation4] sm:$0x3] %vm291, %v559
    %v562 = vld [vmem:[#allocation4] sm:$0x3]
    %v564 = vsel %vm297, %v562, 0
    %566 = vmatpush.msra.mxu0 0.0
    %567 = vmatpush.msra.mxu0 0.0
    %568 = vmatpush.msra.mxu0 0.0
    %569 = vmatpush.msra.mxu0 0.0
    %570 = vmatpush.msra.mxu0 0.0
    %571 = vmatpush.msra.mxu0 0.0
    %572 = vmatpush.msra.mxu0 0.0
    %573 = vmatpush.msra.mxu0 0.0
    %574 = vmatpush.msra.mxu0 %v108
    %575 = vmatpush.msra.mxu0 %v107
    %576 = vmatpush.msra.mxu0 %v106
    %577 = vmatpush.msra.mxu0 %v105
    %578 = vmatpush.msra.mxu0 %v104
    %579 = vmatpush.msra.mxu0 %v103
    %580 = vmatpush.msra.mxu0 %v102
    %581 = vmatpush.msra.mxu0 %v101
    %582 = vmatmul.f32.gmra.mxu0 %v564
    %v583 = vpop.f32.mrf.mxu0
    %v584 = vadd.f32 %v295, %v583
    %585 = vdwg.mxu0
    %587 = vrot.lane.b32.xlu0 %v439, 96
    %v588 = vpop.permute.xlu0 %587
    %v590 = vadd.f32 %v584, %v588
    %v591 = vxor.u32 %v590, 2147483648
    %v592 = vmul.f32 %v591, 1.442695
    %v593 = vpow.pop %v592
    %v594 = vadd.f32 %v593, 1.0
    %v595 = vrcp.pop %v594
    %v596 = vmul.f32 %v594, %v595
    %v597 = vsub.f32 1.0, %v596
    %v598 = vmul.f32 %v595, %v597
    %v599 = vadd.f32 %v595, %v598
    %vm600 = vweird.f32 %v594
    %vm601 = vweird.f32 %v595
    %vm602 = vmor %vm600, %vm601
    %v603 = vsel %vm602, %v595, %v599
    %v604 = vand.u32 2147483647, %v594
    %vm605 = vcmp.eq.f32.partialorder %v604, 8.507059e+37
    %v606 = vand.u32 %v594, 2147483648
    %v607 = vor.u32 1.1754944e-38, %v606
    %v608 = vsel %vm605, %v607, %v603
    %v609 = vmul.f32 1.0, %v608
    %610 = vrot.lane.b32.xlu0 %v439, 32
    %v611 = vpop.permute.xlu0 %610
    %v613 = vmul.f32 %v609, %v611
    %615 = vrot.lane.b32.xlu0 %v613, 64
    %v616 = vpop.permute.xlu0 %615
    %v618 = vadd.f32 %v584, %v616
    %v619 = vtanh.pop %v618
    %v620 = vsub.f32 1.0, %v609
    %622 = vrot.lane.b32.xlu0 %v619, 96
    %v623 = vpop.permute.xlu0 %622
    %v625 = vmul.f32 %v620, %v623
    %626 = vrot.lane.b32.xlu0 %v406, 32
    %v627 = vpop.permute.xlu0 %626
    %v629 = vmul.f32 %v609, %v627
    %v630 = vadd.f32 %v625, %v629
    %632 = vrot.lane.b32.xlu0 %v630, 32
    %v633 = vpop.permute.xlu0 %632
    %635 = vst.msk [vmem:[#allocation4] sm:$0x3] %vm370, %v633
    %v636 = vld [vmem:[#allocation4] sm:$0x3]
    %v638 = vsel %vm376, %v636, 0
    %640 = vmatpush.msra.mxu0 0.0
    %641 = vmatpush.msra.mxu0 0.0
    %642 = vmatpush.msra.mxu0 0.0
    %643 = vmatpush.msra.mxu0 0.0
    %644 = vmatpush.msra.mxu0 %v122
    %645 = vmatpush.msra.mxu0 %v121
    %646 = vmatpush.msra.mxu0 %v120
    %647 = vmatpush.msra.mxu0 %v119
    %648 = vmatpush.msra.mxu0 %v118
    %649 = vmatpush.msra.mxu0 %v117
    %650 = vmatpush.msra.mxu0 %v116
    %651 = vmatpush.msra.mxu0 %v115
    %652 = vmatpush.msra.mxu0 %v114
    %653 = vmatpush.msra.mxu0 %v113
    %654 = vmatpush.msra.mxu0 %v112
    %655 = vmatpush.msra.mxu0 %v111
    %656 = vmatmul.f32.gmra.mxu0 %v638
    %v657 = vpop.f32.mrf.mxu0
    %v658 = vadd.f32 %v374, %v657
    %659 = vdwg.mxu0
    %s660 = scalar_lea.vmem [#allocation12], 2
    %661 = vst.msk [vmem:[%s660] sm:$0x3] %vm89, %v658
    %662 = vrot.lane.b32.xlu0 %v630, 96
    %v663 = vpop.permute.xlu0 %662
    %665 = vst.msk [vmem:[#allocation2] sm:$0x3] %vm89, %v663
    %666 = vst.msk [vmem:[#allocation3] sm:$0x3] %vm89, %v658
    %v667 = vld [vmem:[#allocation2] sm:$0x3]
    %s668 = sld [smem:[#allocation5 + $0x2]]
    %p669 = scmp.gt.s32.totalorder %s668, 0
    %s670 = scalar_lea.vmem %s1, 4
    %v671 = vld [vmem:[%s670] sm:$0x3]
    %v672 = vld [vmem:[#allocation3] sm:$0x3]
    %s673 = scalar_select %p669, 1, 0
    %v674 = vstv %s673
    %vm675 = vcmp.eq.s32.totalorder %v674, 1
    %v676 = vsel %vm675, %v671, %v672
    %v678 = vsel %vm133, %v667, 0
    %680 = vmatpush.msra.mxu0 0.0
    %681 = vmatpush.msra.mxu0 0.0
    %682 = vmatpush.msra.mxu0 0.0
    %683 = vmatpush.msra.mxu0 0.0
    %684 = vmatpush.msra.mxu0 0.0
    %685 = vmatpush.msra.mxu0 0.0
    %686 = vmatpush.msra.mxu0 0.0
    %687 = vmatpush.msra.mxu0 0.0
    %688 = vmatpush.msra.mxu0 0.0
    %689 = vmatpush.msra.mxu0 0.0
    %690 = vmatpush.msra.mxu0 0.0
    %691 = vmatpush.msra.mxu0 0.0
    %692 = vmatpush.msra.mxu0 %v100
    %693 = vmatpush.msra.mxu0 %v99
    %694 = vmatpush.msra.mxu0 %v98
    %695 = vmatpush.msra.mxu0 %v97
    %696 = vmatmul.f32.gmra.mxu0 %v678
    %v697 = vpop.f32.mrf.mxu0
    %v698 = vadd.f32 0.0, %v697
    %699 = vdwg.mxu0
    %v700 = vadd.f32 %v698, %v160
    %v702 = vrot.slane %v698, 1
    %v703 = vperm.slane %v698, 0
    %v704 = vperm.slane %v702, 0
    %v707 = vadd.f32 %v703, %v94
    %v708 = vadd.f32 %v704, %v95
    %v709 = vtanh.pop %v707
    %v710 = vtanh.pop %v708
    %v711 = vmul.f32 %v709, %v174
    %v712 = vmul.f32 %v710, %v174
    %v713 = vsel %vm133, %v711, 0.0
    %714 = vadd.xlane.f32.xlu0 %v713
    %v715 = vpop.xlane.xlu0 %714
    %v716 = vsel %vm133, %v712, 0.0
    %717 = vadd.xlane.f32.xlu0 %v716
    %v718 = vpop.xlane.xlu0 %717
    %v721 = vperm.slane %v715, %v187
    %v722 = vperm.slane %v718, %v187
    %v723 = vsel %vm190, %v722, %v721
    %v725 = vsel %vm193, %v723, -inf
    %726 = vmax.xlane.f32.xlu0 %v725
    %v727 = vpop.xlane.xlu0 %726
    %v729 = vperm.slane %v727, 0
    %v730 = vperm.slane %v727, 1
    %v733 = vsub.f32 %v715, %v729
    %v734 = vsub.f32 %v718, %v730
    %v735 = vmul.f32 %v733, 1.442695
    %v736 = vpow.pop %v735
    %v737 = vmul.f32 %v734, 1.442695
    %v738 = vpow.pop %v737
    %741 = vset.pattern.permute.xlu0 0
    %742 = vperm.xlu0 %741, %v736
    %v743 = vpop.permute.xlu0 %742
    %744 = vset.pattern.permute.xlu0 0
    %745 = vperm.xlu0 %744, %v738
    %v746 = vpop.permute.xlu0 %745
    %v747 = vperm.slane %v743, %v187
    %v748 = vperm.slane %v746, %v187
    %v749 = vsel %vm190, %v748, %v747
    %v751 = vsel %vm193, %v749, 0.0
    %752 = vadd.xlane.f32.xlu0 %v751
    %v753 = vpop.xlane.xlu0 %752
    %v755 = vperm.slane %v753, 0
    %v756 = vperm.slane %v753, 1
    %v759 = vrcp.pop %v755
    %v760 = vmul.f32 %v755, %v759
    %v761 = vsub.f32 1.0, %v760
    %v762 = vmul.f32 %v759, %v761
    %v763 = vadd.f32 %v759, %v762
    %vm764 = vweird.f32 %v755
    %vm765 = vweird.f32 %v759
    %vm766 = vmor %vm764, %vm765
    %v767 = vsel %vm766, %v759, %v763
    %v768 = vand.u32 2147483647, %v755
    %vm769 = vcmp.eq.f32.partialorder %v768, 8.507059e+37
    %v770 = vand.u32 %v755, 2147483648
    %v771 = vor.u32 1.1754944e-38, %v770
    %v772 = vsel %vm769, %v771, %v767
    %v773 = vmul.f32 %v736, %v772
    %v774 = vrcp.pop %v756
    %v775 = vmul.f32 %v756, %v774
    %v776 = vsub.f32 1.0, %v775
    %v777 = vmul.f32 %v774, %v776
    %v778 = vadd.f32 %v774, %v777
    %vm779 = vweird.f32 %v756
    %vm780 = vweird.f32 %v774
    %vm781 = vmor %vm779, %vm780
    %v782 = vsel %vm781, %v774, %v778
    %v783 = vand.u32 2147483647, %v756
    %vm784 = vcmp.eq.f32.partialorder %v783, 8.507059e+37
    %v785 = vand.u32 %v756, 2147483648
    %v786 = vor.u32 1.1754944e-38, %v785
    %v787 = vsel %vm784, %v786, %v782
    %v788 = vmul.f32 %v738, %v787
    %790 = vset.pattern.permute.xlu0 0
    %791 = vperm.xlu0 %790, %v773
    %v792 = vpop.permute.xlu0 %791
    %795 = vset.pattern.permute.xlu0 0
    %796 = vperm.xlu0 %795, %v788
    %v797 = vpop.permute.xlu0 %796
    %v799 = vmul.f32 %v792, %v92
    %v800 = vmul.f32 %v797, %v93
    %v801 = vsel %vm133, %v799, 0.0
    %v802 = vrot.slane %v801, 4
    %v803 = vadd.f32 %v801, %v802
    %v804 = vrot.slane %v803, 2
    %v805 = vadd.f32 %v803, %v804
    %v806 = vrot.slane %v805, 1
    %v807 = vadd.f32 %v805, %v806
    %v808 = vsel %vm133, %v800, 0.0
    %v809 = vrot.slane %v808, 4
    %v810 = vadd.f32 %v808, %v809
    %v811 = vrot.slane %v810, 2
    %v812 = vadd.f32 %v810, %v811
    %v813 = vrot.slane %v812, 1
    %v814 = vadd.f32 %v812, %v813
    %815 = vst.msk [vmem:[#allocation4] sm:$0x3] %vm89, %v676
    %v818 = vsel %vm190, %v814, %v807
    %819 = vrot.lane.b32.xlu0 %v818, 32
    %v820 = vpop.permute.xlu0 %819
    %822 = vst.msk [vmem:[#allocation4] sm:$0x3] %vm291, %v820
    %v823 = vld [vmem:[#allocation4] sm:$0x3]
    %v825 = vsel %vm297, %v823, 0
    %827 = vmatpush.msra.mxu0 0.0
    %828 = vmatpush.msra.mxu0 0.0
    %829 = vmatpush.msra.mxu0 0.0
    %830 = vmatpush.msra.mxu0 0.0
    %831 = vmatpush.msra.mxu0 0.0
    %832 = vmatpush.msra.mxu0 0.0
    %833 = vmatpush.msra.mxu0 0.0
    %834 = vmatpush.msra.mxu0 0.0
    %835 = vmatpush.msra.mxu0 %v108
    %836 = vmatpush.msra.mxu0 %v107
    %837 = vmatpush.msra.mxu0 %v106
    %838 = vmatpush.msra.mxu0 %v105
    %839 = vmatpush.msra.mxu0 %v104
    %840 = vmatpush.msra.mxu0 %v103
    %841 = vmatpush.msra.mxu0 %v102
    %842 = vmatpush.msra.mxu0 %v101
    %843 = vmatmul.f32.gmra.mxu0 %v825
    %v844 = vpop.f32.mrf.mxu0
    %v845 = vadd.f32 %v295, %v844
    %846 = vdwg.mxu0
    %848 = vrot.lane.b32.xlu0 %v700, 96
    %v849 = vpop.permute.xlu0 %848
    %v851 = vadd.f32 %v845, %v849
    %v852 = vxor.u32 %v851, 2147483648
    %v853 = vmul.f32 %v852, 1.442695
    %v854 = vpow.pop %v853
    %v855 = vadd.f32 %v854, 1.0
    %v856 = vrcp.pop %v855
    %v857 = vmul.f32 %v855, %v856
    %v858 = vsub.f32 1.0, %v857
    %v859 = vmul.f32 %v856, %v858
    %v860 = vadd.f32 %v856, %v859
    %vm861 = vweird.f32 %v855
    %vm862 = vweird.f32 %v856
    %vm863 = vmor %vm861, %vm862
    %v864 = vsel %vm863, %v856, %v860
    %v865 = vand.u32 2147483647, %v855
    %vm866 = vcmp.eq.f32.partialorder %v865, 8.507059e+37
    %v867 = vand.u32 %v855, 2147483648
    %v868 = vor.u32 1.1754944e-38, %v867
    %v869 = vsel %vm866, %v868, %v864
    %v870 = vmul.f32 1.0, %v869
    %871 = vrot.lane.b32.xlu0 %v700, 32
    %v872 = vpop.permute.xlu0 %871
    %v874 = vmul.f32 %v870, %v872
    %876 = vrot.lane.b32.xlu0 %v874, 64
    %v877 = vpop.permute.xlu0 %876
    %v879 = vadd.f32 %v845, %v877
    %v880 = vtanh.pop %v879
    %v881 = vsub.f32 1.0, %v870
    %883 = vrot.lane.b32.xlu0 %v880, 96
    %v884 = vpop.permute.xlu0 %883
    %v886 = vmul.f32 %v881, %v884
    %887 = vrot.lane.b32.xlu0 %v667, 32
    %v888 = vpop.permute.xlu0 %887
    %v890 = vmul.f32 %v870, %v888
    %v891 = vadd.f32 %v886, %v890
    %893 = vrot.lane.b32.xlu0 %v891, 32
    %v894 = vpop.permute.xlu0 %893
    %896 = vst.msk [vmem:[#allocation4] sm:$0x3] %vm370, %v894
    %v897 = vld [vmem:[#allocation4] sm:$0x3]
    %v899 = vsel %vm376, %v897, 0
    %901 = vmatpush.msra.mxu0 0.0
    %902 = vmatpush.msra.mxu0 0.0
    %903 = vmatpush.msra.mxu0 0.0
    %904 = vmatpush.msra.mxu0 0.0
    %905 = vmatpush.msra.mxu0 %v122
    %906 = vmatpush.msra.mxu0 %v121
    %907 = vmatpush.msra.mxu0 %v120
    %908 = vmatpush.msra.mxu0 %v119
    %909 = vmatpush.msra.mxu0 %v118
    %910 = vmatpush.msra.mxu0 %v117
    %911 = vmatpush.msra.mxu0 %v116
    %912 = vmatpush.msra.mxu0 %v115
    %913 = vmatpush.msra.mxu0 %v114
    %914 = vmatpush.msra.mxu0 %v113
    %915 = vmatpush.msra.mxu0 %v112
    %916 = vmatpush.msra.mxu0 %v111
    %917 = vmatmul.f32.gmra.mxu0 %v899
    %v918 = vpop.f32.mrf.mxu0
    %v919 = vadd.f32 %v374, %v918
    %920 = vdwg.mxu0
    %s921 = scalar_lea.vmem [#allocation12], 4
    %922 = vst.msk [vmem:[%s921] sm:$0x3] %vm89, %v919
    %923 = vrot.lane.b32.xlu0 %v891, 96
    %v924 = vpop.permute.xlu0 %923
    %926 = vst.msk [vmem:[#allocation2] sm:$0x3] %vm89, %v924
    %927 = vst.msk [vmem:[#allocation3] sm:$0x3] %vm89, %v919
    %v928 = vld [vmem:[#allocation2] sm:$0x3]
    %s929 = sld [smem:[#allocation5 + $0x3]]
    %p930 = scmp.gt.s32.totalorder %s929, 0
    %s931 = scalar_lea.vmem %s1, 6
    %v932 = vld [vmem:[%s931] sm:$0x3]
    %v933 = vld [vmem:[#allocation3] sm:$0x3]
    %s934 = scalar_select %p930, 1, 0
    %v935 = vstv %s934
    %vm936 = vcmp.eq.s32.totalorder %v935, 1
    %v937 = vsel %vm936, %v932, %v933
    %v939 = vsel %vm133, %v928, 0
    %941 = vmatpush.msra.mxu0 0.0
    %942 = vmatpush.msra.mxu0 0.0
    %943 = vmatpush.msra.mxu0 0.0
    %944 = vmatpush.msra.mxu0 0.0
    %945 = vmatpush.msra.mxu0 0.0
    %946 = vmatpush.msra.mxu0 0.0
    %947 = vmatpush.msra.mxu0 0.0
    %948 = vmatpush.msra.mxu0 0.0
    %949 = vmatpush.msra.mxu0 0.0
    %950 = vmatpush.msra.mxu0 0.0
    %951 = vmatpush.msra.mxu0 0.0
    %952 = vmatpush.msra.mxu0 0.0
    %953 = vmatpush.msra.mxu0 %v100
    %954 = vmatpush.msra.mxu0 %v99
    %955 = vmatpush.msra.mxu0 %v98
    %956 = vmatpush.msra.mxu0 %v97
    %957 = vmatmul.f32.gmra.mxu0 %v939
    %v958 = vpop.f32.mrf.mxu0
    %v959 = vadd.f32 0.0, %v958
    %960 = vdwg.mxu0
    %v961 = vadd.f32 %v959, %v160
    %v963 = vrot.slane %v959, 1
    %v964 = vperm.slane %v959, 0
    %v965 = vperm.slane %v963, 0
    %v968 = vadd.f32 %v964, %v94
    %v969 = vadd.f32 %v965, %v95
    %v970 = vtanh.pop %v968
    %v971 = vtanh.pop %v969
    %v972 = vmul.f32 %v970, %v174
    %v973 = vmul.f32 %v971, %v174
    %v974 = vsel %vm133, %v972, 0.0
    %975 = vadd.xlane.f32.xlu0 %v974
    %v976 = vpop.xlane.xlu0 %975
    %v977 = vsel %vm133, %v973, 0.0
    %978 = vadd.xlane.f32.xlu0 %v977
    %v979 = vpop.xlane.xlu0 %978
    %v982 = vperm.slane %v976, %v187
    %v983 = vperm.slane %v979, %v187
    %v984 = vsel %vm190, %v983, %v982
    %v986 = vsel %vm193, %v984, -inf
    %987 = vmax.xlane.f32.xlu0 %v986
    %v988 = vpop.xlane.xlu0 %987
    %v990 = vperm.slane %v988, 0
    %v991 = vperm.slane %v988, 1
    %v994 = vsub.f32 %v976, %v990
    %v995 = vsub.f32 %v979, %v991
    %v996 = vmul.f32 %v994, 1.442695
    %v997 = vpow.pop %v996
    %v998 = vmul.f32 %v995, 1.442695
    %v999 = vpow.pop %v998
    %1002 = vset.pattern.permute.xlu0 0
    %1003 = vperm.xlu0 %1002, %v997
    %v1004 = vpop.permute.xlu0 %1003
    %1005 = vset.pattern.permute.xlu0 0
    %1006 = vperm.xlu0 %1005, %v999
    %v1007 = vpop.permute.xlu0 %1006
    %v1008 = vperm.slane %v1004, %v187
    %v1009 = vperm.slane %v1007, %v187
    %v1010 = vsel %vm190, %v1009, %v1008
    %v1012 = vsel %vm193, %v1010, 0.0
    %1013 = vadd.xlane.f32.xlu0 %v1012
    %v1014 = vpop.xlane.xlu0 %1013
    %v1016 = vperm.slane %v1014, 0
    %v1017 = vperm.slane %v1014, 1
    %v1020 = vrcp.pop %v1016
    %v1021 = vmul.f32 %v1016, %v1020
    %v1022 = vsub.f32 1.0, %v1021
    %v1023 = vmul.f32 %v1020, %v1022
    %v1024 = vadd.f32 %v1020, %v1023
    %vm1025 = vweird.f32 %v1016
    %vm1026 = vweird.f32 %v1020
    %vm1027 = vmor %vm1025, %vm1026
    %v1028 = vsel %vm1027, %v1020, %v1024
    %v1029 = vand.u32 2147483647, %v1016
    %vm1030 = vcmp.eq.f32.partialorder %v1029, 8.507059e+37
    %v1031 = vand.u32 %v1016, 2147483648
    %v1032 = vor.u32 1.1754944e-38, %v1031
    %v1033 = vsel %vm1030, %v1032, %v1028
    %v1034 = vmul.f32 %v997, %v1033
    %v1035 = vrcp.pop %v1017
    %v1036 = vmul.f32 %v1017, %v1035
    %v1037 = vsub.f32 1.0, %v1036
    %v1038 = vmul.f32 %v1035, %v1037
    %v1039 = vadd.f32 %v1035, %v1038
    %vm1040 = vweird.f32 %v1017
    %vm1041 = vweird.f32 %v1035
    %vm1042 = vmor %vm1040, %vm1041
    %v1043 = vsel %vm1042, %v1035, %v1039
    %v1044 = vand.u32 2147483647, %v1017
    %vm1045 = vcmp.eq.f32.partialorder %v1044, 8.507059e+37
    %v1046 = vand.u32 %v1017, 2147483648
    %v1047 = vor.u32 1.1754944e-38, %v1046
    %v1048 = vsel %vm1045, %v1047, %v1043
    %v1049 = vmul.f32 %v999, %v1048
    %1051 = vset.pattern.permute.xlu0 0
    %1052 = vperm.xlu0 %1051, %v1034
    %v1053 = vpop.permute.xlu0 %1052
    %1056 = vset.pattern.permute.xlu0 0
    %1057 = vperm.xlu0 %1056, %v1049
    %v1058 = vpop.permute.xlu0 %1057
    %v1060 = vmul.f32 %v1053, %v92
    %v1061 = vmul.f32 %v1058, %v93
    %v1062 = vsel %vm133, %v1060, 0.0
    %v1063 = vrot.slane %v1062, 4
    %v1064 = vadd.f32 %v1062, %v1063
    %v1065 = vrot.slane %v1064, 2
    %v1066 = vadd.f32 %v1064, %v1065
    %v1067 = vrot.slane %v1066, 1
    %v1068 = vadd.f32 %v1066, %v1067
    %v1069 = vsel %vm133, %v1061, 0.0
    %v1070 = vrot.slane %v1069, 4
    %v1071 = vadd.f32 %v1069, %v1070
    %v1072 = vrot.slane %v1071, 2
    %v1073 = vadd.f32 %v1071, %v1072
    %v1074 = vrot.slane %v1073, 1
    %v1075 = vadd.f32 %v1073, %v1074
    %1076 = vst.msk [vmem:[#allocation4] sm:$0x3] %vm89, %v937
    %v1079 = vsel %vm190, %v1075, %v1068
    %1080 = vrot.lane.b32.xlu0 %v1079, 32
    %v1081 = vpop.permute.xlu0 %1080
    %1083 = vst.msk [vmem:[#allocation4] sm:$0x3] %vm291, %v1081
    %v1084 = vld [vmem:[#allocation4] sm:$0x3]
    %v1086 = vsel %vm297, %v1084, 0
    %1088 = vmatpush.msra.mxu0 0.0
    %1089 = vmatpush.msra.mxu0 0.0
    %1090 = vmatpush.msra.mxu0 0.0
    %1091 = vmatpush.msra.mxu0 0.0
    %1092 = vmatpush.msra.mxu0 0.0
    %1093 = vmatpush.msra.mxu0 0.0
    %1094 = vmatpush.msra.mxu0 0.0
    %1095 = vmatpush.msra.mxu0 0.0
    %1096 = vmatpush.msra.mxu0 %v108
    %1097 = vmatpush.msra.mxu0 %v107
    %1098 = vmatpush.msra.mxu0 %v106
    %1099 = vmatpush.msra.mxu0 %v105
    %1100 = vmatpush.msra.mxu0 %v104
    %1101 = vmatpush.msra.mxu0 %v103
    %1102 = vmatpush.msra.mxu0 %v102
    %1103 = vmatpush.msra.mxu0 %v101
    %1104 = vmatmul.f32.gmra.mxu0 %v1086
    %v1105 = vpop.f32.mrf.mxu0
    %v1106 = vadd.f32 %v295, %v1105
    %1107 = vdwg.mxu0
    %1109 = vrot.lane.b32.xlu0 %v961, 96
    %v1110 = vpop.permute.xlu0 %1109
    %v1112 = vadd.f32 %v1106, %v1110
    %v1113 = vxor.u32 %v1112, 2147483648
    %v1114 = vmul.f32 %v1113, 1.442695
    %v1115 = vpow.pop %v1114
    %v1116 = vadd.f32 %v1115, 1.0
    %v1117 = vrcp.pop %v1116
    %v1118 = vmul.f32 %v1116, %v1117
    %v1119 = vsub.f32 1.0, %v1118
    %v1120 = vmul.f32 %v1117, %v1119
    %v1121 = vadd.f32 %v1117, %v1120
    %vm1122 = vweird.f32 %v1116
    %vm1123 = vweird.f32 %v1117
    %vm1124 = vmor %vm1122, %vm1123
    %v1125 = vsel %vm1124, %v1117, %v1121
    %v1126 = vand.u32 2147483647, %v1116
    %vm1127 = vcmp.eq.f32.partialorder %v1126, 8.507059e+37
    %v1128 = vand.u32 %v1116, 2147483648
    %v1129 = vor.u32 1.1754944e-38, %v1128
    %v1130 = vsel %vm1127, %v1129, %v1125
    %v1131 = vmul.f32 1.0, %v1130
    %1132 = vrot.lane.b32.xlu0 %v961, 32
    %v1133 = vpop.permute.xlu0 %1132
    %v1135 = vmul.f32 %v1131, %v1133
    %1137 = vrot.lane.b32.xlu0 %v1135, 64
    %v1138 = vpop.permute.xlu0 %1137
    %v1140 = vadd.f32 %v1106, %v1138
    %v1141 = vtanh.pop %v1140
    %v1142 = vsub.f32 1.0, %v1131
    %1144 = vrot.lane.b32.xlu0 %v1141, 96
    %v1145 = vpop.permute.xlu0 %1144
    %v1147 = vmul.f32 %v1142, %v1145
    %1148 = vrot.lane.b32.xlu0 %v928, 32
    %v1149 = vpop.permute.xlu0 %1148
    %v1151 = vmul.f32 %v1131, %v1149
    %v1152 = vadd.f32 %v1147, %v1151
    %1154 = vrot.lane.b32.xlu0 %v1152, 32
    %v1155 = vpop.permute.xlu0 %1154
    %1157 = vst.msk [vmem:[#allocation4] sm:$0x3] %vm370, %v1155
    %v1158 = vld [vmem:[#allocation4] sm:$0x3]
    %v1160 = vsel %vm376, %v1158, 0
    %1162 = vmatpush.msra.mxu0 0.0
    %1163 = vmatpush.msra.mxu0 0.0
    %1164 = vmatpush.msra.mxu0 0.0
    %1165 = vmatpush.msra.mxu0 0.0
    %1166 = vmatpush.msra.mxu0 %v122
    %1167 = vmatpush.msra.mxu0 %v121
    %1168 = vmatpush.msra.mxu0 %v120
    %1169 = vmatpush.msra.mxu0 %v119
    %1170 = vmatpush.msra.mxu0 %v118
    %1171 = vmatpush.msra.mxu0 %v117
    %1172 = vmatpush.msra.mxu0 %v116
    %1173 = vmatpush.msra.mxu0 %v115
    %1174 = vmatpush.msra.mxu0 %v114
    %1175 = vmatpush.msra.mxu0 %v113
    %1176 = vmatpush.msra.mxu0 %v112
    %1177 = vmatpush.msra.mxu0 %v111
    %1178 = vmatmul.f32.gmra.mxu0 %v1160
    %v1179 = vpop.f32.mrf.mxu0
    %v1180 = vadd.f32 %v374, %v1179
    %1181 = vdwg.mxu0
    %s1182 = scalar_lea.vmem [#allocation12], 6
    %1183 = vst.msk [vmem:[%s1182] sm:$0x3] %vm89, %v1180
    %1184 = vrot.lane.b32.xlu0 %v1152, 96
    %v1185 = vpop.permute.xlu0 %1184
    %1187 = vst.msk [vmem:[#allocation2] sm:$0x3] %vm89, %v1185
    %1188 = vst.msk [vmem:[#allocation3] sm:$0x3] %vm89, %v1180
    %v1189 = vld [vmem:[#allocation2] sm:$0x3]
    %s1190 = sld [smem:[#allocation5 + $0x4]]
    %p1191 = scmp.gt.s32.totalorder %s1190, 0
    %s1192 = scalar_lea.vmem %s1, 8
    %v1193 = vld [vmem:[%s1192] sm:$0x3]
    %v1194 = vld [vmem:[#allocation3] sm:$0x3]
    %s1195 = scalar_select %p1191, 1, 0
    %v1196 = vstv %s1195
    %vm1197 = vcmp.eq.s32.totalorder %v1196, 1
    %v1198 = vsel %vm1197, %v1193, %v1194
    %v1200 = vsel %vm133, %v1189, 0
    %1202 = vmatpush.msra.mxu0 0.0
    %1203 = vmatpush.msra.mxu0 0.0
    %1204 = vmatpush.msra.mxu0 0.0
    %1205 = vmatpush.msra.mxu0 0.0
    %1206 = vmatpush.msra.mxu0 0.0
    %1207 = vmatpush.msra.mxu0 0.0
    %1208 = vmatpush.msra.mxu0 0.0
    %1209 = vmatpush.msra.mxu0 0.0
    %1210 = vmatpush.msra.mxu0 0.0
    %1211 = vmatpush.msra.mxu0 0.0
    %1212 = vmatpush.msra.mxu0 0.0
    %1213 = vmatpush.msra.mxu0 0.0
    %1214 = vmatpush.msra.mxu0 %v100
    %1215 = vmatpush.msra.mxu0 %v99
    %1216 = vmatpush.msra.mxu0 %v98
    %1217 = vmatpush.msra.mxu0 %v97
    %1218 = vmatmul.f32.gmra.mxu0 %v1200
    %v1219 = vpop.f32.mrf.mxu0
    %v1220 = vadd.f32 0.0, %v1219
    %1221 = vdwg.mxu0
    %v1222 = vadd.f32 %v1220, %v160
    %v1224 = vrot.slane %v1220, 1
    %v1225 = vperm.slane %v1220, 0
    %v1226 = vperm.slane %v1224, 0
    %v1229 = vadd.f32 %v1225, %v94
    %v1230 = vadd.f32 %v1226, %v95
    %v1231 = vtanh.pop %v1229
    %v1232 = vtanh.pop %v1230
    %v1233 = vmul.f32 %v1231, %v174
    %v1234 = vmul.f32 %v1232, %v174
    %v1235 = vsel %vm133, %v1233, 0.0
    %1236 = vadd.xlane.f32.xlu0 %v1235
    %v1237 = vpop.xlane.xlu0 %1236
    %v1238 = vsel %vm133, %v1234, 0.0
    %1239 = vadd.xlane.f32.xlu0 %v1238
    %v1240 = vpop.xlane.xlu0 %1239
    %v1243 = vperm.slane %v1237, %v187
    %v1244 = vperm.slane %v1240, %v187
    %v1245 = vsel %vm190, %v1244, %v1243
    %v1247 = vsel %vm193, %v1245, -inf
    %1248 = vmax.xlane.f32.xlu0 %v1247
    %v1249 = vpop.xlane.xlu0 %1248
    %v1251 = vperm.slane %v1249, 0
    %v1252 = vperm.slane %v1249, 1
    %v1255 = vsub.f32 %v1237, %v1251
    %v1256 = vsub.f32 %v1240, %v1252
    %v1257 = vmul.f32 %v1255, 1.442695
    %v1258 = vpow.pop %v1257
    %v1259 = vmul.f32 %v1256, 1.442695
    %v1260 = vpow.pop %v1259
    %1263 = vset.pattern.permute.xlu0 0
    %1264 = vperm.xlu0 %1263, %v1258
    %v1265 = vpop.permute.xlu0 %1264
    %1266 = vset.pattern.permute.xlu0 0
    %1267 = vperm.xlu0 %1266, %v1260
    %v1268 = vpop.permute.xlu0 %1267
    %v1269 = vperm.slane %v1265, %v187
    %v1270 = vperm.slane %v1268, %v187
    %v1271 = vsel %vm190, %v1270, %v1269
    %v1273 = vsel %vm193, %v1271, 0.0
    %1274 = vadd.xlane.f32.xlu0 %v1273
    %v1275 = vpop.xlane.xlu0 %1274
    %v1277 = vperm.slane %v1275, 0
    %v1278 = vperm.slane %v1275, 1
    %v1281 = vrcp.pop %v1277
    %v1282 = vmul.f32 %v1277, %v1281
    %v1283 = vsub.f32 1.0, %v1282
    %v1284 = vmul.f32 %v1281, %v1283
    %v1285 = vadd.f32 %v1281, %v1284
    %vm1286 = vweird.f32 %v1277
    %vm1287 = vweird.f32 %v1281
    %vm1288 = vmor %vm1286, %vm1287
    %v1289 = vsel %vm1288, %v1281, %v1285
    %v1290 = vand.u32 2147483647, %v1277
    %vm1291 = vcmp.eq.f32.partialorder %v1290, 8.507059e+37
    %v1292 = vand.u32 %v1277, 2147483648
    %v1293 = vor.u32 1.1754944e-38, %v1292
    %v1294 = vsel %vm1291, %v1293, %v1289
    %v1295 = vmul.f32 %v1258, %v1294
    %v1296 = vrcp.pop %v1278
    %v1297 = vmul.f32 %v1278, %v1296
    %v1298 = vsub.f32 1.0, %v1297
    %v1299 = vmul.f32 %v1296, %v1298
    %v1300 = vadd.f32 %v1296, %v1299
    %vm1301 = vweird.f32 %v1278
    %vm1302 = vweird.f32 %v1296
    %vm1303 = vmor %vm1301, %vm1302
    %v1304 = vsel %vm1303, %v1296, %v1300
    %v1305 = vand.u32 2147483647, %v1278
    %vm1306 = vcmp.eq.f32.partialorder %v1305, 8.507059e+37
    %v1307 = vand.u32 %v1278, 2147483648
    %v1308 = vor.u32 1.1754944e-38, %v1307
    %v1309 = vsel %vm1306, %v1308, %v1304
    %v1310 = vmul.f32 %v1260, %v1309
    %1312 = vset.pattern.permute.xlu0 0
    %1313 = vperm.xlu0 %1312, %v1295
    %v1314 = vpop.permute.xlu0 %1313
    %1317 = vset.pattern.permute.xlu0 0
    %1318 = vperm.xlu0 %1317, %v1310
    %v1319 = vpop.permute.xlu0 %1318
    %v1321 = vmul.f32 %v1314, %v92
    %v1322 = vmul.f32 %v1319, %v93
    %v1323 = vsel %vm133, %v1321, 0.0
    %v1324 = vrot.slane %v1323, 4
    %v1325 = vadd.f32 %v1323, %v1324
    %v1326 = vrot.slane %v1325, 2
    %v1327 = vadd.f32 %v1325, %v1326
    %v1328 = vrot.slane %v1327, 1
    %v1329 = vadd.f32 %v1327, %v1328
    %v1330 = vsel %vm133, %v1322, 0.0
    %v1331 = vrot.slane %v1330, 4
    %v1332 = vadd.f32 %v1330, %v1331
    %v1333 = vrot.slane %v1332, 2
    %v1334 = vadd.f32 %v1332, %v1333
    %v1335 = vrot.slane %v1334, 1
    %v1336 = vadd.f32 %v1334, %v1335
    %1337 = vst.msk [vmem:[#allocation4] sm:$0x3] %vm89, %v1198
    %v1340 = vsel %vm190, %v1336, %v1329
    %1341 = vrot.lane.b32.xlu0 %v1340, 32
    %v1342 = vpop.permute.xlu0 %1341
    %1344 = vst.msk [vmem:[#allocation4] sm:$0x3] %vm291, %v1342
    %v1345 = vld [vmem:[#allocation4] sm:$0x3]
    %v1347 = vsel %vm297, %v1345, 0
    %1349 = vmatpush.msra.mxu0 0.0
    %1350 = vmatpush.msra.mxu0 0.0
    %1351 = vmatpush.msra.mxu0 0.0
    %1352 = vmatpush.msra.mxu0 0.0
    %1353 = vmatpush.msra.mxu0 0.0
    %1354 = vmatpush.msra.mxu0 0.0
    %1355 = vmatpush.msra.mxu0 0.0
    %1356 = vmatpush.msra.mxu0 0.0
    %1357 = vmatpush.msra.mxu0 %v108
    %1358 = vmatpush.msra.mxu0 %v107
    %1359 = vmatpush.msra.mxu0 %v106
    %1360 = vmatpush.msra.mxu0 %v105
    %1361 = vmatpush.msra.mxu0 %v104
    %1362 = vmatpush.msra.mxu0 %v103
    %1363 = vmatpush.msra.mxu0 %v102
    %1364 = vmatpush.msra.mxu0 %v101
    %1365 = vmatmul.f32.gmra.mxu0 %v1347
    %v1366 = vpop.f32.mrf.mxu0
    %v1367 = vadd.f32 %v295, %v1366
    %1368 = vdwg.mxu0
    %1370 = vrot.lane.b32.xlu0 %v1222, 96
    %v1371 = vpop.permute.xlu0 %1370
    %v1373 = vadd.f32 %v1367, %v1371
    %v1374 = vxor.u32 %v1373, 2147483648
    %v1375 = vmul.f32 %v1374, 1.442695
    %v1376 = vpow.pop %v1375
    %v1377 = vadd.f32 %v1376, 1.0
    %v1378 = vrcp.pop %v1377
    %v1379 = vmul.f32 %v1377, %v1378
    %v1380 = vsub.f32 1.0, %v1379
    %v1381 = vmul.f32 %v1378, %v1380
    %v1382 = vadd.f32 %v1378, %v1381
    %vm1383 = vweird.f32 %v1377
    %vm1384 = vweird.f32 %v1378
    %vm1385 = vmor %vm1383, %vm1384
    %v1386 = vsel %vm1385, %v1378, %v1382
    %v1387 = vand.u32 2147483647, %v1377
    %vm1388 = vcmp.eq.f32.partialorder %v1387, 8.507059e+37
    %v1389 = vand.u32 %v1377, 2147483648
    %v1390 = vor.u32 1.1754944e-38, %v1389
    %v1391 = vsel %vm1388, %v1390, %v1386
    %v1392 = vmul.f32 1.0, %v1391
    %1393 = vrot.lane.b32.xlu0 %v1222, 32
    %v1394 = vpop.permute.xlu0 %1393
    %v1396 = vmul.f32 %v1392, %v1394
    %1398 = vrot.lane.b32.xlu0 %v1396, 64
    %v1399 = vpop.permute.xlu0 %1398
    %v1401 = vadd.f32 %v1367, %v1399
    %v1402 = vtanh.pop %v1401
    %v1403 = vsub.f32 1.0, %v1392
    %1405 = vrot.lane.b32.xlu0 %v1402, 96
    %v1406 = vpop.permute.xlu0 %1405
    %v1408 = vmul.f32 %v1403, %v1406
    %1409 = vrot.lane.b32.xlu0 %v1189, 32
    %v1410 = vpop.permute.xlu0 %1409
    %v1412 = vmul.f32 %v1392, %v1410
    %v1413 = vadd.f32 %v1408, %v1412
    %1415 = vrot.lane.b32.xlu0 %v1413, 32
    %v1416 = vpop.permute.xlu0 %1415
    %1418 = vst.msk [vmem:[#allocation4] sm:$0x3] %vm370, %v1416
    %v1419 = vld [vmem:[#allocation4] sm:$0x3]
    %v1421 = vsel %vm376, %v1419, 0
    %1423 = vmatpush.msra.mxu0 0.0
    %1424 = vmatpush.msra.mxu0 0.0
    %1425 = vmatpush.msra.mxu0 0.0
    %1426 = vmatpush.msra.mxu0 0.0
    %1427 = vmatpush.msra.mxu0 %v122
    %1428 = vmatpush.msra.mxu0 %v121
    %1429 = vmatpush.msra.mxu0 %v120
    %1430 = vmatpush.msra.mxu0 %v119
    %1431 = vmatpush.msra.mxu0 %v118
    %1432 = vmatpush.msra.mxu0 %v117
    %1433 = vmatpush.msra.mxu0 %v116
    %1434 = vmatpush.msra.mxu0 %v115
    %1435 = vmatpush.msra.mxu0 %v114
    %1436 = vmatpush.msra.mxu0 %v113
    %1437 = vmatpush.msra.mxu0 %v112
    %1438 = vmatpush.msra.mxu0 %v111
    %1439 = vmatmul.f32.gmra.mxu0 %v1421
    %v1440 = vpop.f32.mrf.mxu0
    %v1441 = vadd.f32 %v374, %v1440
    %1442 = vdwg.mxu0
    %s1443 = scalar_lea.vmem [#allocation12], 8
    %1444 = vst.msk [vmem:[%s1443] sm:$0x3] %vm89, %v1441
    %1445 = vrot.lane.b32.xlu0 %v1413, 96
    %v1446 = vpop.permute.xlu0 %1445
    %1448 = vst.msk [vmem:[#allocation2] sm:$0x3] %vm89, %v1446
    %1449 = vst.msk [vmem:[#allocation3] sm:$0x3] %vm89, %v1441
    %v1450 = vld [vmem:[#allocation2] sm:$0x3]
    %s1451 = sld [smem:[#allocation5 + $0x5]]
    %p1452 = scmp.gt.s32.totalorder %s1451, 0
    %s1453 = scalar_lea.vmem %s1, 10
    %v1454 = vld [vmem:[%s1453] sm:$0x3]
    %v1455 = vld [vmem:[#allocation3] sm:$0x3]
    %s1456 = scalar_select %p1452, 1, 0
    %v1457 = vstv %s1456
    %vm1458 = vcmp.eq.s32.totalorder %v1457, 1
    %v1459 = vsel %vm1458, %v1454, %v1455
    %v1461 = vsel %vm133, %v1450, 0
    %1463 = vmatpush.msra.mxu0 0.0
    %1464 = vmatpush.msra.mxu0 0.0
    %1465 = vmatpush.msra.mxu0 0.0
    %1466 = vmatpush.msra.mxu0 0.0
    %1467 = vmatpush.msra.mxu0 0.0
    %1468 = vmatpush.msra.mxu0 0.0
    %1469 = vmatpush.msra.mxu0 0.0
    %1470 = vmatpush.msra.mxu0 0.0
    %1471 = vmatpush.msra.mxu0 0.0
    %1472 = vmatpush.msra.mxu0 0.0
    %1473 = vmatpush.msra.mxu0 0.0
    %1474 = vmatpush.msra.mxu0 0.0
    %1475 = vmatpush.msra.mxu0 %v100
    %1476 = vmatpush.msra.mxu0 %v99
    %1477 = vmatpush.msra.mxu0 %v98
    %1478 = vmatpush.msra.mxu0 %v97
    %1479 = vmatmul.f32.gmra.mxu0 %v1461
    %v1480 = vpop.f32.mrf.mxu0
    %v1481 = vadd.f32 0.0, %v1480
    %1482 = vdwg.mxu0
    %v1483 = vadd.f32 %v1481, %v160
    %v1485 = vrot.slane %v1481, 1
    %v1486 = vperm.slane %v1481, 0
    %v1487 = vperm.slane %v1485, 0
    %v1490 = vadd.f32 %v1486, %v94
    %v1491 = vadd.f32 %v1487, %v95
    %v1492 = vtanh.pop %v1490
    %v1493 = vtanh.pop %v1491
    %v1494 = vmul.f32 %v1492, %v174
    %v1495 = vmul.f32 %v1493, %v174
    %v1496 = vsel %vm133, %v1494, 0.0
    %1497 = vadd.xlane.f32.xlu0 %v1496
    %v1498 = vpop.xlane.xlu0 %1497
    %v1499 = vsel %vm133, %v1495, 0.0
    %1500 = vadd.xlane.f32.xlu0 %v1499
    %v1501 = vpop.xlane.xlu0 %1500
    %v1504 = vperm.slane %v1498, %v187
    %v1505 = vperm.slane %v1501, %v187
    %v1506 = vsel %vm190, %v1505, %v1504
    %v1508 = vsel %vm193, %v1506, -inf
    %1509 = vmax.xlane.f32.xlu0 %v1508
    %v1510 = vpop.xlane.xlu0 %1509
    %v1512 = vperm.slane %v1510, 0
    %v1513 = vperm.slane %v1510, 1
    %v1516 = vsub.f32 %v1498, %v1512
    %v1517 = vsub.f32 %v1501, %v1513
    %v1518 = vmul.f32 %v1516, 1.442695
    %v1519 = vpow.pop %v1518
    %v1520 = vmul.f32 %v1517, 1.442695
    %v1521 = vpow.pop %v1520
    %1524 = vset.pattern.permute.xlu0 0
    %1525 = vperm.xlu0 %1524, %v1519
    %v1526 = vpop.permute.xlu0 %1525
    %1527 = vset.pattern.permute.xlu0 0
    %1528 = vperm.xlu0 %1527, %v1521
    %v1529 = vpop.permute.xlu0 %1528
    %v1530 = vperm.slane %v1526, %v187
    %v1531 = vperm.slane %v1529, %v187
    %v1532 = vsel %vm190, %v1531, %v1530
    %v1534 = vsel %vm193, %v1532, 0.0
    %1535 = vadd.xlane.f32.xlu0 %v1534
    %v1536 = vpop.xlane.xlu0 %1535
    %v1538 = vperm.slane %v1536, 0
    %v1539 = vperm.slane %v1536, 1
    %v1542 = vrcp.pop %v1538
    %v1543 = vmul.f32 %v1538, %v1542
    %v1544 = vsub.f32 1.0, %v1543
    %v1545 = vmul.f32 %v1542, %v1544
    %v1546 = vadd.f32 %v1542, %v1545
    %vm1547 = vweird.f32 %v1538
    %vm1548 = vweird.f32 %v1542
    %vm1549 = vmor %vm1547, %vm1548
    %v1550 = vsel %vm1549, %v1542, %v1546
    %v1551 = vand.u32 2147483647, %v1538
    %vm1552 = vcmp.eq.f32.partialorder %v1551, 8.507059e+37
    %v1553 = vand.u32 %v1538, 2147483648
    %v1554 = vor.u32 1.1754944e-38, %v1553
    %v1555 = vsel %vm1552, %v1554, %v1550
    %v1556 = vmul.f32 %v1519, %v1555
    %v1557 = vrcp.pop %v1539
    %v1558 = vmul.f32 %v1539, %v1557
    %v1559 = vsub.f32 1.0, %v1558
    %v1560 = vmul.f32 %v1557, %v1559
    %v1561 = vadd.f32 %v1557, %v1560
    %vm1562 = vweird.f32 %v1539
    %vm1563 = vweird.f32 %v1557
    %vm1564 = vmor %vm1562, %vm1563
    %v1565 = vsel %vm1564, %v1557, %v1561
    %v1566 = vand.u32 2147483647, %v1539
    %vm1567 = vcmp.eq.f32.partialorder %v1566, 8.507059e+37
    %v1568 = vand.u32 %v1539, 2147483648
    %v1569 = vor.u32 1.1754944e-38, %v1568
    %v1570 = vsel %vm1567, %v1569, %v1565
    %v1571 = vmul.f32 %v1521, %v1570
    %1573 = vset.pattern.permute.xlu0 0
    %1574 = vperm.xlu0 %1573, %v1556
    %v1575 = vpop.permute.xlu0 %1574
    %1578 = vset.pattern.permute.xlu0 0
    %1579 = vperm.xlu0 %1578, %v1571
    %v1580 = vpop.permute.xlu0 %1579
    %v1582 = vmul.f32 %v1575, %v92
    %v1583 = vmul.f32 %v1580, %v93
    %v1584 = vsel %vm133, %v1582, 0.0
    %v1585 = vrot.slane %v1584, 4
    %v1586 = vadd.f32 %v1584, %v1585
    %v1587 = vrot.slane %v1586, 2
    %v1588 = vadd.f32 %v1586, %v1587
    %v1589 = vrot.slane %v1588, 1
    %v1590 = vadd.f32 %v1588, %v1589
    %v1591 = vsel %vm133, %v1583, 0.0
    %v1592 = vrot.slane %v1591, 4
    %v1593 = vadd.f32 %v1591, %v1592
    %v1594 = vrot.slane %v1593, 2
    %v1595 = vadd.f32 %v1593, %v1594
    %v1596 = vrot.slane %v1595, 1
    %v1597 = vadd.f32 %v1595, %v1596
    %1598 = vst.msk [vmem:[#allocation4] sm:$0x3] %vm89, %v1459
    %v1601 = vsel %vm190, %v1597, %v1590
    %1602 = vrot.lane.b32.xlu0 %v1601, 32
    %v1603 = vpop.permute.xlu0 %1602
    %1605 = vst.msk [vmem:[#allocation4] sm:$0x3] %vm291, %v1603
    %v1606 = vld [vmem:[#allocation4] sm:$0x3]
    %v1608 = vsel %vm297, %v1606, 0
    %1610 = vmatpush.msra.mxu0 0.0
    %1611 = vmatpush.msra.mxu0 0.0
    %1612 = vmatpush.msra.mxu0 0.0
    %1613 = vmatpush.msra.mxu0 0.0
    %1614 = vmatpush.msra.mxu0 0.0
    %1615 = vmatpush.msra.mxu0 0.0
    %1616 = vmatpush.msra.mxu0 0.0
    %1617 = vmatpush.msra.mxu0 0.0
    %1618 = vmatpush.msra.mxu0 %v108
    %1619 = vmatpush.msra.mxu0 %v107
    %1620 = vmatpush.msra.mxu0 %v106
    %1621 = vmatpush.msra.mxu0 %v105
    %1622 = vmatpush.msra.mxu0 %v104
    %1623 = vmatpush.msra.mxu0 %v103
    %1624 = vmatpush.msra.mxu0 %v102
    %1625 = vmatpush.msra.mxu0 %v101
    %1626 = vmatmul.f32.gmra.mxu0 %v1608
    %v1627 = vpop.f32.mrf.mxu0
    %v1628 = vadd.f32 %v295, %v1627
    %1629 = vdwg.mxu0
    %1631 = vrot.lane.b32.xlu0 %v1483, 96
    %v1632 = vpop.permute.xlu0 %1631
    %v1634 = vadd.f32 %v1628, %v1632
    %v1635 = vxor.u32 %v1634, 2147483648
    %v1636 = vmul.f32 %v1635, 1.442695
    %v1637 = vpow.pop %v1636
    %v1638 = vadd.f32 %v1637, 1.0
    %v1639 = vrcp.pop %v1638
    %v1640 = vmul.f32 %v1638, %v1639
    %v1641 = vsub.f32 1.0, %v1640
    %v1642 = vmul.f32 %v1639, %v1641
    %v1643 = vadd.f32 %v1639, %v1642
    %vm1644 = vweird.f32 %v1638
    %vm1645 = vweird.f32 %v1639
    %vm1646 = vmor %vm1644, %vm1645
    %v1647 = vsel %vm1646, %v1639, %v1643
    %v1648 = vand.u32 2147483647, %v1638
    %vm1649 = vcmp.eq.f32.partialorder %v1648, 8.507059e+37
    %v1650 = vand.u32 %v1638, 2147483648
    %v1651 = vor.u32 1.1754944e-38, %v1650
    %v1652 = vsel %vm1649, %v1651, %v1647
    %v1653 = vmul.f32 1.0, %v1652
    %1654 = vrot.lane.b32.xlu0 %v1483, 32
    %v1655 = vpop.permute.xlu0 %1654
    %v1657 = vmul.f32 %v1653, %v1655
    %1659 = vrot.lane.b32.xlu0 %v1657, 64
    %v1660 = vpop.permute.xlu0 %1659
    %v1662 = vadd.f32 %v1628, %v1660
    %v1663 = vtanh.pop %v1662
    %v1664 = vsub.f32 1.0, %v1653
    %1666 = vrot.lane.b32.xlu0 %v1663, 96
    %v1667 = vpop.permute.xlu0 %1666
    %v1669 = vmul.f32 %v1664, %v1667
    %1670 = vrot.lane.b32.xlu0 %v1450, 32
    %v1671 = vpop.permute.xlu0 %1670
    %v1673 = vmul.f32 %v1653, %v1671
    %v1674 = vadd.f32 %v1669, %v1673
    %1676 = vrot.lane.b32.xlu0 %v1674, 32
    %v1677 = vpop.permute.xlu0 %1676
    %1679 = vst.msk [vmem:[#allocation4] sm:$0x3] %vm370, %v1677
    %v1680 = vld [vmem:[#allocation4] sm:$0x3]
    %v1682 = vsel %vm376, %v1680, 0
    %1684 = vmatpush.msra.mxu0 0.0
    %1685 = vmatpush.msra.mxu0 0.0
    %1686 = vmatpush.msra.mxu0 0.0
    %1687 = vmatpush.msra.mxu0 0.0
    %1688 = vmatpush.msra.mxu0 %v122
    %1689 = vmatpush.msra.mxu0 %v121
    %1690 = vmatpush.msra.mxu0 %v120
    %1691 = vmatpush.msra.mxu0 %v119
    %1692 = vmatpush.msra.mxu0 %v118
    %1693 = vmatpush.msra.mxu0 %v117
    %1694 = vmatpush.msra.mxu0 %v116
    %1695 = vmatpush.msra.mxu0 %v115
    %1696 = vmatpush.msra.mxu0 %v114
    %1697 = vmatpush.msra.mxu0 %v113
    %1698 = vmatpush.msra.mxu0 %v112
    %1699 = vmatpush.msra.mxu0 %v111
    %1700 = vmatmul.f32.gmra.mxu0 %v1682
    %v1701 = vpop.f32.mrf.mxu0
    %v1702 = vadd.f32 %v374, %v1701
    %1703 = vdwg.mxu0
    %s1704 = scalar_lea.vmem [#allocation12], 10
    %1705 = vst.msk [vmem:[%s1704] sm:$0x3] %vm89, %v1702
    %1706 = vrot.lane.b32.xlu0 %v1674, 96
    %v1707 = vpop.permute.xlu0 %1706
    %1709 = vst.msk [vmem:[#allocation2] sm:$0x3] %vm89, %v1707
    %1710 = vst.msk [vmem:[#allocation3] sm:$0x3] %vm89, %v1702
    %v1711 = vld [vmem:[#allocation2] sm:$0x3]
    %s1712 = sld [smem:[#allocation5 + $0x6]]
    %p1713 = scmp.gt.s32.totalorder %s1712, 0
    %s1714 = scalar_lea.vmem %s1, 12
    %v1715 = vld [vmem:[%s1714] sm:$0x3]
    %v1716 = vld [vmem:[#allocation3] sm:$0x3]
    %s1717 = scalar_select %p1713, 1, 0
    %v1718 = vstv %s1717
    %vm1719 = vcmp.eq.s32.totalorder %v1718, 1
    %v1720 = vsel %vm1719, %v1715, %v1716
    %v1722 = vsel %vm133, %v1711, 0
    %1724 = vmatpush.msra.mxu0 0.0
    %1725 = vmatpush.msra.mxu0 0.0
    %1726 = vmatpush.msra.mxu0 0.0
    %1727 = vmatpush.msra.mxu0 0.0
    %1728 = vmatpush.msra.mxu0 0.0
    %1729 = vmatpush.msra.mxu0 0.0
    %1730 = vmatpush.msra.mxu0 0.0
    %1731 = vmatpush.msra.mxu0 0.0
    %1732 = vmatpush.msra.mxu0 0.0
    %1733 = vmatpush.msra.mxu0 0.0
    %1734 = vmatpush.msra.mxu0 0.0
    %1735 = vmatpush.msra.mxu0 0.0
    %1736 = vmatpush.msra.mxu0 %v100
    %1737 = vmatpush.msra.mxu0 %v99
    %1738 = vmatpush.msra.mxu0 %v98
    %1739 = vmatpush.msra.mxu0 %v97
    %1740 = vmatmul.f32.gmra.mxu0 %v1722
    %v1741 = vpop.f32.mrf.mxu0
    %v1742 = vadd.f32 0.0, %v1741
    %1743 = vdwg.mxu0
    %v1744 = vadd.f32 %v1742, %v160
    %v1746 = vrot.slane %v1742, 1
    %v1747 = vperm.slane %v1742, 0
    %v1748 = vperm.slane %v1746, 0
    %v1751 = vadd.f32 %v1747, %v94
    %v1752 = vadd.f32 %v1748, %v95
    %v1753 = vtanh.pop %v1751
    %v1754 = vtanh.pop %v1752
    %v1755 = vmul.f32 %v1753, %v174
    %v1756 = vmul.f32 %v1754, %v174
    %v1757 = vsel %vm133, %v1755, 0.0
    %1758 = vadd.xlane.f32.xlu0 %v1757
    %v1759 = vpop.xlane.xlu0 %1758
    %v1760 = vsel %vm133, %v1756, 0.0
    %1761 = vadd.xlane.f32.xlu0 %v1760
    %v1762 = vpop.xlane.xlu0 %1761
    %v1765 = vperm.slane %v1759, %v187
    %v1766 = vperm.slane %v1762, %v187
    %v1767 = vsel %vm190, %v1766, %v1765
    %v1769 = vsel %vm193, %v1767, -inf
    %1770 = vmax.xlane.f32.xlu0 %v1769
    %v1771 = vpop.xlane.xlu0 %1770
    %v1773 = vperm.slane %v1771, 0
    %v1774 = vperm.slane %v1771, 1
    %v1777 = vsub.f32 %v1759, %v1773
    %v1778 = vsub.f32 %v1762, %v1774
    %v1779 = vmul.f32 %v1777, 1.442695
    %v1780 = vpow.pop %v1779
    %v1781 = vmul.f32 %v1778, 1.442695
    %v1782 = vpow.pop %v1781
    %1785 = vset.pattern.permute.xlu0 0
    %1786 = vperm.xlu0 %1785, %v1780
    %v1787 = vpop.permute.xlu0 %1786
    %1788 = vset.pattern.permute.xlu0 0
    %1789 = vperm.xlu0 %1788, %v1782
    %v1790 = vpop.permute.xlu0 %1789
    %v1791 = vperm.slane %v1787, %v187
    %v1792 = vperm.slane %v1790, %v187
    %v1793 = vsel %vm190, %v1792, %v1791
    %v1795 = vsel %vm193, %v1793, 0.0
    %1796 = vadd.xlane.f32.xlu0 %v1795
    %v1797 = vpop.xlane.xlu0 %1796
    %v1799 = vperm.slane %v1797, 0
    %v1800 = vperm.slane %v1797, 1
    %v1803 = vrcp.pop %v1799
    %v1804 = vmul.f32 %v1799, %v1803
    %v1805 = vsub.f32 1.0, %v1804
    %v1806 = vmul.f32 %v1803, %v1805
    %v1807 = vadd.f32 %v1803, %v1806
    %vm1808 = vweird.f32 %v1799
    %vm1809 = vweird.f32 %v1803
    %vm1810 = vmor %vm1808, %vm1809
    %v1811 = vsel %vm1810, %v1803, %v1807
    %v1812 = vand.u32 2147483647, %v1799
    %vm1813 = vcmp.eq.f32.partialorder %v1812, 8.507059e+37
    %v1814 = vand.u32 %v1799, 2147483648
    %v1815 = vor.u32 1.1754944e-38, %v1814
    %v1816 = vsel %vm1813, %v1815, %v1811
    %v1817 = vmul.f32 %v1780, %v1816
    %v1818 = vrcp.pop %v1800
    %v1819 = vmul.f32 %v1800, %v1818
    %v1820 = vsub.f32 1.0, %v1819
    %v1821 = vmul.f32 %v1818, %v1820
    %v1822 = vadd.f32 %v1818, %v1821
    %vm1823 = vweird.f32 %v1800
    %vm1824 = vweird.f32 %v1818
    %vm1825 = vmor %vm1823, %vm1824
    %v1826 = vsel %vm1825, %v1818, %v1822
    %v1827 = vand.u32 2147483647, %v1800
    %vm1828 = vcmp.eq.f32.partialorder %v1827, 8.507059e+37
    %v1829 = vand.u32 %v1800, 2147483648
    %v1830 = vor.u32 1.1754944e-38, %v1829
    %v1831 = vsel %vm1828, %v1830, %v1826
    %v1832 = vmul.f32 %v1782, %v1831
    %1834 = vset.pattern.permute.xlu0 0
    %1835 = vperm.xlu0 %1834, %v1817
    %v1836 = vpop.permute.xlu0 %1835
    %1839 = vset.pattern.permute.xlu0 0
    %1840 = vperm.xlu0 %1839, %v1832
    %v1841 = vpop.permute.xlu0 %1840
    %v1843 = vmul.f32 %v1836, %v92
    %v1844 = vmul.f32 %v1841, %v93
    %v1845 = vsel %vm133, %v1843, 0.0
    %v1846 = vrot.slane %v1845, 4
    %v1847 = vadd.f32 %v1845, %v1846
    %v1848 = vrot.slane %v1847, 2
    %v1849 = vadd.f32 %v1847, %v1848
    %v1850 = vrot.slane %v1849, 1
    %v1851 = vadd.f32 %v1849, %v1850
    %v1852 = vsel %vm133, %v1844, 0.0
    %v1853 = vrot.slane %v1852, 4
    %v1854 = vadd.f32 %v1852, %v1853
    %v1855 = vrot.slane %v1854, 2
    %v1856 = vadd.f32 %v1854, %v1855
    %v1857 = vrot.slane %v1856, 1
    %v1858 = vadd.f32 %v1856, %v1857
    %1859 = vst.msk [vmem:[#allocation4] sm:$0x3] %vm89, %v1720
    %v1862 = vsel %vm190, %v1858, %v1851
    %1863 = vrot.lane.b32.xlu0 %v1862, 32
    %v1864 = vpop.permute.xlu0 %1863
    %1866 = vst.msk [vmem:[#allocation4] sm:$0x3] %vm291, %v1864
    %v1867 = vld [vmem:[#allocation4] sm:$0x3]
    %v1869 = vsel %vm297, %v1867, 0
    %1871 = vmatpush.msra.mxu0 0.0
    %1872 = vmatpush.msra.mxu0 0.0
    %1873 = vmatpush.msra.mxu0 0.0
    %1874 = vmatpush.msra.mxu0 0.0
    %1875 = vmatpush.msra.mxu0 0.0
    %1876 = vmatpush.msra.mxu0 0.0
    %1877 = vmatpush.msra.mxu0 0.0
    %1878 = vmatpush.msra.mxu0 0.0
    %1879 = vmatpush.msra.mxu0 %v108
    %1880 = vmatpush.msra.mxu0 %v107
    %1881 = vmatpush.msra.mxu0 %v106
    %1882 = vmatpush.msra.mxu0 %v105
    %1883 = vmatpush.msra.mxu0 %v104
    %1884 = vmatpush.msra.mxu0 %v103
    %1885 = vmatpush.msra.mxu0 %v102
    %1886 = vmatpush.msra.mxu0 %v101
    %1887 = vmatmul.f32.gmra.mxu0 %v1869
    %v1888 = vpop.f32.mrf.mxu0
    %v1889 = vadd.f32 %v295, %v1888
    %1890 = vdwg.mxu0
    %1892 = vrot.lane.b32.xlu0 %v1744, 96
    %v1893 = vpop.permute.xlu0 %1892
    %v1895 = vadd.f32 %v1889, %v1893
    %v1896 = vxor.u32 %v1895, 2147483648
    %v1897 = vmul.f32 %v1896, 1.442695
    %v1898 = vpow.pop %v1897
    %v1899 = vadd.f32 %v1898, 1.0
    %v1900 = vrcp.pop %v1899
    %v1901 = vmul.f32 %v1899, %v1900
    %v1902 = vsub.f32 1.0, %v1901
    %v1903 = vmul.f32 %v1900, %v1902
    %v1904 = vadd.f32 %v1900, %v1903
    %vm1905 = vweird.f32 %v1899
    %vm1906 = vweird.f32 %v1900
    %vm1907 = vmor %vm1905, %vm1906
    %v1908 = vsel %vm1907, %v1900, %v1904
    %v1909 = vand.u32 2147483647, %v1899
    %vm1910 = vcmp.eq.f32.partialorder %v1909, 8.507059e+37
    %v1911 = vand.u32 %v1899, 2147483648
    %v1912 = vor.u32 1.1754944e-38, %v1911
    %v1913 = vsel %vm1910, %v1912, %v1908
    %v1914 = vmul.f32 1.0, %v1913
    %1915 = vrot.lane.b32.xlu0 %v1744, 32
    %v1916 = vpop.permute.xlu0 %1915
    %v1918 = vmul.f32 %v1914, %v1916
    %1920 = vrot.lane.b32.xlu0 %v1918, 64
    %v1921 = vpop.permute.xlu0 %1920
    %v1923 = vadd.f32 %v1889, %v1921
    %v1924 = vtanh.pop %v1923
    %v1925 = vsub.f32 1.0, %v1914
    %1927 = vrot.lane.b32.xlu0 %v1924, 96
    %v1928 = vpop.permute.xlu0 %1927
    %v1930 = vmul.f32 %v1925, %v1928
    %1931 = vrot.lane.b32.xlu0 %v1711, 32
    %v1932 = vpop.permute.xlu0 %1931
    %v1934 = vmul.f32 %v1914, %v1932
    %v1935 = vadd.f32 %v1930, %v1934
    %1937 = vrot.lane.b32.xlu0 %v1935, 32
    %v1938 = vpop.permute.xlu0 %1937
    %1940 = vst.msk [vmem:[#allocation4] sm:$0x3] %vm370, %v1938
    %v1941 = vld [vmem:[#allocation4] sm:$0x3]
    %v1943 = vsel %vm376, %v1941, 0
    %1945 = vmatpush.msra.mxu0 0.0
    %1946 = vmatpush.msra.mxu0 0.0
    %1947 = vmatpush.msra.mxu0 0.0
    %1948 = vmatpush.msra.mxu0 0.0
    %1949 = vmatpush.msra.mxu0 %v122
    %1950 = vmatpush.msra.mxu0 %v121
    %1951 = vmatpush.msra.mxu0 %v120
    %1952 = vmatpush.msra.mxu0 %v119
    %1953 = vmatpush.msra.mxu0 %v118
    %1954 = vmatpush.msra.mxu0 %v117
    %1955 = vmatpush.msra.mxu0 %v116
    %1956 = vmatpush.msra.mxu0 %v115
    %1957 = vmatpush.msra.mxu0 %v114
    %1958 = vmatpush.msra.mxu0 %v113
    %1959 = vmatpush.msra.mxu0 %v112
    %1960 = vmatpush.msra.mxu0 %v111
    %1961 = vmatmul.f32.gmra.mxu0 %v1943
    %v1962 = vpop.f32.mrf.mxu0
    %v1963 = vadd.f32 %v374, %v1962
    %1964 = vdwg.mxu0
    %s1965 = scalar_lea.vmem [#allocation12], 12
    %1966 = vst.msk [vmem:[%s1965] sm:$0x3] %vm89, %v1963
    %1967 = vrot.lane.b32.xlu0 %v1935, 96
    %v1968 = vpop.permute.xlu0 %1967
    %1970 = vst.msk [vmem:[#allocation2] sm:$0x3] %vm89, %v1968
    %1971 = vst.msk [vmem:[#allocation3] sm:$0x3] %vm89, %v1963
    %v1972 = vld [vmem:[#allocation2] sm:$0x3]
    %s1973 = sld [smem:[#allocation5 + $0x7]]
    %p1974 = scmp.gt.s32.totalorder %s1973, 0
    %s1975 = scalar_lea.vmem %s1, 14
    %v1976 = vld [vmem:[%s1975] sm:$0x3]
    %v1977 = vld [vmem:[#allocation3] sm:$0x3]
    %s1978 = scalar_select %p1974, 1, 0
    %v1979 = vstv %s1978
    %vm1980 = vcmp.eq.s32.totalorder %v1979, 1
    %v1981 = vsel %vm1980, %v1976, %v1977
    %v1983 = vsel %vm133, %v1972, 0
    %1985 = vmatpush.msra.mxu0 0.0
    %1986 = vmatpush.msra.mxu0 0.0
    %1987 = vmatpush.msra.mxu0 0.0
    %1988 = vmatpush.msra.mxu0 0.0
    %1989 = vmatpush.msra.mxu0 0.0
    %1990 = vmatpush.msra.mxu0 0.0
    %1991 = vmatpush.msra.mxu0 0.0
    %1992 = vmatpush.msra.mxu0 0.0
    %1993 = vmatpush.msra.mxu0 0.0
    %1994 = vmatpush.msra.mxu0 0.0
    %1995 = vmatpush.msra.mxu0 0.0
    %1996 = vmatpush.msra.mxu0 0.0
    %1997 = vmatpush.msra.mxu0 %v100
    %1998 = vmatpush.msra.mxu0 %v99
    %1999 = vmatpush.msra.mxu0 %v98
    %2000 = vmatpush.msra.mxu0 %v97
    %2001 = vmatmul.f32.gmra.mxu0 %v1983
    %v2002 = vpop.f32.mrf.mxu0
    %v2003 = vadd.f32 0.0, %v2002
    %2004 = vdwg.mxu0
    %v2005 = vadd.f32 %v2003, %v160
    %v2007 = vrot.slane %v2003, 1
    %v2008 = vperm.slane %v2003, 0
    %v2009 = vperm.slane %v2007, 0
    %v2012 = vadd.f32 %v2008, %v94
    %v2013 = vadd.f32 %v2009, %v95
    %v2014 = vtanh.pop %v2012
    %v2015 = vtanh.pop %v2013
    %v2016 = vmul.f32 %v2014, %v174
    %v2017 = vmul.f32 %v2015, %v174
    %v2018 = vsel %vm133, %v2016, 0.0
    %2019 = vadd.xlane.f32.xlu0 %v2018
    %v2020 = vpop.xlane.xlu0 %2019
    %v2021 = vsel %vm133, %v2017, 0.0
    %2022 = vadd.xlane.f32.xlu0 %v2021
    %v2023 = vpop.xlane.xlu0 %2022
    %v2026 = vperm.slane %v2020, %v187
    %v2027 = vperm.slane %v2023, %v187
    %v2028 = vsel %vm190, %v2027, %v2026
    %v2030 = vsel %vm193, %v2028, -inf
    %2031 = vmax.xlane.f32.xlu0 %v2030
    %v2032 = vpop.xlane.xlu0 %2031
    %v2034 = vperm.slane %v2032, 0
    %v2035 = vperm.slane %v2032, 1
    %v2038 = vsub.f32 %v2020, %v2034
    %v2039 = vsub.f32 %v2023, %v2035
    %v2040 = vmul.f32 %v2038, 1.442695
    %v2041 = vpow.pop %v2040
    %v2042 = vmul.f32 %v2039, 1.442695
    %v2043 = vpow.pop %v2042
    %2046 = vset.pattern.permute.xlu0 0
    %2047 = vperm.xlu0 %2046, %v2041
    %v2048 = vpop.permute.xlu0 %2047
    %2049 = vset.pattern.permute.xlu0 0
    %2050 = vperm.xlu0 %2049, %v2043
    %v2051 = vpop.permute.xlu0 %2050
    %v2052 = vperm.slane %v2048, %v187
    %v2053 = vperm.slane %v2051, %v187
    %v2054 = vsel %vm190, %v2053, %v2052
    %v2056 = vsel %vm193, %v2054, 0.0
    %2057 = vadd.xlane.f32.xlu0 %v2056
    %v2058 = vpop.xlane.xlu0 %2057
    %v2060 = vperm.slane %v2058, 0
    %v2061 = vperm.slane %v2058, 1
    %v2064 = vrcp.pop %v2060
    %v2065 = vmul.f32 %v2060, %v2064
    %v2066 = vsub.f32 1.0, %v2065
    %v2067 = vmul.f32 %v2064, %v2066
    %v2068 = vadd.f32 %v2064, %v2067
    %vm2069 = vweird.f32 %v2060
    %vm2070 = vweird.f32 %v2064
    %vm2071 = vmor %vm2069, %vm2070
    %v2072 = vsel %vm2071, %v2064, %v2068
    %v2073 = vand.u32 2147483647, %v2060
    %vm2074 = vcmp.eq.f32.partialorder %v2073, 8.507059e+37
    %v2075 = vand.u32 %v2060, 2147483648
    %v2076 = vor.u32 1.1754944e-38, %v2075
    %v2077 = vsel %vm2074, %v2076, %v2072
    %v2078 = vmul.f32 %v2041, %v2077
    %v2079 = vrcp.pop %v2061
    %v2080 = vmul.f32 %v2061, %v2079
    %v2081 = vsub.f32 1.0, %v2080
    %v2082 = vmul.f32 %v2079, %v2081
    %v2083 = vadd.f32 %v2079, %v2082
    %vm2084 = vweird.f32 %v2061
    %vm2085 = vweird.f32 %v2079
    %vm2086 = vmor %vm2084, %vm2085
    %v2087 = vsel %vm2086, %v2079, %v2083
    %v2088 = vand.u32 2147483647, %v2061
    %vm2089 = vcmp.eq.f32.partialorder %v2088, 8.507059e+37
    %v2090 = vand.u32 %v2061, 2147483648
    %v2091 = vor.u32 1.1754944e-38, %v2090
    %v2092 = vsel %vm2089, %v2091, %v2087
    %v2093 = vmul.f32 %v2043, %v2092
    %2095 = vset.pattern.permute.xlu0 0
    %2096 = vperm.xlu0 %2095, %v2078
    %v2097 = vpop.permute.xlu0 %2096
    %2100 = vset.pattern.permute.xlu0 0
    %2101 = vperm.xlu0 %2100, %v2093
    %v2102 = vpop.permute.xlu0 %2101
    %v2104 = vmul.f32 %v2097, %v92
    %v2105 = vmul.f32 %v2102, %v93
    %v2106 = vsel %vm133, %v2104, 0.0
    %v2107 = vrot.slane %v2106, 4
    %v2108 = vadd.f32 %v2106, %v2107
    %v2109 = vrot.slane %v2108, 2
    %v2110 = vadd.f32 %v2108, %v2109
    %v2111 = vrot.slane %v2110, 1
    %v2112 = vadd.f32 %v2110, %v2111
    %v2113 = vsel %vm133, %v2105, 0.0
    %v2114 = vrot.slane %v2113, 4
    %v2115 = vadd.f32 %v2113, %v2114
    %v2116 = vrot.slane %v2115, 2
    %v2117 = vadd.f32 %v2115, %v2116
    %v2118 = vrot.slane %v2117, 1
    %v2119 = vadd.f32 %v2117, %v2118
    %2120 = vst.msk [vmem:[#allocation4] sm:$0x3] %vm89, %v1981
    %v2123 = vsel %vm190, %v2119, %v2112
    %2124 = vrot.lane.b32.xlu0 %v2123, 32
    %v2125 = vpop.permute.xlu0 %2124
    %2127 = vst.msk [vmem:[#allocation4] sm:$0x3] %vm291, %v2125
    %v2128 = vld [vmem:[#allocation4] sm:$0x3]
    %v2130 = vsel %vm297, %v2128, 0
    %2132 = vmatpush.msra.mxu0 0.0
    %2133 = vmatpush.msra.mxu0 0.0
    %2134 = vmatpush.msra.mxu0 0.0
    %2135 = vmatpush.msra.mxu0 0.0
    %2136 = vmatpush.msra.mxu0 0.0
    %2137 = vmatpush.msra.mxu0 0.0
    %2138 = vmatpush.msra.mxu0 0.0
    %2139 = vmatpush.msra.mxu0 0.0
    %2140 = vmatpush.msra.mxu0 %v108
    %2141 = vmatpush.msra.mxu0 %v107
    %2142 = vmatpush.msra.mxu0 %v106
    %2143 = vmatpush.msra.mxu0 %v105
    %2144 = vmatpush.msra.mxu0 %v104
    %2145 = vmatpush.msra.mxu0 %v103
    %2146 = vmatpush.msra.mxu0 %v102
    %2147 = vmatpush.msra.mxu0 %v101
    %2148 = vmatmul.f32.gmra.mxu0 %v2130
    %v2149 = vpop.f32.mrf.mxu0
    %v2150 = vadd.f32 %v295, %v2149
    %2151 = vdwg.mxu0
    %2153 = vrot.lane.b32.xlu0 %v2005, 96
    %v2154 = vpop.permute.xlu0 %2153
    %v2156 = vadd.f32 %v2150, %v2154
    %v2157 = vxor.u32 %v2156, 2147483648
    %v2158 = vmul.f32 %v2157, 1.442695
    %v2159 = vpow.pop %v2158
    %v2160 = vadd.f32 %v2159, 1.0
    %v2161 = vrcp.pop %v2160
    %v2162 = vmul.f32 %v2160, %v2161
    %v2163 = vsub.f32 1.0, %v2162
    %v2164 = vmul.f32 %v2161, %v2163
    %v2165 = vadd.f32 %v2161, %v2164
    %vm2166 = vweird.f32 %v2160
    %vm2167 = vweird.f32 %v2161
    %vm2168 = vmor %vm2166, %vm2167
    %v2169 = vsel %vm2168, %v2161, %v2165
    %v2170 = vand.u32 2147483647, %v2160
    %vm2171 = vcmp.eq.f32.partialorder %v2170, 8.507059e+37
    %v2172 = vand.u32 %v2160, 2147483648
    %v2173 = vor.u32 1.1754944e-38, %v2172
    %v2174 = vsel %vm2171, %v2173, %v2169
    %v2175 = vmul.f32 1.0, %v2174
    %2176 = vrot.lane.b32.xlu0 %v2005, 32
    %v2177 = vpop.permute.xlu0 %2176
    %v2179 = vmul.f32 %v2175, %v2177
    %2181 = vrot.lane.b32.xlu0 %v2179, 64
    %v2182 = vpop.permute.xlu0 %2181
    %v2184 = vadd.f32 %v2150, %v2182
    %v2185 = vtanh.pop %v2184
    %v2186 = vsub.f32 1.0, %v2175
    %2188 = vrot.lane.b32.xlu0 %v2185, 96
    %v2189 = vpop.permute.xlu0 %2188
    %v2191 = vmul.f32 %v2186, %v2189
    %2192 = vrot.lane.b32.xlu0 %v1972, 32
    %v2193 = vpop.permute.xlu0 %2192
    %v2195 = vmul.f32 %v2175, %v2193
    %v2196 = vadd.f32 %v2191, %v2195
    %2198 = vrot.lane.b32.xlu0 %v2196, 32
    %v2199 = vpop.permute.xlu0 %2198
    %2201 = vst.msk [vmem:[#allocation4] sm:$0x3] %vm370, %v2199
    %v2202 = vld [vmem:[#allocation4] sm:$0x3]
    %v2204 = vsel %vm376, %v2202, 0
    %2206 = vmatpush.msra.mxu0 0.0
    %2207 = vmatpush.msra.mxu0 0.0
    %2208 = vmatpush.msra.mxu0 0.0
    %2209 = vmatpush.msra.mxu0 0.0
    %2210 = vmatpush.msra.mxu0 %v122
    %2211 = vmatpush.msra.mxu0 %v121
    %2212 = vmatpush.msra.mxu0 %v120
    %2213 = vmatpush.msra.mxu0 %v119
    %2214 = vmatpush.msra.mxu0 %v118
    %2215 = vmatpush.msra.mxu0 %v117
    %2216 = vmatpush.msra.mxu0 %v116
    %2217 = vmatpush.msra.mxu0 %v115
    %2218 = vmatpush.msra.mxu0 %v114
    %2219 = vmatpush.msra.mxu0 %v113
    %2220 = vmatpush.msra.mxu0 %v112
    %2221 = vmatpush.msra.mxu0 %v111
    %2222 = vmatmul.f32.gmra.mxu0 %v2204
    %v2223 = vpop.f32.mrf.mxu0
    %v2224 = vadd.f32 %v374, %v2223
    %2225 = vdwg.mxu0
    %s2226 = scalar_lea.vmem [#allocation12], 14
    %2227 = vst.msk [vmem:[%s2226] sm:$0x3] %vm89, %v2224
    %2228 = vrot.lane.b32.xlu0 %v2196, 96
    %v2229 = vpop.permute.xlu0 %2228
    %2231 = vst.msk [vmem:[#allocation2] sm:$0x3] %vm89, %v2229
    %2232 = vst.msk [vmem:[#allocation3] sm:$0x3] %vm89, %v2224
    %v2233 = vld [vmem:[#allocation2] sm:$0x3]
    %2234 = vst.msk [vmem:[#allocation13] sm:$0x3] %vm89, %v2233
    // Predicated region
    $region62: #{tpu_custom_call.1} parent=1 // pred_check
      _
    $region63: #{tpu_custom_call.1} parent=1 // pred_check_branch
      %2236 = sbr.rel (0) target = $region65
    $region64: #{tpu_custom_call.1} parent=1 // pred_region
      %2238 = vsyncadd [#allocation7], 0
      %s2239 = sshll.u32 [#allocation12], 4
      %s2240 = int_to_ptr.vmem [resolvable:$true] %s2239
      %s2241 = sshll.u32 %s12, 4
      %s2242 = int_to_ptr.hbm [resolvable:$true] %s2241
      %2247 = dma.vmem_to_hbm [thread:$0]  %s2240, 256, %s2242, [#allocation7], 32, 32, 2
    $region65: #{tpu_custom_call.1} parent=1 // pred_fallthru
      _
    // Predicated region
    $region66: #{tpu_custom_call.1} parent=1 // pred_check
      _
    $region67: #{tpu_custom_call.1} parent=1 // pred_check_branch
      %2249 = sbr.rel (0) target = $region69
    $region68: #{tpu_custom_call.1} parent=1 // pred_region
      %2251 = vsyncadd [#allocation14], 0
      %s2253 = sshll.u32 [#allocation13], 4
      %s2254 = int_to_ptr.vmem [resolvable:$true] %s2253
      %s2255 = sshll.u32 %s13, 4
      %s2256 = int_to_ptr.hbm [resolvable:$true] %s2255
      %2258 = dma.vmem_to_hbm [thread:$0]  %s2254, 32, %s2256, [#allocation14]
    $region69: #{tpu_custom_call.1} parent=1 // pred_fallthru
      _
    // Predicated region
    $region70: #{tpu_custom_call.1} parent=1 // pred_check
      _
    $region71: #{tpu_custom_call.1} parent=1 // pred_check_branch
      %2260 = sbr.rel (0) target = $region73
    $region72: #{tpu_custom_call.1} parent=1 // pred_region
      %2262 = dma.done [#allocation7], 256
    $region73: #{tpu_custom_call.1} parent=1 // pred_fallthru
      _
    // Predicated region
    $region74: #{tpu_custom_call.1} parent=1 // pred_check
      _
    $region75: #{tpu_custom_call.1} parent=1 // pred_check_branch
      %2264 = sbr.rel (0) target = $region77
    $region76: #{tpu_custom_call.1} parent=1 // pred_region
      %2266 = dma.done [#allocation14], 32
    $region77: #{tpu_custom_call.1} parent=1 // pred_fallthru
      _
    %2267 = vsyncpa [#allocation6], 1
    %2268 = vsyncpa [#allocation11], 1
    %2269 = vsyncpa [#allocation7], 1
    %2270 = vsyncpa [#allocation14], 1
    %2271 = vsyncpa [#allocation8], 1

</llo_original>
